<compile_context>
chip_gen: v5e
topology: v5e:2x2
jax: 0.10.0
libtpu: 0.0.40
codegen_flags: <defaults>
</compile_context>

<pallas_src>
import numpy as np
import jax
import jax.numpy as jnp
from jax.experimental import pallas as pl
from jax.experimental.pallas import tpu as pltpu

BN_EPS = 1e-5
COMPUTE_DTYPE = jnp.bfloat16   # bf16 inputs to the MXU, f32 accumulation


def _round_up(x, m):
    return ((x + m - 1) // m) * m


# ----------------------------------------------------------------------------
# Pallas kernels
# ----------------------------------------------------------------------------
def _make_linear_kernel(apply_relu):
    def kernel(x_ref, w_ref, shift_ref, o_ref):
        # x_ref: (tn, Cin) bf16, w_ref: (Cin, Cout_p) bf16 (BN scale folded in),
        # shift_ref: (1, Cout_p) f32, o_ref: (tn, Cout_p) f32
        y = jnp.dot(x_ref[...], w_ref[...], preferred_element_type=jnp.float32)
        y = y + shift_ref[...]
        if apply_relu:
            y = jnp.maximum(y, 0.0)
        o_ref[...] = y.astype(o_ref.dtype)
    return kernel


def _make_linear_relu_max_kernel(n_valid, tp, need_mask):
    # Fused conv3 + BN + ReLU + max over points.
    # Grid = (B, n_pad // tp); output block (1, 1, Cout_p) is an accumulator
    # over the (innermost, "arbitrary") point-tile axis.
    def kernel(x_ref, w_ref, shift_ref, o_ref):
        j = pl.program_id(1)

        @pl.when(j == 0)
        def _init():
            # ReLU output is >= 0, so 0 is a safe identity for the running max.
            o_ref[...] = jnp.zeros_like(o_ref)

        y = jnp.dot(x_ref[0], w_ref[...], preferred_element_type=jnp.float32)
        y = jnp.maximum(y + shift_ref[...], 0.0)           # (tp, Cout_p)
        if need_mask:
            row = j * tp + jax.lax.broadcasted_iota(jnp.int32, (tp, 1), 0)
            y = jnp.where(row < n_valid, y, 0.0)           # padded points -> 0
        tile_max = jnp.max(y, axis=0, keepdims=True).reshape(1, 1, -1)
        o_ref[...] = jnp.maximum(o_ref[...], tile_max)
    return kernel


# ----------------------------------------------------------------------------
# Pallas wrappers
# ----------------------------------------------------------------------------
def linear_act(x, w, shift, *, relu=True, tn=1024):
    """out = [relu](x @ w + shift) with lane-padded Cout and large row tiles."""
    m, cin = x.shape
    cout = w.shape[1]
    cout_p = _round_up(cout, 128)
    tn = min(tn, _round_up(m, 8))
    m_p = _round_up(m, tn)

    x_p = x.astype(COMPUTE_DTYPE)
    if m_p != m:
        x_p = jnp.pad(x_p, ((0, m_p - m), (0, 0)))
    w_p = w.astype(COMPUTE_DTYPE)
    s_p = shift.reshape(1, -1).astype(jnp.float32)
    if cout_p != cout:
        w_p = jnp.pad(w_p, ((0, 0), (0, cout_p - cout)))
        s_p = jnp.pad(s_p, ((0, 0), (0, cout_p - cout)))

    out = pl.pallas_call(
        _make_linear_kernel(relu),
        out_shape=jax.ShapeDtypeStruct((m_p, cout_p), jnp.float32),
        grid=(m_p // tn,),
        in_specs=[
            pl.BlockSpec((tn, cin), lambda i: (i, 0)),
            pl.BlockSpec((cin, cout_p), lambda i: (0, 0)),
            pl.BlockSpec((1, cout_p), lambda i: (0, 0)),
        ],
        out_specs=pl.BlockSpec((tn, cout_p), lambda i: (i, 0)),
        compiler_params=pltpu.CompilerParams(dimension_semantics=("parallel",)),
    )(x_p, w_p, s_p)
    return out[:m, :cout]


def linear_relu_maxpool(x3d, w, shift, *, tp=512):
    """out[b] = max_over_points( relu(x3d[b] @ w + shift) ), fused in one kernel."""
    b, n, cin = x3d.shape
    cout = w.shape[1]
    cout_p = _round_up(cout, 128)
    tp = min(tp, _round_up(n, 8))
    n_p = _round_up(n, tp)

    x_p = x3d.astype(COMPUTE_DTYPE)
    if n_p != n:
        x_p = jnp.pad(x_p, ((0, 0), (0, n_p - n), (0, 0)))
    w_p = w.astype(COMPUTE_DTYPE)
    s_p = shift.reshape(1, -1).astype(jnp.float32)
    if cout_p != cout:
        w_p = jnp.pad(w_p, ((0, 0), (0, cout_p - cout)))
        s_p = jnp.pad(s_p, ((0, 0), (0, cout_p - cout)))

    out = pl.pallas_call(
        _make_linear_relu_max_kernel(n, tp, n_p != n),
        out_shape=jax.ShapeDtypeStruct((b, 1, cout_p), jnp.float32),
        grid=(b, n_p // tp),
        in_specs=[
            pl.BlockSpec((1, tp, cin), lambda i, j: (i, j, 0)),
            pl.BlockSpec((cin, cout_p), lambda i, j: (0, 0)),
            pl.BlockSpec((1, cout_p), lambda i, j: (0, 0)),
        ],
        out_specs=pl.BlockSpec((1, 1, cout_p), lambda i, j: (i, 0, 0)),
        compiler_params=pltpu.CompilerParams(
            dimension_semantics=("parallel", "arbitrary")),
    )(x_p, w_p, s_p)
    return out[:, 0, :cout]


# ----------------------------------------------------------------------------
# Parameters (BN folded into weight/shift on host)
# ----------------------------------------------------------------------------
def make_conv_bn_params(key, cin, cout):
    kw, kb, kg, kbe, km, kv = jax.random.split(key, 6)
    w = jax.random.normal(kw, (cin, cout), jnp.float32) / float(cin) ** 0.5
    bias = 0.1 * jax.random.normal(kb, (cout,), jnp.float32)
    gamma = 1.0 + 0.1 * jax.random.normal(kg, (cout,), jnp.float32)
    beta = 0.1 * jax.random.normal(kbe, (cout,), jnp.float32)
    mean = 0.1 * jax.random.normal(km, (cout,), jnp.float32)
    var = jnp.abs(jax.random.normal(kv, (cout,), jnp.float32)) + 0.5
    scale = gamma / jnp.sqrt(var + BN_EPS)
    wf = w * scale[None, :]                       # fold BN scale into weight
    shift = (bias - mean) * scale + beta          # fold conv bias + BN shift
    return wf, shift


def make_linear_params(key, cin, cout):
    kw, kb = jax.random.split(key)
    w = jax.random.normal(kw, (cin, cout), jnp.float32) / float(cin) ** 0.5
    bias = 0.1 * jax.random.normal(kb, (cout,), jnp.float32)
    return w, bias


# ----------------------------------------------------------------------------
# STNkd forward (Pallas path) and pure-JAX reference
# ----------------------------------------------------------------------------
def stnkd_forward(x, params):
    # x: (B, k, N)  — PyTorch Conv1d layout
    b, k, n = x.shape
    xp = jnp.transpose(x, (0, 2, 1)).reshape(b * n, k)          # point-major
    h = linear_act(xp, params[0][0], params[0][1], relu=True)   # conv1+bn1+relu
    h = linear_act(h, params[1][0], params[1][1], relu=True)    # conv2+bn2+relu
    pooled = linear_relu_maxpool(h.reshape(b, n, -1),            # conv3+bn3+relu
                                 params[2][0], params[2][1])     # + max over N
    h = linear_act(pooled, params[3][0], params[3][1], relu=True)  # fc1+bn4+relu
    h = linear_act(h, params[4][0], params[4][1], relu=True)       # fc2+bn5+relu
    h = linear_act(h, params[5][0], params[5][1], relu=False)      # fc3
    return h.reshape(b, k, k)


def stnkd_reference(x, params):
    b, k, n = x.shape

    def lin(h, w, s, relu=True):
        y = jnp.dot(h.astype(COMPUTE_DTYPE), w.astype(COMPUTE_DTYPE),
                    preferred_element_type=jnp.float32) + s.reshape(1, -1)
        return jnp.maximum(y, 0.0) if relu else y

    xp = jnp.transpose(x, (0, 2, 1)).reshape(b * n, k)
    h = lin(xp, params[0][0], params[0][1])
    h = lin(h, params[1][0], params[1][1])
    h = lin(h, params[2][0], params[2][1])                        # (B*N, 1024)
    h = jnp.max(h.reshape(b, n, -1), axis=1)                      # (B, 1024)
    h = lin(h, params[3][0], params[3][1])
    h = lin(h, params[4][0], params[4][1])
    h = lin(h, params[5][0], params[5][1], relu=False)
    return h.reshape(b, k, k)


# ----------------------------------------------------------------------------
# Main / correctness check
# ----------------------------------------------------------------------------
if __name__ == "__main__":
    key = jax.random.PRNGKey(0)
    keys = jax.random.split(key, 8)

    B, K, N = 2, 16, 64            # small shapes; channel widths fixed by module
    x = jax.random.normal(keys[0], (B, K, N), jnp.float32)

    params = [
        make_conv_bn_params(keys[1], K, 64),       # conv1 + bn1
        make_conv_bn_params(keys[2], 64, 128),     # conv2 + bn2
        make_conv_bn_params(keys[3], 128, 1024),   # conv3 + bn3
        make_conv_bn_params(keys[4], 1024, 512),   # fc1 + bn4
        make_conv_bn_params(keys[5], 512, 256),    # fc2 + bn5
        make_linear_params(keys[6], 256, K * K),   # fc3
    ]

    fwd = jax.jit(stnkd_forward)
    out = jax.block_until_ready(fwd(x, params))

    ref = jax.block_until_ready(stnkd_reference(x, params))
    np.testing.assert_allclose(np.asarray(out), np.asarray(ref),
                               rtol=2e-2, atol=2e-2)
    assert out.shape == (B, K, K)
    print("KERNEL_OK")
</pallas_src>

<mosaic_0001>
module attributes {stable_mosaic.version = 11 : i64} {
  func.func @kernel(%arg0: i32, %arg1: memref<128x16xbf16, #tpu.memory_space<vmem>>, %arg2: memref<16x128xbf16, #tpu.memory_space<vmem>>, %arg3: memref<1x128xf32, #tpu.memory_space<vmem>>, %arg4: memref<128x128xf32, #tpu.memory_space<vmem>>) attributes {dimension_semantics = [#tpu.dimension_semantics<parallel>], iteration_bounds = array<i64: 1>, scalar_prefetch = 0 : i64, scratch_operands = 0 : i64, tpu.core_type = #tpu.core_type<tc>, window_params = [{transform_indices = @transform_0, window_bounds = array<i64: 128, 16>}, {pipeline_mode = #tpu.pipeline_mode<synchronous>, transform_indices = @transform_1, window_bounds = array<i64: 16, 128>}, {pipeline_mode = #tpu.pipeline_mode<synchronous>, transform_indices = @transform_2, window_bounds = array<i64: 1, 128>}, {transform_indices = @transform_3, window_bounds = array<i64: 128, 128>}]} {
    %c0 = arith.constant 0 : index
    %c0_0 = arith.constant 0 : index
    %0 = vector.load %arg1[%c0, %c0_0] : memref<128x16xbf16, #tpu.memory_space<vmem>>, vector<128x16xbf16>
    %c0_1 = arith.constant 0 : index
    %c0_2 = arith.constant 0 : index
    %1 = vector.load %arg2[%c0_1, %c0_2] : memref<16x128xbf16, #tpu.memory_space<vmem>>, vector<16x128xbf16>
    %cst = arith.constant dense<0.000000e+00> : vector<128x128xf32>
    %2 = tpu.matmul %0, %1, %cst {dimension_numbers = #tpu.dot_dimension_numbers<[1], [0], [0], [1], [0, 0, 1, 1], [], []>} : vector<128x16xbf16>, vector<16x128xbf16>, vector<128x128xf32> -> vector<128x128xf32>
    %c0_3 = arith.constant 0 : index
    %c0_4 = arith.constant 0 : index
    %3 = vector.load %arg3[%c0_3, %c0_4] : memref<1x128xf32, #tpu.memory_space<vmem>>, vector<1x128xf32>
    %4 = vector.broadcast %3 : vector<1x128xf32> to vector<128x128xf32>
    %5 = arith.addf %2, %4 : vector<128x128xf32>
    %cst_5 = arith.constant 0.000000e+00 : f32
    %6 = vector.broadcast %cst_5 : f32 to vector<128x128xf32>
    %7 = arith.maximumf %5, %6 : vector<128x128xf32>
    %c0_6 = arith.constant 0 : index
    %c0_7 = arith.constant 0 : index
    %8 = vector.load %arg4[%c0_6, %c0_7] : memref<128x128xf32, #tpu.memory_space<vmem>>, vector<128x128xf32>
    tpu.vector_store %arg4[%c0_6, %c0_7], %7 {strides = array<i32>} : memref<128x128xf32, #tpu.memory_space<vmem>>, vector<128x128xf32>,
    return
  }
  func.func @transform_0(%arg0: i32) -> (i32, i32) {
    %c0_i32 = arith.constant 0 : i32
    %c0_i32_0 = arith.constant 0 : i32
    return %arg0, %c0_i32 : i32, i32
  }
  func.func @transform_1(%arg0: i32) -> (i32, i32) {
    %c0_i32 = arith.constant 0 : i32
    %c0_i32_0 = arith.constant 0 : i32
    %c0_i32_1 = arith.constant 0 : i32
    return %c0_i32, %c0_i32_0 : i32, i32
  }
  func.func @transform_2(%arg0: i32) -> (i32, i32) {
    %c0_i32 = arith.constant 0 : i32
    %c0_i32_0 = arith.constant 0 : i32
    %c0_i32_1 = arith.constant 0 : i32
    return %c0_i32, %c0_i32_0 : i32, i32
  }
  func.func @transform_3(%arg0: i32) -> (i32, i32) {
    %c0_i32 = arith.constant 0 : i32
    %c0_i32_0 = arith.constant 0 : i32
    return %arg0, %c0_i32 : i32, i32
  }
}

module attributes {stable_mosaic.version = 11 : i64} {
  func.func @kernel(%arg0: i32, %arg1: i32, %arg2: memref<1x64x128xbf16, #tpu.memory_space<vmem>>, %arg3: memref<128x1024xbf16, #tpu.memory_space<vmem>>, %arg4: memref<1x1024xf32, #tpu.memory_space<vmem>>, %arg5: memref<1x1x1024xf32, #tpu.memory_space<vmem>>) attributes {dimension_semantics = [#tpu.dimension_semantics<parallel>, #tpu.dimension_semantics<arbitrary>], iteration_bounds = array<i64: 2, 1>, scalar_prefetch = 0 : i64, scratch_operands = 0 : i64, tpu.core_type = #tpu.core_type<tc>, window_params = [{transform_indices = @transform_0, window_bounds = array<i64: 1, 64, 128>}, {pipeline_mode = #tpu.pipeline_mode<synchronous>, transform_indices = @transform_1, window_bounds = array<i64: 128, 1024>}, {pipeline_mode = #tpu.pipeline_mode<synchronous>, transform_indices = @transform_2, window_bounds = array<i64: 1, 1024>}, {transform_indices = @transform_3, window_bounds = array<i64: 1, 1, 1024>}]} {
    %c0_i32 = arith.constant 0 : i32
    %0 = arith.cmpi eq, %arg1, %c0_i32 : i32
    %1 = arith.extui %0 : i1 to i32
    %c0_i32_0 = arith.constant 0 : i32
    %2 = arith.cmpi ne, %1, %c0_i32_0 : i32
    scf.if %2 {
      %cst_15 = arith.constant 0.000000e+00 : f32
      %18 = vector.broadcast %cst_15 : f32 to vector<1x1x1024xf32>
      %c0_16 = arith.constant 0 : index
      %c0_17 = arith.constant 0 : index
      %c0_18 = arith.constant 0 : index
      %19 = vector.load %arg5[%c0_16, %c0_17, %c0_18] : memref<1x1x1024xf32, #tpu.memory_space<vmem>>, vector<1x1x1024xf32>
      tpu.vector_store %arg5[%c0_16, %c0_17, %c0_18], %18 {strides = array<i32>} : memref<1x1x1024xf32, #tpu.memory_space<vmem>>, vector<1x1x1024xf32>,
    } else {
    }
    %c0 = arith.constant 0 : index
    %c0_1 = arith.constant 0 : index
    %c0_2 = arith.constant 0 : index
    %3 = vector.load %arg2[%c0, %c0_1, %c0_2] : memref<1x64x128xbf16, #tpu.memory_space<vmem>>, vector<1x64x128xbf16>
    %4 = vector.shape_cast %3 : vector<1x64x128xbf16> to vector<64x128xbf16>
    %c0_3 = arith.constant 0 : index
    %c0_4 = arith.constant 0 : index
    %5 = vector.load %arg3[%c0_3, %c0_4] : memref<128x1024xbf16, #tpu.memory_space<vmem>>, vector<128x1024xbf16>
    %cst = arith.constant dense<0.000000e+00> : vector<64x1024xf32>
    %6 = tpu.matmul %4, %5, %cst {dimension_numbers = #tpu.dot_dimension_numbers<[1], [0], [0], [1], [0, 0, 1, 1], [], []>} : vector<64x128xbf16>, vector<128x1024xbf16>, vector<64x1024xf32> -> vector<64x1024xf32>
    %c0_5 = arith.constant 0 : index
    %c0_6 = arith.constant 0 : index
    %7 = vector.load %arg4[%c0_5, %c0_6] : memref<1x1024xf32, #tpu.memory_space<vmem>>, vector<1x1024xf32>
    %8 = vector.broadcast %7 : vector<1x1024xf32> to vector<64x1024xf32>
    %9 = arith.addf %6, %8 : vector<64x1024xf32>
    %cst_7 = arith.constant 0.000000e+00 : f32
    %10 = vector.broadcast %cst_7 : f32 to vector<64x1024xf32>
    %11 = arith.maximumf %9, %10 : vector<64x1024xf32>
    %cst_8 = arith.constant dense<0xFF800000> : vector<1024xf32>
    %12 = vector.multi_reduction <maximumf>, %11, %cst_8 [0] : vector<64x1024xf32> to vector<1024xf32>
    %13 = vector.shape_cast %12 : vector<1024xf32> to vector<1x1024xf32>
    %14 = vector.shape_cast %13 : vector<1x1024xf32> to vector<1x1x1024xf32>
    %c0_9 = arith.constant 0 : index
    %c0_10 = arith.constant 0 : index
    %c0_11 = arith.constant 0 : index
    %15 = vector.load %arg5[%c0_9, %c0_10, %c0_11] : memref<1x1x1024xf32, #tpu.memory_space<vmem>>, vector<1x1x1024xf32>
    %16 = arith.maximumf %15, %14 : vector<1x1x1024xf32>
    %c0_12 = arith.constant 0 : index
    %c0_13 = arith.constant 0 : index
    %c0_14 = arith.constant 0 : index
    %17 = vector.load %arg5[%c0_12, %c0_13, %c0_14] : memref<1x1x1024xf32, #tpu.memory_space<vmem>>, vector<1x1x1024xf32>
    tpu.vector_store %arg5[%c0_12, %c0_13, %c0_14], %16 {strides = array<i32>} : memref<1x1x1024xf32, #tpu.memory_space<vmem>>, vector<1x1x1024xf32>,
    return
  }
  func.func @transform_0(%arg0: i32, %arg1: i32) -> (i32, i32, i32) {
    %c0_i32 = arith.constant 0 : i32
    %c0_i32_0 = arith.constant 0 : i32
    return %arg0, %arg1, %c0_i32 : i32, i32, i32
  }
  func.func @transform_1(%arg0: i32, %arg1: i32) -> (i32, i32) {
    %c0_i32 = arith.constant 0 : i32
    %c0_i32_0 = arith.constant 0 : i32
    %c0_i32_1 = arith.constant 0 : i32
    return %c0_i32, %c0_i32_0 : i32, i32
  }
  func.func @transform_2(%arg0: i32, %arg1: i32) -> (i32, i32) {
    %c0_i32 = arith.constant 0 : i32
    %c0_i32_0 = arith.constant 0 : i32
    %c0_i32_1 = arith.constant 0 : i32
    return %c0_i32, %c0_i32_0 : i32, i32
  }
  func.func @transform_3(%arg0: i32, %arg1: i32) -> (i32, i32, i32) {
    %c0_i32 = arith.constant 0 : i32
    %c0_i32_0 = arith.constant 0 : i32
    %c0_i32_1 = arith.constant 0 : i32
    return %arg0, %c0_i32, %c0_i32_0 : i32, i32, i32
  }
}

module attributes {stable_mosaic.version = 11 : i64} {
  func.func @kernel(%arg0: i32, %arg1: memref<128x64xbf16, #tpu.memory_space<vmem>>, %arg2: memref<64x128xbf16, #tpu.memory_space<vmem>>, %arg3: memref<1x128xf32, #tpu.memory_space<vmem>>, %arg4: memref<128x128xf32, #tpu.memory_space<vmem>>) attributes {dimension_semantics = [#tpu.dimension_semantics<parallel>], iteration_bounds = array<i64: 1>, scalar_prefetch = 0 : i64, scratch_operands = 0 : i64, tpu.core_type = #tpu.core_type<tc>, window_params = [{transform_indices = @transform_0, window_bounds = array<i64: 128, 64>}, {pipeline_mode = #tpu.pipeline_mode<synchronous>, transform_indices = @transform_1, window_bounds = array<i64: 64, 128>}, {pipeline_mode = #tpu.pipeline_mode<synchronous>, transform_indices = @transform_2, window_bounds = array<i64: 1, 128>}, {transform_indices = @transform_3, window_bounds = array<i64: 128, 128>}]} {
    %c0 = arith.constant 0 : index
    %c0_0 = arith.constant 0 : index
    %0 = vector.load %arg1[%c0, %c0_0] : memref<128x64xbf16, #tpu.memory_space<vmem>>, vector<128x64xbf16>
    %c0_1 = arith.constant 0 : index
    %c0_2 = arith.constant 0 : index
    %1 = vector.load %arg2[%c0_1, %c0_2] : memref<64x128xbf16, #tpu.memory_space<vmem>>, vector<64x128xbf16>
    %cst = arith.constant dense<0.000000e+00> : vector<128x128xf32>
    %2 = tpu.matmul %0, %1, %cst {dimension_numbers = #tpu.dot_dimension_numbers<[1], [0], [0], [1], [0, 0, 1, 1], [], []>} : vector<128x64xbf16>, vector<64x128xbf16>, vector<128x128xf32> -> vector<128x128xf32>
    %c0_3 = arith.constant 0 : index
    %c0_4 = arith.constant 0 : index
    %3 = vector.load %arg3[%c0_3, %c0_4] : memref<1x128xf32, #tpu.memory_space<vmem>>, vector<1x128xf32>
    %4 = vector.broadcast %3 : vector<1x128xf32> to vector<128x128xf32>
    %5 = arith.addf %2, %4 : vector<128x128xf32>
    %cst_5 = arith.constant 0.000000e+00 : f32
    %6 = vector.broadcast %cst_5 : f32 to vector<128x128xf32>
    %7 = arith.maximumf %5, %6 : vector<128x128xf32>
    %c0_6 = arith.constant 0 : index
    %c0_7 = arith.constant 0 : index
    %8 = vector.load %arg4[%c0_6, %c0_7] : memref<128x128xf32, #tpu.memory_space<vmem>>, vector<128x128xf32>
    tpu.vector_store %arg4[%c0_6, %c0_7], %7 {strides = array<i32>} : memref<128x128xf32, #tpu.memory_space<vmem>>, vector<128x128xf32>,
    return
  }
  func.func @transform_0(%arg0: i32) -> (i32, i32) {
    %c0_i32 = arith.constant 0 : i32
    %c0_i32_0 = arith.constant 0 : i32
    return %arg0, %c0_i32 : i32, i32
  }
  func.func @transform_1(%arg0: i32) -> (i32, i32) {
    %c0_i32 = arith.constant 0 : i32
    %c0_i32_0 = arith.constant 0 : i32
    %c0_i32_1 = arith.constant 0 : i32
    return %c0_i32, %c0_i32_0 : i32, i32
  }
  func.func @transform_2(%arg0: i32) -> (i32, i32) {
    %c0_i32 = arith.constant 0 : i32
    %c0_i32_0 = arith.constant 0 : i32
    %c0_i32_1 = arith.constant 0 : i32
    return %c0_i32, %c0_i32_0 : i32, i32
  }
  func.func @transform_3(%arg0: i32) -> (i32, i32) {
    %c0_i32 = arith.constant 0 : i32
    %c0_i32_0 = arith.constant 0 : i32
    return %arg0, %c0_i32 : i32, i32
  }
}

module attributes {stable_mosaic.version = 11 : i64} {
  func.func @kernel(%arg0: i32, %arg1: memref<8x1024xbf16, #tpu.memory_space<vmem>>, %arg2: memref<1024x512xbf16, #tpu.memory_space<vmem>>, %arg3: memref<1x512xf32, #tpu.memory_space<vmem>>, %arg4: memref<8x512xf32, #tpu.memory_space<vmem>>) attributes {dimension_semantics = [#tpu.dimension_semantics<parallel>], iteration_bounds = array<i64: 1>, scalar_prefetch = 0 : i64, scratch_operands = 0 : i64, tpu.core_type = #tpu.core_type<tc>, window_params = [{transform_indices = @transform_0, window_bounds = array<i64: 8, 1024>}, {pipeline_mode = #tpu.pipeline_mode<synchronous>, transform_indices = @transform_1, window_bounds = array<i64: 1024, 512>}, {pipeline_mode = #tpu.pipeline_mode<synchronous>, transform_indices = @transform_2, window_bounds = array<i64: 1, 512>}, {transform_indices = @transform_3, window_bounds = array<i64: 8, 512>}]} {
    %c0 = arith.constant 0 : index
    %c0_0 = arith.constant 0 : index
    %0 = vector.load %arg1[%c0, %c0_0] : memref<8x1024xbf16, #tpu.memory_space<vmem>>, vector<8x1024xbf16>
    %c0_1 = arith.constant 0 : index
    %c0_2 = arith.constant 0 : index
    %1 = vector.load %arg2[%c0_1, %c0_2] : memref<1024x512xbf16, #tpu.memory_space<vmem>>, vector<1024x512xbf16>
    %cst = arith.constant dense<0.000000e+00> : vector<8x512xf32>
    %2 = tpu.matmul %0, %1, %cst {dimension_numbers = #tpu.dot_dimension_numbers<[1], [0], [0], [1], [0, 0, 1, 1], [], []>} : vector<8x1024xbf16>, vector<1024x512xbf16>, vector<8x512xf32> -> vector<8x512xf32>
    %c0_3 = arith.constant 0 : index
    %c0_4 = arith.constant 0 : index
    %3 = vector.load %arg3[%c0_3, %c0_4] : memref<1x512xf32, #tpu.memory_space<vmem>>, vector<1x512xf32>
    %4 = vector.broadcast %3 : vector<1x512xf32> to vector<8x512xf32>
    %5 = arith.addf %2, %4 : vector<8x512xf32>
    %cst_5 = arith.constant 0.000000e+00 : f32
    %6 = vector.broadcast %cst_5 : f32 to vector<8x512xf32>
    %7 = arith.maximumf %5, %6 : vector<8x512xf32>
    %c0_6 = arith.constant 0 : index
    %c0_7 = arith.constant 0 : index
    %8 = vector.load %arg4[%c0_6, %c0_7] : memref<8x512xf32, #tpu.memory_space<vmem>>, vector<8x512xf32>
    tpu.vector_store %arg4[%c0_6, %c0_7], %7 {strides = array<i32>} : memref<8x512xf32, #tpu.memory_space<vmem>>, vector<8x512xf32>,
    return
  }
  func.func @transform_0(%arg0: i32) -> (i32, i32) {
    %c0_i32 = arith.constant 0 : i32
    %c0_i32_0 = arith.constant 0 : i32
    return %arg0, %c0_i32 : i32, i32
  }
  func.func @transform_1(%arg0: i32) -> (i32, i32) {
    %c0_i32 = arith.constant 0 : i32
    %c0_i32_0 = arith.constant 0 : i32
    %c0_i32_1 = arith.constant 0 : i32
    return %c0_i32, %c0_i32_0 : i32, i32
  }
  func.func @transform_2(%arg0: i32) -> (i32, i32) {
    %c0_i32 = arith.constant 0 : i32
    %c0_i32_0 = arith.constant 0 : i32
    %c0_i32_1 = arith.constant 0 : i32
    return %c0_i32, %c0_i32_0 : i32, i32
  }
  func.func @transform_3(%arg0: i32) -> (i32, i32) {
    %c0_i32 = arith.constant 0 : i32
    %c0_i32_0 = arith.constant 0 : i32
    return %arg0, %c0_i32 : i32, i32
  }
}

module attributes {stable_mosaic.version = 11 : i64} {
  func.func @kernel(%arg0: i32, %arg1: memref<8x512xbf16, #tpu.memory_space<vmem>>, %arg2: memref<512x256xbf16, #tpu.memory_space<vmem>>, %arg3: memref<1x256xf32, #tpu.memory_space<vmem>>, %arg4: memref<8x256xf32, #tpu.memory_space<vmem>>) attributes {dimension_semantics = [#tpu.dimension_semantics<parallel>], iteration_bounds = array<i64: 1>, scalar_prefetch = 0 : i64, scratch_operands = 0 : i64, tpu.core_type = #tpu.core_type<tc>, window_params = [{transform_indices = @transform_0, window_bounds = array<i64: 8, 512>}, {pipeline_mode = #tpu.pipeline_mode<synchronous>, transform_indices = @transform_1, window_bounds = array<i64: 512, 256>}, {pipeline_mode = #tpu.pipeline_mode<synchronous>, transform_indices = @transform_2, window_bounds = array<i64: 1, 256>}, {transform_indices = @transform_3, window_bounds = array<i64: 8, 256>}]} {
    %c0 = arith.constant 0 : index
    %c0_0 = arith.constant 0 : index
    %0 = vector.load %arg1[%c0, %c0_0] : memref<8x512xbf16, #tpu.memory_space<vmem>>, vector<8x512xbf16>
    %c0_1 = arith.constant 0 : index
    %c0_2 = arith.constant 0 : index
    %1 = vector.load %arg2[%c0_1, %c0_2] : memref<512x256xbf16, #tpu.memory_space<vmem>>, vector<512x256xbf16>
    %cst = arith.constant dense<0.000000e+00> : vector<8x256xf32>
    %2 = tpu.matmul %0, %1, %cst {dimension_numbers = #tpu.dot_dimension_numbers<[1], [0], [0], [1], [0, 0, 1, 1], [], []>} : vector<8x512xbf16>, vector<512x256xbf16>, vector<8x256xf32> -> vector<8x256xf32>
    %c0_3 = arith.constant 0 : index
    %c0_4 = arith.constant 0 : index
    %3 = vector.load %arg3[%c0_3, %c0_4] : memref<1x256xf32, #tpu.memory_space<vmem>>, vector<1x256xf32>
    %4 = vector.broadcast %3 : vector<1x256xf32> to vector<8x256xf32>
    %5 = arith.addf %2, %4 : vector<8x256xf32>
    %cst_5 = arith.constant 0.000000e+00 : f32
    %6 = vector.broadcast %cst_5 : f32 to vector<8x256xf32>
    %7 = arith.maximumf %5, %6 : vector<8x256xf32>
    %c0_6 = arith.constant 0 : index
    %c0_7 = arith.constant 0 : index
    %8 = vector.load %arg4[%c0_6, %c0_7] : memref<8x256xf32, #tpu.memory_space<vmem>>, vector<8x256xf32>
    tpu.vector_store %arg4[%c0_6, %c0_7], %7 {strides = array<i32>} : memref<8x256xf32, #tpu.memory_space<vmem>>, vector<8x256xf32>,
    return
  }
  func.func @transform_0(%arg0: i32) -> (i32, i32) {
    %c0_i32 = arith.constant 0 : i32
    %c0_i32_0 = arith.constant 0 : i32
    return %arg0, %c0_i32 : i32, i32
  }
  func.func @transform_1(%arg0: i32) -> (i32, i32) {
    %c0_i32 = arith.constant 0 : i32
    %c0_i32_0 = arith.constant 0 : i32
    %c0_i32_1 = arith.constant 0 : i32
    return %c0_i32, %c0_i32_0 : i32, i32
  }
  func.func @transform_2(%arg0: i32) -> (i32, i32) {
    %c0_i32 = arith.constant 0 : i32
    %c0_i32_0 = arith.constant 0 : i32
    %c0_i32_1 = arith.constant 0 : i32
    return %c0_i32, %c0_i32_0 : i32, i32
  }
  func.func @transform_3(%arg0: i32) -> (i32, i32) {
    %c0_i32 = arith.constant 0 : i32
    %c0_i32_0 = arith.constant 0 : i32
    return %arg0, %c0_i32 : i32, i32
  }
}

module attributes {stable_mosaic.version = 11 : i64} {
  func.func @kernel(%arg0: i32, %arg1: memref<8x256xbf16, #tpu.memory_space<vmem>>, %arg2: memref<256x256xbf16, #tpu.memory_space<vmem>>, %arg3: memref<1x256xf32, #tpu.memory_space<vmem>>, %arg4: memref<8x256xf32, #tpu.memory_space<vmem>>) attributes {dimension_semantics = [#tpu.dimension_semantics<parallel>], iteration_bounds = array<i64: 1>, scalar_prefetch = 0 : i64, scratch_operands = 0 : i64, tpu.core_type = #tpu.core_type<tc>, window_params = [{transform_indices = @transform_0, window_bounds = array<i64: 8, 256>}, {pipeline_mode = #tpu.pipeline_mode<synchronous>, transform_indices = @transform_1, window_bounds = array<i64: 256, 256>}, {pipeline_mode = #tpu.pipeline_mode<synchronous>, transform_indices = @transform_2, window_bounds = array<i64: 1, 256>}, {transform_indices = @transform_3, window_bounds = array<i64: 8, 256>}]} {
    %c0 = arith.constant 0 : index
    %c0_0 = arith.constant 0 : index
    %0 = vector.load %arg1[%c0, %c0_0] : memref<8x256xbf16, #tpu.memory_space<vmem>>, vector<8x256xbf16>
    %c0_1 = arith.constant 0 : index
    %c0_2 = arith.constant 0 : index
    %1 = vector.load %arg2[%c0_1, %c0_2] : memref<256x256xbf16, #tpu.memory_space<vmem>>, vector<256x256xbf16>
    %cst = arith.constant dense<0.000000e+00> : vector<8x256xf32>
    %2 = tpu.matmul %0, %1, %cst {dimension_numbers = #tpu.dot_dimension_numbers<[1], [0], [0], [1], [0, 0, 1, 1], [], []>} : vector<8x256xbf16>, vector<256x256xbf16>, vector<8x256xf32> -> vector<8x256xf32>
    %c0_3 = arith.constant 0 : index
    %c0_4 = arith.constant 0 : index
    %3 = vector.load %arg3[%c0_3, %c0_4] : memref<1x256xf32, #tpu.memory_space<vmem>>, vector<1x256xf32>
    %4 = vector.broadcast %3 : vector<1x256xf32> to vector<8x256xf32>
    %5 = arith.addf %2, %4 : vector<8x256xf32>
    %c0_5 = arith.constant 0 : index
    %c0_6 = arith.constant 0 : index
    %6 = vector.load %arg4[%c0_5, %c0_6] : memref<8x256xf32, #tpu.memory_space<vmem>>, vector<8x256xf32>
    tpu.vector_store %arg4[%c0_5, %c0_6], %5 {strides = array<i32>} : memref<8x256xf32, #tpu.memory_space<vmem>>, vector<8x256xf32>,
    return
  }
  func.func @transform_0(%arg0: i32) -> (i32, i32) {
    %c0_i32 = arith.constant 0 : i32
    %c0_i32_0 = arith.constant 0 : i32
    return %arg0, %c0_i32 : i32, i32
  }
  func.func @transform_1(%arg0: i32) -> (i32, i32) {
    %c0_i32 = arith.constant 0 : i32
    %c0_i32_0 = arith.constant 0 : i32
    %c0_i32_1 = arith.constant 0 : i32
    return %c0_i32, %c0_i32_0 : i32, i32
  }
  func.func @transform_2(%arg0: i32) -> (i32, i32) {
    %c0_i32 = arith.constant 0 : i32
    %c0_i32_0 = arith.constant 0 : i32
    %c0_i32_1 = arith.constant 0 : i32
    return %c0_i32, %c0_i32_0 : i32, i32
  }
  func.func @transform_3(%arg0: i32) -> (i32, i32) {
    %c0_i32 = arith.constant 0 : i32
    %c0_i32_0 = arith.constant 0 : i32
    return %arg0, %c0_i32 : i32, i32
  }
}

</mosaic_0001>

<llo_original>
// kernel: stnkd_forward.6
$region0: #{stnkd_forward.6}
  #allocation0 [shape = 'u32[]', space=smem, size = 0x4, offset = 0x4, fixed_abs, tag = 'smem constant byte address 0x4 - core index']
  #allocation1 [shape = 'u32[72,128]{1,0:T(1,128)}', space=vmem, size = 0x9000, scoped, tag = 'internal scratch']
  %s0 = inlined_call_operand.vmem [shape: bf16[128,16], index: 0, kind: input, shape index: {}]
  %s1 = inlined_call_operand.vmem [shape: bf16[16,128], index: 1, kind: input, shape index: {}]
  %s2 = inlined_call_operand.vmem [shape: f32[1,128], index: 2, kind: input, shape index: {}]
  %s3 = inlined_call_operand.vmem [shape: f32[128,128], index: 3, kind: output, shape index: {}]
  %s4 = sld [smem:[#allocation0]]
  $region22: #{stnkd_forward.6} parent=0
    _
  %s6 = ssub.s32 1, %s4
  %s7 = scalar_select 0, %s6, %s4
  // Predicated region
  $region2: #{stnkd_forward.6} parent=0 // pred_check
    _
  $region3: #{stnkd_forward.6} parent=0 // pred_check_branch
    %9 = sbr.rel (0) target = $region5
  $region4: #{stnkd_forward.6} parent=0 // pred_region
    _
  $region5: #{stnkd_forward.6} parent=0 // pred_fallthru
    _
  // Predicated region
  $region6: #{stnkd_forward.6} parent=0 // pred_check
    _
  $region7: #{stnkd_forward.6} parent=0 // pred_check_branch
    %11 = sbr.rel (0) target = $region9
  $region8: #{stnkd_forward.6} parent=0 // pred_region
    _
  $region9: #{stnkd_forward.6} parent=0 // pred_fallthru
    _
  // Predicated region
  $region10: #{stnkd_forward.6} parent=0 // pred_check
    _
  $region11: #{stnkd_forward.6} parent=0 // pred_check_branch
    %13 = sbr.rel (0) target = $region13
  $region12: #{stnkd_forward.6} parent=0 // pred_region
    _
  $region13: #{stnkd_forward.6} parent=0 // pred_fallthru
    _
  %v15 = vld [vmem:[%s0] sm:$0xf]
  %v16 = vld [vmem:[%s0 + $0x4] sm:$0xf]
  %v17 = vld [vmem:[%s0 + $0x8] sm:$0xf]
  %v18 = vld [vmem:[%s0 + $0xc] sm:$0xf]
  %v19 = vld [vmem:[%s0 + $0x10] sm:$0xf]
  %v20 = vld [vmem:[%s0 + $0x14] sm:$0xf]
  %v21 = vld [vmem:[%s0 + $0x18] sm:$0xf]
  %v22 = vld [vmem:[%s0 + $0x1c] sm:$0xf]
  %v23 = vld [vmem:[%s0 + $0x20] sm:$0xf]
  %v24 = vld [vmem:[%s0 + $0x24] sm:$0xf]
  %v25 = vld [vmem:[%s0 + $0x28] sm:$0xf]
  %v26 = vld [vmem:[%s0 + $0x2c] sm:$0xf]
  %v27 = vld [vmem:[%s0 + $0x30] sm:$0xf]
  %v28 = vld [vmem:[%s0 + $0x34] sm:$0xf]
  %v29 = vld [vmem:[%s0 + $0x38] sm:$0xf]
  %v30 = vld [vmem:[%s0 + $0x3c] sm:$0xf]
  %v31 = vld [vmem:[%s1] sm:$0xf]
  %v32 = vld [vmem:[%s1 + $0x4] sm:$0xf]
  %v33 = vld [vmem:[%s2] sm:$0x1]
  %v35 = vperm.slane %v33, 0
  %v53 = vunpack.c.l.b16 %v15
  %v54 = vunpack.c.l.b16 %v16
  %v55 = vunpack.c.l.b16 %v17
  %v56 = vunpack.c.l.b16 %v18
  %v57 = vunpack.c.l.b16 %v19
  %v58 = vunpack.c.l.b16 %v20
  %v59 = vunpack.c.l.b16 %v21
  %v60 = vunpack.c.l.b16 %v22
  %v61 = vunpack.c.l.b16 %v23
  %v62 = vunpack.c.l.b16 %v24
  %v63 = vunpack.c.l.b16 %v25
  %v64 = vunpack.c.l.b16 %v26
  %v65 = vunpack.c.l.b16 %v27
  %v66 = vunpack.c.l.b16 %v28
  %v67 = vunpack.c.l.b16 %v29
  %v68 = vunpack.c.l.b16 %v30
  %v69 = vpack.c.b16 %v54, %v53
  %v70 = vpack.c.b16 %v56, %v55
  %v71 = vpack.c.b16 %v58, %v57
  %v72 = vpack.c.b16 %v60, %v59
  %v73 = vpack.c.b16 %v62, %v61
  %v74 = vpack.c.b16 %v64, %v63
  %v75 = vpack.c.b16 %v66, %v65
  %v76 = vpack.c.b16 %v68, %v67
  %v79 = vunpack.c.l.b16 %v31
  %v80 = vunpack.c.l.b16 %v32
  %v81 = vpack.c.b16 %v80, %v79
  %vm83 = vcmask 130048
  %v85 = vsel %vm83, %v69, 0
  %v88 = vsel %vm83, %v70, 0
  %v91 = vsel %vm83, %v71, 0
  %v94 = vsel %vm83, %v72, 0
  %v97 = vsel %vm83, %v73, 0
  %v100 = vsel %vm83, %v74, 0
  %v103 = vsel %vm83, %v75, 0
  %v106 = vsel %vm83, %v76, 0
  %108 = vmatpush.bf16.msra.mxu0 0
  %109 = vmatpush.bf16.msra.mxu0 0
  %110 = vmatpush.bf16.msra.mxu0 0
  %111 = vmatpush.bf16.msra.mxu0 0
  %112 = vmatpush.bf16.msra.mxu0 0
  %113 = vmatpush.bf16.msra.mxu0 0
  %114 = vmatpush.bf16.msra.mxu0 0
  %115 = vmatpush.bf16.msra.mxu0 %v81
  %116 = vmatmul.bf16.gmra.mxu0 %v85
  %v117 = vpop.f32.mrf.mxu0
  %v118 = vadd.f32 %v35, %v117
  %v119 = vpop.f32.mrf.mxu0
  %v120 = vadd.f32 %v35, %v119
  %121 = vmatmul.bf16.gmra.mxu0 %v88
  %v122 = vpop.f32.mrf.mxu0
  %v123 = vadd.f32 %v35, %v122
  %v124 = vpop.f32.mrf.mxu0
  %v125 = vadd.f32 %v35, %v124
  %126 = vmatmul.bf16.gmra.mxu0 %v91
  %v127 = vpop.f32.mrf.mxu0
  %v128 = vadd.f32 %v35, %v127
  %v129 = vpop.f32.mrf.mxu0
  %v130 = vadd.f32 %v35, %v129
  %131 = vmatmul.bf16.gmra.mxu0 %v94
  %v132 = vpop.f32.mrf.mxu0
  %v133 = vadd.f32 %v35, %v132
  %v134 = vpop.f32.mrf.mxu0
  %v135 = vadd.f32 %v35, %v134
  %136 = vmatmul.bf16.gmra.mxu0 %v97
  %v137 = vpop.f32.mrf.mxu0
  %v138 = vadd.f32 %v35, %v137
  %v139 = vpop.f32.mrf.mxu0
  %v140 = vadd.f32 %v35, %v139
  %141 = vmatmul.bf16.gmra.mxu0 %v100
  %v142 = vpop.f32.mrf.mxu0
  %v143 = vadd.f32 %v35, %v142
  %v144 = vpop.f32.mrf.mxu0
  %v145 = vadd.f32 %v35, %v144
  %146 = vmatmul.bf16.gmra.mxu0 %v103
  %v147 = vpop.f32.mrf.mxu0
  %v148 = vadd.f32 %v35, %v147
  %v149 = vpop.f32.mrf.mxu0
  %v150 = vadd.f32 %v35, %v149
  %151 = vmatmul.bf16.gmra.mxu0 %v106
  %v152 = vpop.f32.mrf.mxu0
  %v153 = vadd.f32 %v35, %v152
  %v154 = vpop.f32.mrf.mxu0
  %v155 = vadd.f32 %v35, %v154
  %156 = vdwg.mxu0
  %v157 = vmax.f32 %v118, 0.0
  %v158 = vmax.f32 %v120, 0.0
  %v159 = vmax.f32 %v123, 0.0
  %v160 = vmax.f32 %v125, 0.0
  %v161 = vmax.f32 %v128, 0.0
  %v162 = vmax.f32 %v130, 0.0
  %v163 = vmax.f32 %v133, 0.0
  %v164 = vmax.f32 %v135, 0.0
  %v165 = vmax.f32 %v138, 0.0
  %v166 = vmax.f32 %v140, 0.0
  %v167 = vmax.f32 %v143, 0.0
  %v168 = vmax.f32 %v145, 0.0
  %v169 = vmax.f32 %v148, 0.0
  %v170 = vmax.f32 %v150, 0.0
  %v171 = vmax.f32 %v153, 0.0
  %v172 = vmax.f32 %v155, 0.0
  %173 = vst [vmem:[%s3] sm:$0xff] %v157
  %174 = vst [vmem:[%s3 + $0x8] sm:$0xff] %v158
  %175 = vst [vmem:[%s3 + $0x10] sm:$0xff] %v159
  %176 = vst [vmem:[%s3 + $0x18] sm:$0xff] %v160
  %177 = vst [vmem:[%s3 + $0x20] sm:$0xff] %v161
  %178 = vst [vmem:[%s3 + $0x28] sm:$0xff] %v162
  %179 = vst [vmem:[%s3 + $0x30] sm:$0xff] %v163
  %180 = vst [vmem:[%s3 + $0x38] sm:$0xff] %v164
  %181 = vst [vmem:[%s3 + $0x40] sm:$0xff] %v165
  %182 = vst [vmem:[%s3 + $0x48] sm:$0xff] %v166
  %183 = vst [vmem:[%s3 + $0x50] sm:$0xff] %v167
  %184 = vst [vmem:[%s3 + $0x58] sm:$0xff] %v168
  %185 = vst [vmem:[%s3 + $0x60] sm:$0xff] %v169
  %186 = vst [vmem:[%s3 + $0x68] sm:$0xff] %v170
  %187 = vst [vmem:[%s3 + $0x70] sm:$0xff] %v171
  %188 = vst [vmem:[%s3 + $0x78] sm:$0xff] %v172
  // Predicated region
  $region14: #{stnkd_forward.6} parent=0 // pred_check
    _
  $region15: #{stnkd_forward.6} parent=0 // pred_check_branch
    %190 = sbr.rel (0) target = $region17
  $region16: #{stnkd_forward.6} parent=0 // pred_region
    _
  $region17: #{stnkd_forward.6} parent=0 // pred_fallthru
    _
  // Predicated region
  $region18: #{stnkd_forward.6} parent=0 // pred_check
    _
  $region19: #{stnkd_forward.6} parent=0 // pred_check_branch
    %192 = sbr.rel (0) target = $region21
  $region20: #{stnkd_forward.6} parent=0 // pred_region
    _
  $region21: #{stnkd_forward.6} parent=0 // pred_fallthru
    _

// kernel: stnkd_forward.7
$region0: #{stnkd_forward.7}
  #allocation0 [shape = 'u32[]', space=smem, size = 0x4, offset = 0x4, fixed_abs, tag = 'smem constant byte address 0x4 - core index']
  #allocation1 [shape = 'u32[72,128]{1,0:T(1,128)}', space=vmem, size = 0x9000, scoped, tag = 'internal scratch']
  %s0 = inlined_call_operand.vmem [shape: bf16[128,64], index: 0, kind: input, shape index: {}]
  %s1 = inlined_call_operand.vmem [shape: bf16[64,128], index: 1, kind: input, shape index: {}]
  %s2 = inlined_call_operand.hbm [shape: f32[1,128], index: 2, kind: input, shape index: {}]
  %s3 = inlined_call_operand.vmem [shape: f32[128,128], index: 3, kind: output, shape index: {}]
  %s4 = sld [smem:[#allocation0]]
  $region26: #{stnkd_forward.7} parent=0
    _
  %s6 = ssub.s32 1, %s4
  %s7 = scalar_select 0, %s6, %s4
  $region1: #{stnkd_forward.7} parent=0
    #allocation2 [shape = 'u8[512]{0}', space=vmem, size = 0x400, scoped, tag = 'input window, operand 2, single buffered']
    #allocation3 [shape = 's32[1]{0}', space=sflag, size = 0x4, scoped, tag = 'scoped memory for stnkd_forward.7']
    %8 = vsyncpa [#allocation3], 0
    // Predicated region
    $region2: #{stnkd_forward.7} parent=1 // pred_check
      _
    $region3: #{stnkd_forward.7} parent=1 // pred_check_branch
      %10 = sbr.rel (0) target = $region5
    $region4: #{stnkd_forward.7} parent=1 // pred_region
      _
    $region5: #{stnkd_forward.7} parent=1 // pred_fallthru
      _
    // Predicated region
    $region6: #{stnkd_forward.7} parent=1 // pred_check
      _
    $region7: #{stnkd_forward.7} parent=1 // pred_check_branch
      %12 = sbr.rel (0) target = $region9
    $region8: #{stnkd_forward.7} parent=1 // pred_region
      _
    $region9: #{stnkd_forward.7} parent=1 // pred_fallthru
      _
    // Predicated region
    $region10: #{stnkd_forward.7} parent=1 // pred_check
      _
    $region11: #{stnkd_forward.7} parent=1 // pred_check_branch
      %14 = sbr.rel (0) target = $region13
    $region12: #{stnkd_forward.7} parent=1 // pred_region
      %16 = vsyncadd [#allocation3], 0
      %s18 = sshll.u32 %s2, 4
      %s19 = int_to_ptr.hbm [resolvable:$true] %s18
      %s20 = sshll.u32 [#allocation2], 4
      %s21 = int_to_ptr.vmem [resolvable:$true] %s20
      %23 = dma.hbm_to_vmem [thread:$0]  %s19, 16, %s21, [#allocation3]
    $region13: #{stnkd_forward.7} parent=1 // pred_fallthru
      _
    // Predicated region
    $region14: #{stnkd_forward.7} parent=1 // pred_check
      _
    $region15: #{stnkd_forward.7} parent=1 // pred_check_branch
      %25 = sbr.rel (0) target = $region17
    $region16: #{stnkd_forward.7} parent=1 // pred_region
      %27 = dma.done [#allocation3], 16
    $region17: #{stnkd_forward.7} parent=1 // pred_fallthru
      _
    %v29 = vld [vmem:[%s0] sm:$0xf]
    %v30 = vld [vmem:[%s0 + $0x4] sm:$0xf]
    %v31 = vld [vmem:[%s0 + $0x8] sm:$0xf]
    %v32 = vld [vmem:[%s0 + $0xc] sm:$0xf]
    %v33 = vld [vmem:[%s0 + $0x10] sm:$0xf]
    %v34 = vld [vmem:[%s0 + $0x14] sm:$0xf]
    %v35 = vld [vmem:[%s0 + $0x18] sm:$0xf]
    %v36 = vld [vmem:[%s0 + $0x1c] sm:$0xf]
    %v37 = vld [vmem:[%s0 + $0x20] sm:$0xf]
    %v38 = vld [vmem:[%s0 + $0x24] sm:$0xf]
    %v39 = vld [vmem:[%s0 + $0x28] sm:$0xf]
    %v40 = vld [vmem:[%s0 + $0x2c] sm:$0xf]
    %v41 = vld [vmem:[%s0 + $0x30] sm:$0xf]
    %v42 = vld [vmem:[%s0 + $0x34] sm:$0xf]
    %v43 = vld [vmem:[%s0 + $0x38] sm:$0xf]
    %v44 = vld [vmem:[%s0 + $0x3c] sm:$0xf]
    %v45 = vld [vmem:[%s1] sm:$0xf]
    %v46 = vld [vmem:[%s1 + $0x4] sm:$0xf]
    %v47 = vld [vmem:[%s1 + $0x8] sm:$0xf]
    %v48 = vld [vmem:[%s1 + $0xc] sm:$0xf]
    %v49 = vld [vmem:[%s1 + $0x10] sm:$0xf]
    %v50 = vld [vmem:[%s1 + $0x14] sm:$0xf]
    %v51 = vld [vmem:[%s1 + $0x18] sm:$0xf]
    %v52 = vld [vmem:[%s1 + $0x1c] sm:$0xf]
    %v53 = vld [vmem:[#allocation2] sm:$0x1]
    %v55 = vperm.slane %v53, 0
    %v73 = vunpack.c.l.b16 %v29
    %v74 = vunpack.c.l.b16 %v30
    %v75 = vunpack.c.l.b16 %v31
    %v76 = vunpack.c.l.b16 %v32
    %v77 = vunpack.c.l.b16 %v33
    %v78 = vunpack.c.l.b16 %v34
    %v79 = vunpack.c.l.b16 %v35
    %v80 = vunpack.c.l.b16 %v36
    %v81 = vunpack.c.l.b16 %v37
    %v82 = vunpack.c.l.b16 %v38
    %v83 = vunpack.c.l.b16 %v39
    %v84 = vunpack.c.l.b16 %v40
    %v85 = vunpack.c.l.b16 %v41
    %v86 = vunpack.c.l.b16 %v42
    %v87 = vunpack.c.l.b16 %v43
    %v88 = vunpack.c.l.b16 %v44
    %v89 = vpack.c.b16 %v74, %v73
    %v90 = vpack.c.b16 %v76, %v75
    %v91 = vpack.c.b16 %v78, %v77
    %v92 = vpack.c.b16 %v80, %v79
    %v93 = vpack.c.b16 %v82, %v81
    %v94 = vpack.c.b16 %v84, %v83
    %v95 = vpack.c.b16 %v86, %v85
    %v96 = vpack.c.b16 %v88, %v87
    %v105 = vunpack.c.l.b16 %v45
    %v106 = vunpack.c.l.b16 %v46
    %v107 = vunpack.c.l.b16 %v47
    %v108 = vunpack.c.l.b16 %v48
    %v109 = vunpack.c.l.b16 %v49
    %v110 = vunpack.c.l.b16 %v50
    %v111 = vunpack.c.l.b16 %v51
    %v112 = vunpack.c.l.b16 %v52
    %v113 = vpack.c.b16 %v106, %v105
    %v114 = vpack.c.b16 %v108, %v107
    %v115 = vpack.c.b16 %v110, %v109
    %v116 = vpack.c.b16 %v112, %v111
    %vm121 = vcmask 523264
    %v123 = vsel %vm121, %v89, 0
    %v126 = vsel %vm121, %v90, 0
    %v129 = vsel %vm121, %v91, 0
    %v132 = vsel %vm121, %v92, 0
    %v135 = vsel %vm121, %v93, 0
    %v138 = vsel %vm121, %v94, 0
    %v141 = vsel %vm121, %v95, 0
    %v144 = vsel %vm121, %v96, 0
    %146 = vmatpush.bf16.msra.mxu0 0
    %147 = vmatpush.bf16.msra.mxu0 0
    %148 = vmatpush.bf16.msra.mxu0 0
    %149 = vmatpush.bf16.msra.mxu0 0
    %150 = vmatpush.bf16.msra.mxu0 %v116
    %151 = vmatpush.bf16.msra.mxu0 %v115
    %152 = vmatpush.bf16.msra.mxu0 %v114
    %153 = vmatpush.bf16.msra.mxu0 %v113
    %154 = vmatmul.bf16.gmra.mxu0 %v123
    %v155 = vpop.f32.mrf.mxu0
    %v156 = vadd.f32 %v55, %v155
    %v157 = vpop.f32.mrf.mxu0
    %v158 = vadd.f32 %v55, %v157
    %159 = vmatmul.bf16.gmra.mxu0 %v126
    %v160 = vpop.f32.mrf.mxu0
    %v161 = vadd.f32 %v55, %v160
    %v162 = vpop.f32.mrf.mxu0
    %v163 = vadd.f32 %v55, %v162
    %164 = vmatmul.bf16.gmra.mxu0 %v129
    %v165 = vpop.f32.mrf.mxu0
    %v166 = vadd.f32 %v55, %v165
    %v167 = vpop.f32.mrf.mxu0
    %v168 = vadd.f32 %v55, %v167
    %169 = vmatmul.bf16.gmra.mxu0 %v132
    %v170 = vpop.f32.mrf.mxu0
    %v171 = vadd.f32 %v55, %v170
    %v172 = vpop.f32.mrf.mxu0
    %v173 = vadd.f32 %v55, %v172
    %174 = vmatmul.bf16.gmra.mxu0 %v135
    %v175 = vpop.f32.mrf.mxu0
    %v176 = vadd.f32 %v55, %v175
    %v177 = vpop.f32.mrf.mxu0
    %v178 = vadd.f32 %v55, %v177
    %179 = vmatmul.bf16.gmra.mxu0 %v138
    %v180 = vpop.f32.mrf.mxu0
    %v181 = vadd.f32 %v55, %v180
    %v182 = vpop.f32.mrf.mxu0
    %v183 = vadd.f32 %v55, %v182
    %184 = vmatmul.bf16.gmra.mxu0 %v141
    %v185 = vpop.f32.mrf.mxu0
    %v186 = vadd.f32 %v55, %v185
    %v187 = vpop.f32.mrf.mxu0
    %v188 = vadd.f32 %v55, %v187
    %189 = vmatmul.bf16.gmra.mxu0 %v144
    %v190 = vpop.f32.mrf.mxu0
    %v191 = vadd.f32 %v55, %v190
    %v192 = vpop.f32.mrf.mxu0
    %v193 = vadd.f32 %v55, %v192
    %194 = vdwg.mxu0
    %v195 = vmax.f32 %v156, 0.0
    %v196 = vmax.f32 %v158, 0.0
    %v197 = vmax.f32 %v161, 0.0
    %v198 = vmax.f32 %v163, 0.0
    %v199 = vmax.f32 %v166, 0.0
    %v200 = vmax.f32 %v168, 0.0
    %v201 = vmax.f32 %v171, 0.0
    %v202 = vmax.f32 %v173, 0.0
    %v203 = vmax.f32 %v176, 0.0
    %v204 = vmax.f32 %v178, 0.0
    %v205 = vmax.f32 %v181, 0.0
    %v206 = vmax.f32 %v183, 0.0
    %v207 = vmax.f32 %v186, 0.0
    %v208 = vmax.f32 %v188, 0.0
    %v209 = vmax.f32 %v191, 0.0
    %v210 = vmax.f32 %v193, 0.0
    %211 = vst [vmem:[%s3] sm:$0xff] %v195
    %212 = vst [vmem:[%s3 + $0x8] sm:$0xff] %v196
    %213 = vst [vmem:[%s3 + $0x10] sm:$0xff] %v197
    %214 = vst [vmem:[%s3 + $0x18] sm:$0xff] %v198
    %215 = vst [vmem:[%s3 + $0x20] sm:$0xff] %v199
    %216 = vst [vmem:[%s3 + $0x28] sm:$0xff] %v200
    %217 = vst [vmem:[%s3 + $0x30] sm:$0xff] %v201
    %218 = vst [vmem:[%s3 + $0x38] sm:$0xff] %v202
    %219 = vst [vmem:[%s3 + $0x40] sm:$0xff] %v203
    %220 = vst [vmem:[%s3 + $0x48] sm:$0xff] %v204
    %221 = vst [vmem:[%s3 + $0x50] sm:$0xff] %v205
    %222 = vst [vmem:[%s3 + $0x58] sm:$0xff] %v206
    %223 = vst [vmem:[%s3 + $0x60] sm:$0xff] %v207
    %224 = vst [vmem:[%s3 + $0x68] sm:$0xff] %v208
    %225 = vst [vmem:[%s3 + $0x70] sm:$0xff] %v209
    %226 = vst [vmem:[%s3 + $0x78] sm:$0xff] %v210
    // Predicated region
    $region18: #{stnkd_forward.7} parent=1 // pred_check
      _
    $region19: #{stnkd_forward.7} parent=1 // pred_check_branch
      %228 = sbr.rel (0) target = $region21
    $region20: #{stnkd_forward.7} parent=1 // pred_region
      _
    $region21: #{stnkd_forward.7} parent=1 // pred_fallthru
      _
    // Predicated region
    $region22: #{stnkd_forward.7} parent=1 // pred_check
      _
    $region23: #{stnkd_forward.7} parent=1 // pred_check_branch
      %230 = sbr.rel (0) target = $region25
    $region24: #{stnkd_forward.7} parent=1 // pred_region
      _
    $region25: #{stnkd_forward.7} parent=1 // pred_fallthru
      _
    %231 = vsyncpa [#allocation3], 1

// kernel: stnkd_forward.8
$region0: #{stnkd_forward.8}
  #allocation0 [shape = 'u32[]', space=smem, size = 0x4, offset = 0x4, fixed_abs, tag = 'smem constant byte address 0x4 - core index']
  #allocation1 [shape = 'u32[72,128]{1,0:T(1,128)}', space=vmem, size = 0x9000, scoped, tag = 'internal scratch']
  %s0 = inlined_call_operand.vmem [shape: bf16[2,64,128], index: 0, kind: input, shape index: {}]
  %s1 = inlined_call_operand.vmem [shape: bf16[128,1024], index: 1, kind: input, shape index: {}]
  %s2 = inlined_call_operand.hbm [shape: f32[1,1024], index: 2, kind: input, shape index: {}]
  %s3 = inlined_call_operand.vmem [shape: f32[2,1,1024], index: 3, kind: output, shape index: {}]
  %s4 = sld [smem:[#allocation0]]
  $region53: #{stnkd_forward.8} parent=0
    _
  %s6 = ssub.s32 1, %s4
  %s7 = scalar_select 0, %s6, %s4
  $region1: #{stnkd_forward.8} parent=0
    #allocation2 [shape = 'u8[4096]{0}', space=vmem, size = 0x1000, scoped, tag = 'input window, operand 2, single buffered']
    #allocation3 [shape = 's32[2]{0}', space=sflag, size = 0x8, scoped, tag = 'scoped memory for stnkd_forward.8']
    %8 = vsyncpa [#allocation3], 0
    loop: start=0, step=1, limit=4
    $region2: #{stnkd_forward.8} parent=1 // loop_pre_header
      _
    $region3: #{stnkd_forward.8} parent=1 // loop_header
      %s10 = sphi 0, %s14
      %p11 = scmp.ge.s32.totalorder %s10, 4
      %s17 = sphi 0, %s29
      %s18 = sphi 0, %s25
      %s19 = sphi 0, %s17
      %s20 = sphi 0, %s18
      %s21 = sphi 0, %s19
      %s22 = sphi 0, %s20
      %s34 = sphi 0, %s36
      %s37 = sphi 0, %s34
      %s38 = sphi 0, %s37
      %s54 = sphi 0, %s38
      %s58 = sphi 0, %s58
      %s60 = sphi 0, %s58
      %s61 = sphi 0, %s60
      %s75 = sphi 0, %s61
      %s79 = sphi 0, %s79
      %s81 = sphi 0, %s79
      %s82 = sphi 0, %s81
      %s96 = sphi 0, %s82
      %s102 = sphi 0, %s104
      %s105 = sphi 0, %s102
      %s106 = sphi 0, %s105
      %s122 = sphi 0, %s106
    $region4: #{stnkd_forward.8} parent=1 // loop_header_branch
      %13 = sbr.rel (%p11) target = $region8
    $region5: #{stnkd_forward.8} parent=1 // loop_body
      %s15 = ssub.s32 %s10, 1
      %s16 = ssub.s32 %s10, 2
      %s23 = sadd.s32 1, %s18
      %p24 = scmp.ge.s32.totalorder %s23, 1
      %s25 = scalar_select %p24, 0, %s23
      %s26 = sadd.s32 1, %s17
      %s27 = scalar_select %p24, %s26, %s17
      %p28 = scmp.ge.s32.totalorder %s27, 2
      %s29 = scalar_select %p28, 0, %s27
      %s30 = ssub.s32 %s17, %s29
      %s31 = ssub.s32 %s18, %s25
      %s32 = sor.u32 %s30, %s31
      %p33 = scmp.eq.s32.totalorder %s32, 0
      %s35 = sadd.s32 %s34, 1
      %s36 = scalar_select %p33, %s34, %s35
      %p39 = pneg %p33
      %p40 = scmp.eq.s32.totalorder %s10, 1
      %p41 = por %p39, %p40
      %p42 = scmp.ne.s32.totalorder %s34, %s37
      %p43 = scmp.eq.s32.totalorder %s10, 0
      %p44 = por %p42, %p43
      %p45 = scmp.ne.s32.totalorder %s34, %s37
      %p46 = scmp.eq.s32.totalorder %s15, 1
      %p47 = por %p45, %p46
      %p48 = scmp.ne.s32.totalorder %s37, %s38
      %p49 = scmp.eq.s32.totalorder %s15, 0
      %p50 = por %p48, %p49
      %p51 = scmp.ne.s32.totalorder %s37, %s38
      %p52 = scmp.eq.s32.totalorder %s16, 1
      %p53 = por %p51, %p52
      %p55 = scmp.ne.s32.totalorder %s38, %s54
      %p56 = scmp.eq.s32.totalorder %s16, 0
      %p57 = por %p55, %p56
      %s59 = sadd.s32 %s58, 1
      %p62 = scmp.eq.s32.totalorder %s10, 1
      %p63 = scmp.ne.s32.totalorder %s58, %s60
      %p64 = scmp.eq.s32.totalorder %s10, 0
      %p65 = por %p63, %p64
      %p66 = scmp.ne.s32.totalorder %s58, %s60
      %p67 = scmp.eq.s32.totalorder %s15, 1
      %p68 = por %p66, %p67
      %p69 = scmp.ne.s32.totalorder %s60, %s61
      %p70 = scmp.eq.s32.totalorder %s15, 0
      %p71 = por %p69, %p70
      %p72 = scmp.ne.s32.totalorder %s60, %s61
      %p73 = scmp.eq.s32.totalorder %s16, 1
      %p74 = por %p72, %p73
      %p76 = scmp.ne.s32.totalorder %s61, %s75
      %p77 = scmp.eq.s32.totalorder %s16, 0
      %p78 = por %p76, %p77
      %s80 = sadd.s32 %s79, 1
      %p83 = scmp.eq.s32.totalorder %s10, 1
      %p84 = scmp.ne.s32.totalorder %s79, %s81
      %p85 = scmp.eq.s32.totalorder %s10, 0
      %p86 = por %p84, %p85
      %p87 = scmp.ne.s32.totalorder %s79, %s81
      %p88 = scmp.eq.s32.totalorder %s15, 1
      %p89 = por %p87, %p88
      %p90 = scmp.ne.s32.totalorder %s81, %s82
      %p91 = scmp.eq.s32.totalorder %s15, 0
      %p92 = por %p90, %p91
      %p93 = scmp.ne.s32.totalorder %s81, %s82
      %p94 = scmp.eq.s32.totalorder %s16, 1
      %p95 = por %p93, %p94
      %p97 = scmp.ne.s32.totalorder %s82, %s96
      %p98 = scmp.eq.s32.totalorder %s16, 0
      %p99 = por %p97, %p98
      %s100 = ssub.s32 %s17, %s29
      %p101 = scmp.eq.s32.totalorder %s100, 0
      %s103 = sadd.s32 %s102, 1
      %s104 = scalar_select %p101, %s102, %s103
      %p107 = pneg %p101
      %p108 = scmp.eq.s32.totalorder %s10, 1
      %p109 = por %p107, %p108
      %p110 = scmp.ne.s32.totalorder %s102, %s105
      %p111 = scmp.eq.s32.totalorder %s10, 0
      %p112 = por %p110, %p111
      %p113 = scmp.ne.s32.totalorder %s102, %s105
      %p114 = scmp.eq.s32.totalorder %s15, 1
      %p115 = por %p113, %p114
      %p116 = scmp.ne.s32.totalorder %s105, %s106
      %p117 = scmp.eq.s32.totalorder %s15, 0
      %p118 = por %p116, %p117
      %p119 = scmp.ne.s32.totalorder %s105, %s106
      %p120 = scmp.eq.s32.totalorder %s16, 1
      %p121 = por %p119, %p120
      %p123 = scmp.ne.s32.totalorder %s106, %s122
      %p124 = scmp.eq.s32.totalorder %s16, 0
      %p125 = por %p123, %p124
      %p126 = scmp.le.s32.totalorder 1, %s10
      %p127 = scmp.lt.s32.totalorder %s10, 3
      %p128 = pnand %p126, %p127
      %p129 = pneg %p128
      // Predicated region
      $region9: #{stnkd_forward.8} parent=5 // pred_check
        _
      $region10: #{stnkd_forward.8} parent=5 // pred_check_branch
        %131 = sbr.rel (%p128) target = $region12
      $region11: #{stnkd_forward.8} parent=5 // pred_region
        %s132 = ssub.s32 %s10, 1
        // Predicated region
        $region13: #{stnkd_forward.8} parent=11 // pred_check
          %p133 = pneg %p71
        $region14: #{stnkd_forward.8} parent=11 // pred_check_branch
          %135 = sbr.rel (%p133) target = $region16
        $region15: #{stnkd_forward.8} parent=11 // pred_region
          _
        $region16: #{stnkd_forward.8} parent=11 // pred_fallthru
          _
        // Predicated region
        $region17: #{stnkd_forward.8} parent=11 // pred_check
          %p136 = pneg %p92
        $region18: #{stnkd_forward.8} parent=11 // pred_check_branch
          %138 = sbr.rel (%p136) target = $region20
        $region19: #{stnkd_forward.8} parent=11 // pred_region
          %140 = vsyncadd [#allocation3], 0
          %s142 = sshll.u32 %s2, 4
          %s143 = int_to_ptr.hbm [resolvable:$true] %s142
          %s144 = sshll.u32 [#allocation2], 4
          %s145 = int_to_ptr.vmem [resolvable:$true] %s144
          %147 = dma.hbm_to_vmem [thread:$0]  %s143, 128, %s145, [#allocation3]
        $region20: #{stnkd_forward.8} parent=11 // pred_fallthru
          _
      $region12: #{stnkd_forward.8} parent=5 // pred_fallthru
        _
      %p148 = scmp.lt.s32.totalorder %s10, 2
      // Predicated region
      $region21: #{stnkd_forward.8} parent=5 // pred_check
        %p149 = pneg %p148
      $region22: #{stnkd_forward.8} parent=5 // pred_check_branch
        %151 = sbr.rel (%p149) target = $region24
      $region23: #{stnkd_forward.8} parent=5 // pred_region
        // Predicated region
        $region25: #{stnkd_forward.8} parent=23 // pred_check
          %p152 = pneg %p44
        $region26: #{stnkd_forward.8} parent=23 // pred_check_branch
          %154 = sbr.rel (%p152) target = $region28
        $region27: #{stnkd_forward.8} parent=23 // pred_region
          %s155 = smul.u32 8, %s18
          %p156 = scmp.lt.s32.totalorder %s17, 1
          %s157 = scalar_select %p156, %s17, 1
          %p158 = scmp.lt.s32.totalorder %s155, 7
          %s159 = scalar_select %p158, %s155, 7
          %s160 = smul.addr %s157, 8
          %s161 = sadd.s32 %s159, %s160
          %s162 = smul.addr %s161, 4
          %s163 = scalar_lea.vmem %s0, %s162
          %s164 = smul.u32 8, %s18
        $region28: #{stnkd_forward.8} parent=23 // pred_fallthru
          _
      $region24: #{stnkd_forward.8} parent=5 // pred_fallthru
        _
      %p165 = scmp.le.s32.totalorder 1, %s10
      %p166 = scmp.lt.s32.totalorder %s10, 3
      %p167 = pnand %p165, %p166
      %p168 = pneg %p167
      // Predicated region
      $region29: #{stnkd_forward.8} parent=5 // pred_check
        _
      $region30: #{stnkd_forward.8} parent=5 // pred_check_branch
        %170 = sbr.rel (%p167) target = $region32
      $region31: #{stnkd_forward.8} parent=5 // pred_region
        %s171 = ssub.s32 %s10, 1
        // Predicated region
        $region33: #{stnkd_forward.8} parent=31 // pred_check
          %p172 = pneg %p92
        $region34: #{stnkd_forward.8} parent=31 // pred_check_branch
          %174 = sbr.rel (%p172) target = $region36
        $region35: #{stnkd_forward.8} parent=31 // pred_region
          %176 = dma.done [#allocation3], 128
        $region36: #{stnkd_forward.8} parent=31 // pred_fallthru
          _
        %s177 = smul.u32 8, %s20
        %p178 = scmp.lt.s32.totalorder %s19, 1
        %s179 = scalar_select %p178, %s19, 1
        %p180 = scmp.lt.s32.totalorder %s177, 7
        %s181 = scalar_select %p180, %s177, 7
        %s182 = smul.addr %s179, 8
        %s183 = sadd.s32 %s181, %s182
        %s184 = smul.addr %s183, 4
        %s185 = scalar_lea.vmem %s0, %s184
        %p186 = pneg %p50
        %p187 = pneg %p47
        %p188 = pneg %p71
        %p189 = pneg %p68
        %p190 = pneg %p92
        %p191 = pneg %p89
        %p192 = pneg %p118
        %p193 = pneg %p115
        %p194 = scmp.lt.s32.totalorder %s19, 1
        %s195 = scalar_select %p194, %s19, 1
        %s196 = smul.addr %s195, 8
        %s197 = scalar_lea.vmem %s3, %s196
        %s198 = smul.u32 8, %s20
        %p199 = scmp.lt.s32.totalorder %s19, 1
        %s200 = scalar_select %p199, %s19, 1
        %p201 = scmp.lt.s32.totalorder %s198, 7
        %s202 = scalar_select %p201, %s198, 7
        %s203 = smul.addr %s200, 8
        %s204 = sadd.s32 %s202, %s203
        %s205 = smul.addr %s204, 4
        %s206 = scalar_lea.vmem %s0, %s205
        %s207 = smul.u32 8, %s20
        %p208 = scmp.lt.s32.totalorder %s19, 1
        %s209 = scalar_select %p208, %s19, 1
        %s210 = smul.addr %s209, 8
        %s211 = scalar_lea.vmem %s3, %s210
        %p212 = scmp.eq.s32.totalorder %s20, 0
        // Predicated region
        $region37: #{stnkd_forward.8} parent=31 // pred_check
          %p213 = pneg %p212
        $region38: #{stnkd_forward.8} parent=31 // pred_check_branch
          %215 = sbr.rel (%p213) target = $region40
        $region39: #{stnkd_forward.8} parent=31 // pred_region
          %216 = vst [vmem:[%s211] sm:$0xff] 0.0
        $region40: #{stnkd_forward.8} parent=31 // pred_fallthru
          _
        %v217 = vld [vmem:[%s206] sm:$0xf]
        %v218 = vld [vmem:[%s206 + $0x4] sm:$0xf]
        %v219 = vld [vmem:[%s206 + $0x8] sm:$0xf]
        %v220 = vld [vmem:[%s206 + $0xc] sm:$0xf]
        %v221 = vld [vmem:[%s206 + $0x10] sm:$0xf]
        %v222 = vld [vmem:[%s206 + $0x14] sm:$0xf]
        %v223 = vld [vmem:[%s206 + $0x18] sm:$0xf]
        %v224 = vld [vmem:[%s206 + $0x1c] sm:$0xf]
        %v225 = vld [vmem:[%s1] sm:$0xff]
        %v226 = vld [vmem:[%s1 + $0x8] sm:$0xff]
        %v227 = vld [vmem:[%s1 + $0x10] sm:$0xff]
        %v228 = vld [vmem:[%s1 + $0x18] sm:$0xff]
        %v229 = vld [vmem:[%s1 + $0x20] sm:$0xff]
        %v230 = vld [vmem:[%s1 + $0x28] sm:$0xff]
        %v231 = vld [vmem:[%s1 + $0x30] sm:$0xff]
        %v232 = vld [vmem:[%s1 + $0x38] sm:$0xff]
        %v233 = vld [vmem:[%s1 + $0x40] sm:$0xff]
        %v234 = vld [vmem:[%s1 + $0x48] sm:$0xff]
        %v235 = vld [vmem:[%s1 + $0x50] sm:$0xff]
        %v236 = vld [vmem:[%s1 + $0x58] sm:$0xff]
        %v237 = vld [vmem:[%s1 + $0x60] sm:$0xff]
        %v238 = vld [vmem:[%s1 + $0x68] sm:$0xff]
        %v239 = vld [vmem:[%s1 + $0x70] sm:$0xff]
        %v240 = vld [vmem:[%s1 + $0x78] sm:$0xff]
        %v241 = vld [vmem:[%s1 + $0x80] sm:$0xff]
        %v242 = vld [vmem:[%s1 + $0x88] sm:$0xff]
        %v243 = vld [vmem:[%s1 + $0x90] sm:$0xff]
        %v244 = vld [vmem:[%s1 + $0x98] sm:$0xff]
        %v245 = vld [vmem:[%s1 + $0xa0] sm:$0xff]
        %v246 = vld [vmem:[%s1 + $0xa8] sm:$0xff]
        %v247 = vld [vmem:[%s1 + $0xb0] sm:$0xff]
        %v248 = vld [vmem:[%s1 + $0xb8] sm:$0xff]
        %v249 = vld [vmem:[%s1 + $0xc0] sm:$0xff]
        %v250 = vld [vmem:[%s1 + $0xc8] sm:$0xff]
        %v251 = vld [vmem:[%s1 + $0xd0] sm:$0xff]
        %v252 = vld [vmem:[%s1 + $0xd8] sm:$0xff]
        %v253 = vld [vmem:[%s1 + $0xe0] sm:$0xff]
        %v254 = vld [vmem:[%s1 + $0xe8] sm:$0xff]
        %v255 = vld [vmem:[%s1 + $0xf0] sm:$0xff]
        %v256 = vld [vmem:[%s1 + $0xf8] sm:$0xff]
        %v257 = vld [vmem:[%s1 + $0x100] sm:$0xff]
        %v258 = vld [vmem:[%s1 + $0x108] sm:$0xff]
        %v259 = vld [vmem:[%s1 + $0x110] sm:$0xff]
        %v260 = vld [vmem:[%s1 + $0x118] sm:$0xff]
        %v261 = vld [vmem:[%s1 + $0x120] sm:$0xff]
        %v262 = vld [vmem:[%s1 + $0x128] sm:$0xff]
        %v263 = vld [vmem:[%s1 + $0x130] sm:$0xff]
        %v264 = vld [vmem:[%s1 + $0x138] sm:$0xff]
        %v265 = vld [vmem:[%s1 + $0x140] sm:$0xff]
        %v266 = vld [vmem:[%s1 + $0x148] sm:$0xff]
        %v267 = vld [vmem:[%s1 + $0x150] sm:$0xff]
        %v268 = vld [vmem:[%s1 + $0x158] sm:$0xff]
        %v269 = vld [vmem:[%s1 + $0x160] sm:$0xff]
        %v270 = vld [vmem:[%s1 + $0x168] sm:$0xff]
        %v271 = vld [vmem:[%s1 + $0x170] sm:$0xff]
        %v272 = vld [vmem:[%s1 + $0x178] sm:$0xff]
        %v273 = vld [vmem:[%s1 + $0x180] sm:$0xff]
        %v274 = vld [vmem:[%s1 + $0x188] sm:$0xff]
        %v275 = vld [vmem:[%s1 + $0x190] sm:$0xff]
        %v276 = vld [vmem:[%s1 + $0x198] sm:$0xff]
        %v277 = vld [vmem:[%s1 + $0x1a0] sm:$0xff]
        %v278 = vld [vmem:[%s1 + $0x1a8] sm:$0xff]
        %v279 = vld [vmem:[%s1 + $0x1b0] sm:$0xff]
        %v280 = vld [vmem:[%s1 + $0x1b8] sm:$0xff]
        %v281 = vld [vmem:[%s1 + $0x1c0] sm:$0xff]
        %v282 = vld [vmem:[%s1 + $0x1c8] sm:$0xff]
        %v283 = vld [vmem:[%s1 + $0x1d0] sm:$0xff]
        %v284 = vld [vmem:[%s1 + $0x1d8] sm:$0xff]
        %v285 = vld [vmem:[%s1 + $0x1e0] sm:$0xff]
        %v286 = vld [vmem:[%s1 + $0x1e8] sm:$0xff]
        %v287 = vld [vmem:[%s1 + $0x1f0] sm:$0xff]
        %v288 = vld [vmem:[%s1 + $0x1f8] sm:$0xff]
        %v289 = vld [vmem:[#allocation2] sm:$0xff]
        %v291 = vperm.slane %v289, 0
        %v292 = vperm.slane %v289, 1
        %v293 = vperm.slane %v289, 2
        %v294 = vperm.slane %v289, 3
        %v295 = vperm.slane %v289, 4
        %v296 = vperm.slane %v289, 5
        %v297 = vperm.slane %v289, 6
        %v298 = vperm.slane %v289, 7
        %v315 = vunpack.c.l.b16 %v217
        %v316 = vunpack.c.l.b16 %v218
        %v317 = vunpack.c.l.b16 %v219
        %v318 = vunpack.c.l.b16 %v220
        %v319 = vunpack.c.l.b16 %v221
        %v320 = vunpack.c.l.b16 %v222
        %v321 = vunpack.c.l.b16 %v223
        %v322 = vunpack.c.l.b16 %v224
        %v323 = vpack.c.b16 %v316, %v315
        %v324 = vpack.c.b16 %v318, %v317
        %v325 = vpack.c.b16 %v320, %v319
        %v326 = vpack.c.b16 %v322, %v321
        %v395 = vunpack.c.l.b16 %v225
        %v396 = vunpack.c.h.b16 %v225
        %v397 = vunpack.c.l.b16 %v226
        %v398 = vunpack.c.h.b16 %v226
        %v399 = vunpack.c.l.b16 %v227
        %v400 = vunpack.c.h.b16 %v227
        %v401 = vunpack.c.l.b16 %v228
        %v402 = vunpack.c.h.b16 %v228
        %v403 = vunpack.c.l.b16 %v229
        %v404 = vunpack.c.h.b16 %v229
        %v405 = vunpack.c.l.b16 %v230
        %v406 = vunpack.c.h.b16 %v230
        %v407 = vunpack.c.l.b16 %v231
        %v408 = vunpack.c.h.b16 %v231
        %v409 = vunpack.c.l.b16 %v232
        %v410 = vunpack.c.h.b16 %v232
        %v411 = vunpack.c.l.b16 %v233
        %v412 = vunpack.c.h.b16 %v233
        %v413 = vunpack.c.l.b16 %v234
        %v414 = vunpack.c.h.b16 %v234
        %v415 = vunpack.c.l.b16 %v235
        %v416 = vunpack.c.h.b16 %v235
        %v417 = vunpack.c.l.b16 %v236
        %v418 = vunpack.c.h.b16 %v236
        %v419 = vunpack.c.l.b16 %v237
        %v420 = vunpack.c.h.b16 %v237
        %v421 = vunpack.c.l.b16 %v238
        %v422 = vunpack.c.h.b16 %v238
        %v423 = vunpack.c.l.b16 %v239
        %v424 = vunpack.c.h.b16 %v239
        %v425 = vunpack.c.l.b16 %v240
        %v426 = vunpack.c.h.b16 %v240
        %v427 = vunpack.c.l.b16 %v241
        %v428 = vunpack.c.h.b16 %v241
        %v429 = vunpack.c.l.b16 %v242
        %v430 = vunpack.c.h.b16 %v242
        %v431 = vunpack.c.l.b16 %v243
        %v432 = vunpack.c.h.b16 %v243
        %v433 = vunpack.c.l.b16 %v244
        %v434 = vunpack.c.h.b16 %v244
        %v435 = vunpack.c.l.b16 %v245
        %v436 = vunpack.c.h.b16 %v245
        %v437 = vunpack.c.l.b16 %v246
        %v438 = vunpack.c.h.b16 %v246
        %v439 = vunpack.c.l.b16 %v247
        %v440 = vunpack.c.h.b16 %v247
        %v441 = vunpack.c.l.b16 %v248
        %v442 = vunpack.c.h.b16 %v248
        %v443 = vunpack.c.l.b16 %v249
        %v444 = vunpack.c.h.b16 %v249
        %v445 = vunpack.c.l.b16 %v250
        %v446 = vunpack.c.h.b16 %v250
        %v447 = vunpack.c.l.b16 %v251
        %v448 = vunpack.c.h.b16 %v251
        %v449 = vunpack.c.l.b16 %v252
        %v450 = vunpack.c.h.b16 %v252
        %v451 = vunpack.c.l.b16 %v253
        %v452 = vunpack.c.h.b16 %v253
        %v453 = vunpack.c.l.b16 %v254
        %v454 = vunpack.c.h.b16 %v254
        %v455 = vunpack.c.l.b16 %v255
        %v456 = vunpack.c.h.b16 %v255
        %v457 = vunpack.c.l.b16 %v256
        %v458 = vunpack.c.h.b16 %v256
        %v459 = vunpack.c.l.b16 %v257
        %v460 = vunpack.c.h.b16 %v257
        %v461 = vunpack.c.l.b16 %v258
        %v462 = vunpack.c.h.b16 %v258
        %v463 = vunpack.c.l.b16 %v259
        %v464 = vunpack.c.h.b16 %v259
        %v465 = vunpack.c.l.b16 %v260
        %v466 = vunpack.c.h.b16 %v260
        %v467 = vunpack.c.l.b16 %v261
        %v468 = vunpack.c.h.b16 %v261
        %v469 = vunpack.c.l.b16 %v262
        %v470 = vunpack.c.h.b16 %v262
        %v471 = vunpack.c.l.b16 %v263
        %v472 = vunpack.c.h.b16 %v263
        %v473 = vunpack.c.l.b16 %v264
        %v474 = vunpack.c.h.b16 %v264
        %v475 = vunpack.c.l.b16 %v265
        %v476 = vunpack.c.h.b16 %v265
        %v477 = vunpack.c.l.b16 %v266
        %v478 = vunpack.c.h.b16 %v266
        %v479 = vunpack.c.l.b16 %v267
        %v480 = vunpack.c.h.b16 %v267
        %v481 = vunpack.c.l.b16 %v268
        %v482 = vunpack.c.h.b16 %v268
        %v483 = vunpack.c.l.b16 %v269
        %v484 = vunpack.c.h.b16 %v269
        %v485 = vunpack.c.l.b16 %v270
        %v486 = vunpack.c.h.b16 %v270
        %v487 = vunpack.c.l.b16 %v271
        %v488 = vunpack.c.h.b16 %v271
        %v489 = vunpack.c.l.b16 %v272
        %v490 = vunpack.c.h.b16 %v272
        %v491 = vunpack.c.l.b16 %v273
        %v492 = vunpack.c.h.b16 %v273
        %v493 = vunpack.c.l.b16 %v274
        %v494 = vunpack.c.h.b16 %v274
        %v495 = vunpack.c.l.b16 %v275
        %v496 = vunpack.c.h.b16 %v275
        %v497 = vunpack.c.l.b16 %v276
        %v498 = vunpack.c.h.b16 %v276
        %v499 = vunpack.c.l.b16 %v277
        %v500 = vunpack.c.h.b16 %v277
        %v501 = vunpack.c.l.b16 %v278
        %v502 = vunpack.c.h.b16 %v278
        %v503 = vunpack.c.l.b16 %v279
        %v504 = vunpack.c.h.b16 %v279
        %v505 = vunpack.c.l.b16 %v280
        %v506 = vunpack.c.h.b16 %v280
        %v507 = vunpack.c.l.b16 %v281
        %v508 = vunpack.c.h.b16 %v281
        %v509 = vunpack.c.l.b16 %v282
        %v510 = vunpack.c.h.b16 %v282
        %v511 = vunpack.c.l.b16 %v283
        %v512 = vunpack.c.h.b16 %v283
        %v513 = vunpack.c.l.b16 %v284
        %v514 = vunpack.c.h.b16 %v284
        %v515 = vunpack.c.l.b16 %v285
        %v516 = vunpack.c.h.b16 %v285
        %v517 = vunpack.c.l.b16 %v286
        %v518 = vunpack.c.h.b16 %v286
        %v519 = vunpack.c.l.b16 %v287
        %v520 = vunpack.c.h.b16 %v287
        %v521 = vunpack.c.l.b16 %v288
        %v522 = vunpack.c.h.b16 %v288
        %v523 = vpack.c.b16 %v403, %v395
        %v524 = vpack.c.b16 %v404, %v396
        %v525 = vpack.c.b16 %v405, %v397
        %v526 = vpack.c.b16 %v406, %v398
        %v527 = vpack.c.b16 %v407, %v399
        %v528 = vpack.c.b16 %v408, %v400
        %v529 = vpack.c.b16 %v409, %v401
        %v530 = vpack.c.b16 %v410, %v402
        %v531 = vpack.c.b16 %v419, %v411
        %v532 = vpack.c.b16 %v420, %v412
        %v533 = vpack.c.b16 %v421, %v413
        %v534 = vpack.c.b16 %v422, %v414
        %v535 = vpack.c.b16 %v423, %v415
        %v536 = vpack.c.b16 %v424, %v416
        %v537 = vpack.c.b16 %v425, %v417
        %v538 = vpack.c.b16 %v426, %v418
        %v539 = vpack.c.b16 %v435, %v427
        %v540 = vpack.c.b16 %v436, %v428
        %v541 = vpack.c.b16 %v437, %v429
        %v542 = vpack.c.b16 %v438, %v430
        %v543 = vpack.c.b16 %v439, %v431
        %v544 = vpack.c.b16 %v440, %v432
        %v545 = vpack.c.b16 %v441, %v433
        %v546 = vpack.c.b16 %v442, %v434
        %v547 = vpack.c.b16 %v451, %v443
        %v548 = vpack.c.b16 %v452, %v444
        %v549 = vpack.c.b16 %v453, %v445
        %v550 = vpack.c.b16 %v454, %v446
        %v551 = vpack.c.b16 %v455, %v447
        %v552 = vpack.c.b16 %v456, %v448
        %v553 = vpack.c.b16 %v457, %v449
        %v554 = vpack.c.b16 %v458, %v450
        %v555 = vpack.c.b16 %v467, %v459
        %v556 = vpack.c.b16 %v468, %v460
        %v557 = vpack.c.b16 %v469, %v461
        %v558 = vpack.c.b16 %v470, %v462
        %v559 = vpack.c.b16 %v471, %v463
        %v560 = vpack.c.b16 %v472, %v464
        %v561 = vpack.c.b16 %v473, %v465
        %v562 = vpack.c.b16 %v474, %v466
        %v563 = vpack.c.b16 %v483, %v475
        %v564 = vpack.c.b16 %v484, %v476
        %v565 = vpack.c.b16 %v485, %v477
        %v566 = vpack.c.b16 %v486, %v478
        %v567 = vpack.c.b16 %v487, %v479
        %v568 = vpack.c.b16 %v488, %v480
        %v569 = vpack.c.b16 %v489, %v481
        %v570 = vpack.c.b16 %v490, %v482
        %v571 = vpack.c.b16 %v499, %v491
        %v572 = vpack.c.b16 %v500, %v492
        %v573 = vpack.c.b16 %v501, %v493
        %v574 = vpack.c.b16 %v502, %v494
        %v575 = vpack.c.b16 %v503, %v495
        %v576 = vpack.c.b16 %v504, %v496
        %v577 = vpack.c.b16 %v505, %v497
        %v578 = vpack.c.b16 %v506, %v498
        %v579 = vpack.c.b16 %v515, %v507
        %v580 = vpack.c.b16 %v516, %v508
        %v581 = vpack.c.b16 %v517, %v509
        %v582 = vpack.c.b16 %v518, %v510
        %v583 = vpack.c.b16 %v519, %v511
        %v584 = vpack.c.b16 %v520, %v512
        %v585 = vpack.c.b16 %v521, %v513
        %v586 = vpack.c.b16 %v522, %v514
        %651 = vmatpush.bf16.msra.mxu0 %v579
        %652 = vmatpush.bf16.msra.mxu0 %v571
        %653 = vmatpush.bf16.msra.mxu0 %v563
        %654 = vmatpush.bf16.msra.mxu0 %v555
        %655 = vmatpush.bf16.msra.mxu0 %v547
        %656 = vmatpush.bf16.msra.mxu0 %v539
        %657 = vmatpush.bf16.msra.mxu0 %v531
        %658 = vmatpush.bf16.msra.mxu0 %v523
        %659 = vmatmul.bf16.gmra.mxu0 %v323
        %v660 = vpop.f32.mrf.mxu0
        %v661 = vadd.f32 %v291, %v660
        %v662 = vpop.f32.mrf.mxu0
        %v663 = vadd.f32 %v291, %v662
        %664 = vmatmul.bf16.gmra.mxu0 %v324
        %v665 = vpop.f32.mrf.mxu0
        %v666 = vadd.f32 %v291, %v665
        %v667 = vpop.f32.mrf.mxu0
        %v668 = vadd.f32 %v291, %v667
        %669 = vmatmul.bf16.gmra.mxu0 %v325
        %v670 = vpop.f32.mrf.mxu0
        %v671 = vadd.f32 %v291, %v670
        %v672 = vpop.f32.mrf.mxu0
        %v673 = vadd.f32 %v291, %v672
        %674 = vmatmul.bf16.gmra.mxu0 %v326
        %v675 = vpop.f32.mrf.mxu0
        %v676 = vadd.f32 %v291, %v675
        %v677 = vpop.f32.mrf.mxu0
        %v678 = vadd.f32 %v291, %v677
        %679 = vdwg.mxu0
        %680 = vmatpush.bf16.msra.mxu0 %v580
        %681 = vmatpush.bf16.msra.mxu0 %v572
        %682 = vmatpush.bf16.msra.mxu0 %v564
        %683 = vmatpush.bf16.msra.mxu0 %v556
        %684 = vmatpush.bf16.msra.mxu0 %v548
        %685 = vmatpush.bf16.msra.mxu0 %v540
        %686 = vmatpush.bf16.msra.mxu0 %v532
        %687 = vmatpush.bf16.msra.mxu0 %v524
        %688 = vmatmul.bf16.gmra.mxu0 %v323
        %v689 = vpop.f32.mrf.mxu0
        %v690 = vadd.f32 %v292, %v689
        %v691 = vpop.f32.mrf.mxu0
        %v692 = vadd.f32 %v292, %v691
        %693 = vmatmul.bf16.gmra.mxu0 %v324
        %v694 = vpop.f32.mrf.mxu0
        %v695 = vadd.f32 %v292, %v694
        %v696 = vpop.f32.mrf.mxu0
        %v697 = vadd.f32 %v292, %v696
        %698 = vmatmul.bf16.gmra.mxu0 %v325
        %v699 = vpop.f32.mrf.mxu0
        %v700 = vadd.f32 %v292, %v699
        %v701 = vpop.f32.mrf.mxu0
        %v702 = vadd.f32 %v292, %v701
        %703 = vmatmul.bf16.gmra.mxu0 %v326
        %v704 = vpop.f32.mrf.mxu0
        %v705 = vadd.f32 %v292, %v704
        %v706 = vpop.f32.mrf.mxu0
        %v707 = vadd.f32 %v292, %v706
        %708 = vdwg.mxu0
        %709 = vmatpush.bf16.msra.mxu0 %v581
        %710 = vmatpush.bf16.msra.mxu0 %v573
        %711 = vmatpush.bf16.msra.mxu0 %v565
        %712 = vmatpush.bf16.msra.mxu0 %v557
        %713 = vmatpush.bf16.msra.mxu0 %v549
        %714 = vmatpush.bf16.msra.mxu0 %v541
        %715 = vmatpush.bf16.msra.mxu0 %v533
        %716 = vmatpush.bf16.msra.mxu0 %v525
        %717 = vmatmul.bf16.gmra.mxu0 %v323
        %v718 = vpop.f32.mrf.mxu0
        %v719 = vadd.f32 %v293, %v718
        %v720 = vpop.f32.mrf.mxu0
        %v721 = vadd.f32 %v293, %v720
        %722 = vmatmul.bf16.gmra.mxu0 %v324
        %v723 = vpop.f32.mrf.mxu0
        %v724 = vadd.f32 %v293, %v723
        %v725 = vpop.f32.mrf.mxu0
        %v726 = vadd.f32 %v293, %v725
        %727 = vmatmul.bf16.gmra.mxu0 %v325
        %v728 = vpop.f32.mrf.mxu0
        %v729 = vadd.f32 %v293, %v728
        %v730 = vpop.f32.mrf.mxu0
        %v731 = vadd.f32 %v293, %v730
        %732 = vmatmul.bf16.gmra.mxu0 %v326
        %v733 = vpop.f32.mrf.mxu0
        %v734 = vadd.f32 %v293, %v733
        %v735 = vpop.f32.mrf.mxu0
        %v736 = vadd.f32 %v293, %v735
        %737 = vdwg.mxu0
        %738 = vmatpush.bf16.msra.mxu0 %v582
        %739 = vmatpush.bf16.msra.mxu0 %v574
        %740 = vmatpush.bf16.msra.mxu0 %v566
        %741 = vmatpush.bf16.msra.mxu0 %v558
        %742 = vmatpush.bf16.msra.mxu0 %v550
        %743 = vmatpush.bf16.msra.mxu0 %v542
        %744 = vmatpush.bf16.msra.mxu0 %v534
        %745 = vmatpush.bf16.msra.mxu0 %v526
        %746 = vmatmul.bf16.gmra.mxu0 %v323
        %v747 = vpop.f32.mrf.mxu0
        %v748 = vadd.f32 %v294, %v747
        %v749 = vpop.f32.mrf.mxu0
        %v750 = vadd.f32 %v294, %v749
        %751 = vmatmul.bf16.gmra.mxu0 %v324
        %v752 = vpop.f32.mrf.mxu0
        %v753 = vadd.f32 %v294, %v752
        %v754 = vpop.f32.mrf.mxu0
        %v755 = vadd.f32 %v294, %v754
        %756 = vmatmul.bf16.gmra.mxu0 %v325
        %v757 = vpop.f32.mrf.mxu0
        %v758 = vadd.f32 %v294, %v757
        %v759 = vpop.f32.mrf.mxu0
        %v760 = vadd.f32 %v294, %v759
        %761 = vmatmul.bf16.gmra.mxu0 %v326
        %v762 = vpop.f32.mrf.mxu0
        %v763 = vadd.f32 %v294, %v762
        %v764 = vpop.f32.mrf.mxu0
        %v765 = vadd.f32 %v294, %v764
        %766 = vdwg.mxu0
        %767 = vmatpush.bf16.msra.mxu0 %v583
        %768 = vmatpush.bf16.msra.mxu0 %v575
        %769 = vmatpush.bf16.msra.mxu0 %v567
        %770 = vmatpush.bf16.msra.mxu0 %v559
        %771 = vmatpush.bf16.msra.mxu0 %v551
        %772 = vmatpush.bf16.msra.mxu0 %v543
        %773 = vmatpush.bf16.msra.mxu0 %v535
        %774 = vmatpush.bf16.msra.mxu0 %v527
        %775 = vmatmul.bf16.gmra.mxu0 %v323
        %v776 = vpop.f32.mrf.mxu0
        %v777 = vadd.f32 %v295, %v776
        %v778 = vpop.f32.mrf.mxu0
        %v779 = vadd.f32 %v295, %v778
        %780 = vmatmul.bf16.gmra.mxu0 %v324
        %v781 = vpop.f32.mrf.mxu0
        %v782 = vadd.f32 %v295, %v781
        %v783 = vpop.f32.mrf.mxu0
        %v784 = vadd.f32 %v295, %v783
        %785 = vmatmul.bf16.gmra.mxu0 %v325
        %v786 = vpop.f32.mrf.mxu0
        %v787 = vadd.f32 %v295, %v786
        %v788 = vpop.f32.mrf.mxu0
        %v789 = vadd.f32 %v295, %v788
        %790 = vmatmul.bf16.gmra.mxu0 %v326
        %v791 = vpop.f32.mrf.mxu0
        %v792 = vadd.f32 %v295, %v791
        %v793 = vpop.f32.mrf.mxu0
        %v794 = vadd.f32 %v295, %v793
        %795 = vdwg.mxu0
        %796 = vmatpush.bf16.msra.mxu0 %v584
        %797 = vmatpush.bf16.msra.mxu0 %v576
        %798 = vmatpush.bf16.msra.mxu0 %v568
        %799 = vmatpush.bf16.msra.mxu0 %v560
        %800 = vmatpush.bf16.msra.mxu0 %v552
        %801 = vmatpush.bf16.msra.mxu0 %v544
        %802 = vmatpush.bf16.msra.mxu0 %v536
        %803 = vmatpush.bf16.msra.mxu0 %v528
        %804 = vmatmul.bf16.gmra.mxu0 %v323
        %v805 = vpop.f32.mrf.mxu0
        %v806 = vadd.f32 %v296, %v805
        %v807 = vpop.f32.mrf.mxu0
        %v808 = vadd.f32 %v296, %v807
        %809 = vmatmul.bf16.gmra.mxu0 %v324
        %v810 = vpop.f32.mrf.mxu0
        %v811 = vadd.f32 %v296, %v810
        %v812 = vpop.f32.mrf.mxu0
        %v813 = vadd.f32 %v296, %v812
        %814 = vmatmul.bf16.gmra.mxu0 %v325
        %v815 = vpop.f32.mrf.mxu0
        %v816 = vadd.f32 %v296, %v815
        %v817 = vpop.f32.mrf.mxu0
        %v818 = vadd.f32 %v296, %v817
        %819 = vmatmul.bf16.gmra.mxu0 %v326
        %v820 = vpop.f32.mrf.mxu0
        %v821 = vadd.f32 %v296, %v820
        %v822 = vpop.f32.mrf.mxu0
        %v823 = vadd.f32 %v296, %v822
        %824 = vdwg.mxu0
        %825 = vmatpush.bf16.msra.mxu0 %v585
        %826 = vmatpush.bf16.msra.mxu0 %v577
        %827 = vmatpush.bf16.msra.mxu0 %v569
        %828 = vmatpush.bf16.msra.mxu0 %v561
        %829 = vmatpush.bf16.msra.mxu0 %v553
        %830 = vmatpush.bf16.msra.mxu0 %v545
        %831 = vmatpush.bf16.msra.mxu0 %v537
        %832 = vmatpush.bf16.msra.mxu0 %v529
        %833 = vmatmul.bf16.gmra.mxu0 %v323
        %v834 = vpop.f32.mrf.mxu0
        %v835 = vadd.f32 %v297, %v834
        %v836 = vpop.f32.mrf.mxu0
        %v837 = vadd.f32 %v297, %v836
        %838 = vmatmul.bf16.gmra.mxu0 %v324
        %v839 = vpop.f32.mrf.mxu0
        %v840 = vadd.f32 %v297, %v839
        %v841 = vpop.f32.mrf.mxu0
        %v842 = vadd.f32 %v297, %v841
        %843 = vmatmul.bf16.gmra.mxu0 %v325
        %v844 = vpop.f32.mrf.mxu0
        %v845 = vadd.f32 %v297, %v844
        %v846 = vpop.f32.mrf.mxu0
        %v847 = vadd.f32 %v297, %v846
        %848 = vmatmul.bf16.gmra.mxu0 %v326
        %v849 = vpop.f32.mrf.mxu0
        %v850 = vadd.f32 %v297, %v849
        %v851 = vpop.f32.mrf.mxu0
        %v852 = vadd.f32 %v297, %v851
        %853 = vdwg.mxu0
        %854 = vmatpush.bf16.msra.mxu0 %v586
        %855 = vmatpush.bf16.msra.mxu0 %v578
        %856 = vmatpush.bf16.msra.mxu0 %v570
        %857 = vmatpush.bf16.msra.mxu0 %v562
        %858 = vmatpush.bf16.msra.mxu0 %v554
        %859 = vmatpush.bf16.msra.mxu0 %v546
        %860 = vmatpush.bf16.msra.mxu0 %v538
        %861 = vmatpush.bf16.msra.mxu0 %v530
        %862 = vmatmul.bf16.gmra.mxu0 %v323
        %v863 = vpop.f32.mrf.mxu0
        %v864 = vadd.f32 %v298, %v863
        %v865 = vpop.f32.mrf.mxu0
        %v866 = vadd.f32 %v298, %v865
        %867 = vmatmul.bf16.gmra.mxu0 %v324
        %v868 = vpop.f32.mrf.mxu0
        %v869 = vadd.f32 %v298, %v868
        %v870 = vpop.f32.mrf.mxu0
        %v871 = vadd.f32 %v298, %v870
        %872 = vmatmul.bf16.gmra.mxu0 %v325
        %v873 = vpop.f32.mrf.mxu0
        %v874 = vadd.f32 %v298, %v873
        %v875 = vpop.f32.mrf.mxu0
        %v876 = vadd.f32 %v298, %v875
        %877 = vmatmul.bf16.gmra.mxu0 %v326
        %v878 = vpop.f32.mrf.mxu0
        %v879 = vadd.f32 %v298, %v878
        %v880 = vpop.f32.mrf.mxu0
        %v881 = vadd.f32 %v298, %v880
        %882 = vdwg.mxu0
        %v883 = vmax.f32 %v661, 0.0
        %v884 = vmax.f32 %v690, 0.0
        %v885 = vmax.f32 %v719, 0.0
        %v886 = vmax.f32 %v748, 0.0
        %v887 = vmax.f32 %v777, 0.0
        %v888 = vmax.f32 %v806, 0.0
        %v889 = vmax.f32 %v835, 0.0
        %v890 = vmax.f32 %v864, 0.0
        %v891 = vmax.f32 %v663, 0.0
        %v892 = vmax.f32 %v692, 0.0
        %v893 = vmax.f32 %v721, 0.0
        %v894 = vmax.f32 %v750, 0.0
        %v895 = vmax.f32 %v779, 0.0
        %v896 = vmax.f32 %v808, 0.0
        %v897 = vmax.f32 %v837, 0.0
        %v898 = vmax.f32 %v866, 0.0
        %v899 = vmax.f32 %v666, 0.0
        %v900 = vmax.f32 %v695, 0.0
        %v901 = vmax.f32 %v724, 0.0
        %v902 = vmax.f32 %v753, 0.0
        %v903 = vmax.f32 %v782, 0.0
        %v904 = vmax.f32 %v811, 0.0
        %v905 = vmax.f32 %v840, 0.0
        %v906 = vmax.f32 %v869, 0.0
        %v907 = vmax.f32 %v668, 0.0
        %v908 = vmax.f32 %v697, 0.0
        %v909 = vmax.f32 %v726, 0.0
        %v910 = vmax.f32 %v755, 0.0
        %v911 = vmax.f32 %v784, 0.0
        %v912 = vmax.f32 %v813, 0.0
        %v913 = vmax.f32 %v842, 0.0
        %v914 = vmax.f32 %v871, 0.0
        %v915 = vmax.f32 %v671, 0.0
        %v916 = vmax.f32 %v700, 0.0
        %v917 = vmax.f32 %v729, 0.0
        %v918 = vmax.f32 %v758, 0.0
        %v919 = vmax.f32 %v787, 0.0
        %v920 = vmax.f32 %v816, 0.0
        %v921 = vmax.f32 %v845, 0.0
        %v922 = vmax.f32 %v874, 0.0
        %v923 = vmax.f32 %v673, 0.0
        %v924 = vmax.f32 %v702, 0.0
        %v925 = vmax.f32 %v731, 0.0
        %v926 = vmax.f32 %v760, 0.0
        %v927 = vmax.f32 %v789, 0.0
        %v928 = vmax.f32 %v818, 0.0
        %v929 = vmax.f32 %v847, 0.0
        %v930 = vmax.f32 %v876, 0.0
        %v931 = vmax.f32 %v676, 0.0
        %v932 = vmax.f32 %v705, 0.0
        %v933 = vmax.f32 %v734, 0.0
        %v934 = vmax.f32 %v763, 0.0
        %v935 = vmax.f32 %v792, 0.0
        %v936 = vmax.f32 %v821, 0.0
        %v937 = vmax.f32 %v850, 0.0
        %v938 = vmax.f32 %v879, 0.0
        %v939 = vmax.f32 %v678, 0.0
        %v940 = vmax.f32 %v707, 0.0
        %v941 = vmax.f32 %v736, 0.0
        %v942 = vmax.f32 %v765, 0.0
        %v943 = vmax.f32 %v794, 0.0
        %v944 = vmax.f32 %v823, 0.0
        %v945 = vmax.f32 %v852, 0.0
        %v946 = vmax.f32 %v881, 0.0
        %v947 = vmax.f32 %v883, %v891
        %v948 = vmax.f32 %v947, %v899
        %v949 = vmax.f32 %v948, %v907
        %v950 = vmax.f32 %v949, %v915
        %v951 = vmax.f32 %v950, %v923
        %v952 = vmax.f32 %v951, %v931
        %v953 = vmax.f32 %v952, %v939
        %v954 = vrot.slane %v953, 4
        %v955 = vmax.f32 %v953, %v954
        %v956 = vrot.slane %v955, 2
        %v957 = vmax.f32 %v955, %v956
        %v958 = vrot.slane %v957, 1
        %v959 = vmax.f32 %v957, %v958
        %v960 = vmax.f32 %v884, %v892
        %v961 = vmax.f32 %v960, %v900
        %v962 = vmax.f32 %v961, %v908
        %v963 = vmax.f32 %v962, %v916
        %v964 = vmax.f32 %v963, %v924
        %v965 = vmax.f32 %v964, %v932
        %v966 = vmax.f32 %v965, %v940
        %v967 = vrot.slane %v966, 4
        %v968 = vmax.f32 %v966, %v967
        %v969 = vrot.slane %v968, 2
        %v970 = vmax.f32 %v968, %v969
        %v971 = vrot.slane %v970, 1
        %v972 = vmax.f32 %v970, %v971
        %v973 = vmax.f32 %v885, %v893
        %v974 = vmax.f32 %v973, %v901
        %v975 = vmax.f32 %v974, %v909
        %v976 = vmax.f32 %v975, %v917
        %v977 = vmax.f32 %v976, %v925
        %v978 = vmax.f32 %v977, %v933
        %v979 = vmax.f32 %v978, %v941
        %v980 = vrot.slane %v979, 4
        %v981 = vmax.f32 %v979, %v980
        %v982 = vrot.slane %v981, 2
        %v983 = vmax.f32 %v981, %v982
        %v984 = vrot.slane %v983, 1
        %v985 = vmax.f32 %v983, %v984
        %v986 = vmax.f32 %v886, %v894
        %v987 = vmax.f32 %v986, %v902
        %v988 = vmax.f32 %v987, %v910
        %v989 = vmax.f32 %v988, %v918
        %v990 = vmax.f32 %v989, %v926
        %v991 = vmax.f32 %v990, %v934
        %v992 = vmax.f32 %v991, %v942
        %v993 = vrot.slane %v992, 4
        %v994 = vmax.f32 %v992, %v993
        %v995 = vrot.slane %v994, 2
        %v996 = vmax.f32 %v994, %v995
        %v997 = vrot.slane %v996, 1
        %v998 = vmax.f32 %v996, %v997
        %v999 = vmax.f32 %v887, %v895
        %v1000 = vmax.f32 %v999, %v903
        %v1001 = vmax.f32 %v1000, %v911
        %v1002 = vmax.f32 %v1001, %v919
        %v1003 = vmax.f32 %v1002, %v927
        %v1004 = vmax.f32 %v1003, %v935
        %v1005 = vmax.f32 %v1004, %v943
        %v1006 = vrot.slane %v1005, 4
        %v1007 = vmax.f32 %v1005, %v1006
        %v1008 = vrot.slane %v1007, 2
        %v1009 = vmax.f32 %v1007, %v1008
        %v1010 = vrot.slane %v1009, 1
        %v1011 = vmax.f32 %v1009, %v1010
        %v1012 = vmax.f32 %v888, %v896
        %v1013 = vmax.f32 %v1012, %v904
        %v1014 = vmax.f32 %v1013, %v912
        %v1015 = vmax.f32 %v1014, %v920
        %v1016 = vmax.f32 %v1015, %v928
        %v1017 = vmax.f32 %v1016, %v936
        %v1018 = vmax.f32 %v1017, %v944
        %v1019 = vrot.slane %v1018, 4
        %v1020 = vmax.f32 %v1018, %v1019
        %v1021 = vrot.slane %v1020, 2
        %v1022 = vmax.f32 %v1020, %v1021
        %v1023 = vrot.slane %v1022, 1
        %v1024 = vmax.f32 %v1022, %v1023
        %v1025 = vmax.f32 %v889, %v897
        %v1026 = vmax.f32 %v1025, %v905
        %v1027 = vmax.f32 %v1026, %v913
        %v1028 = vmax.f32 %v1027, %v921
        %v1029 = vmax.f32 %v1028, %v929
        %v1030 = vmax.f32 %v1029, %v937
        %v1031 = vmax.f32 %v1030, %v945
        %v1032 = vrot.slane %v1031, 4
        %v1033 = vmax.f32 %v1031, %v1032
        %v1034 = vrot.slane %v1033, 2
        %v1035 = vmax.f32 %v1033, %v1034
        %v1036 = vrot.slane %v1035, 1
        %v1037 = vmax.f32 %v1035, %v1036
        %v1038 = vmax.f32 %v890, %v898
        %v1039 = vmax.f32 %v1038, %v906
        %v1040 = vmax.f32 %v1039, %v914
        %v1041 = vmax.f32 %v1040, %v922
        %v1042 = vmax.f32 %v1041, %v930
        %v1043 = vmax.f32 %v1042, %v938
        %v1044 = vmax.f32 %v1043, %v946
        %v1045 = vrot.slane %v1044, 4
        %v1046 = vmax.f32 %v1044, %v1045
        %v1047 = vrot.slane %v1046, 2
        %v1048 = vmax.f32 %v1046, %v1047
        %v1049 = vrot.slane %v1048, 1
        %v1050 = vmax.f32 %v1048, %v1049
        %v1051 = vld [vmem:[%s211] sm:$0xff]
        %v1060 = vrot.slane %v972, 7
        %v1061 = vrot.slane %v985, 6
        %v1062 = vrot.slane %v998, 5
        %v1063 = vrot.slane %v1011, 4
        %v1064 = vrot.slane %v1024, 3
        %v1065 = vrot.slane %v1037, 2
        %v1066 = vrot.slane %v1050, 1
        %vm1067 = vcmask 1040384
        %v1068 = vsel %vm1067, %v959, %v1060
        %vm1069 = vcmask 1042434
        %v1070 = vsel %vm1069, %v1061, %v1062
        %vm1071 = vcmask 1041408
        %v1072 = vsel %vm1071, %v1068, %v1070
        %vm1073 = vcmask 1044484
        %v1074 = vsel %vm1073, %v1063, %v1064
        %vm1075 = vcmask 1046534
        %v1076 = vsel %vm1075, %v1065, %v1066
        %vm1077 = vcmask 1045508
        %v1078 = vsel %vm1077, %v1074, %v1076
        %vm1079 = vcmask 1043456
        %v1080 = vsel %vm1079, %v1072, %v1078
        %v1082 = vmax.f32 %v1051, %v1080
        %1083 = vst [vmem:[%s211] sm:$0xff] %v1082
        %p1084 = scmp.lt.s32.totalorder %s19, 1
        %s1085 = scalar_select %p1084, %s19, 1
        %s1086 = smul.addr %s1085, 8
        %s1087 = scalar_lea.vmem %s3, %s1086
        // Predicated region
        $region41: #{stnkd_forward.8} parent=31 // pred_check
          %p1088 = pneg %p115
        $region42: #{stnkd_forward.8} parent=31 // pred_check_branch
          %1090 = sbr.rel (%p1088) target = $region44
        $region43: #{stnkd_forward.8} parent=31 // pred_region
          _
        $region44: #{stnkd_forward.8} parent=31 // pred_fallthru
          _
      $region32: #{stnkd_forward.8} parent=5 // pred_fallthru
        _
      %p1091 = scmp.le.s32.totalorder 2, %s10
      // Predicated region
      $region45: #{stnkd_forward.8} parent=5 // pred_check
        %p1092 = pneg %p1091
      $region46: #{stnkd_forward.8} parent=5 // pred_check_branch
        %1094 = sbr.rel (%p1092) target = $region48
      $region47: #{stnkd_forward.8} parent=5 // pred_region
        %s1095 = ssub.s32 %s10, 2
        // Predicated region
        $region49: #{stnkd_forward.8} parent=47 // pred_check
          %p1096 = pneg %p121
        $region50: #{stnkd_forward.8} parent=47 // pred_check_branch
          %1098 = sbr.rel (%p1096) target = $region52
        $region51: #{stnkd_forward.8} parent=47 // pred_region
          %p1099 = scmp.lt.s32.totalorder %s21, 1
          %s1100 = scalar_select %p1099, %s21, 1
          %s1101 = smul.addr %s1100, 8
          %s1102 = scalar_lea.vmem %s3, %s1101
        $region52: #{stnkd_forward.8} parent=47 // pred_fallthru
          _
      $region48: #{stnkd_forward.8} parent=5 // pred_fallthru
        _
    $region6: #{stnkd_forward.8} parent=1 // loop_footer
      %s14 = sadd.s32 1, %s10
    $region7: #{stnkd_forward.8} parent=1 // loop_footer_branch
      %9 = sbr.rel target = $region3
    $region8: #{stnkd_forward.8} parent=1 // loop_exit
      _
    %1103 = vsyncpa [#allocation3], 1
    %s1104 = scalar_lea.sflag [#allocation3], 1
    %1105 = vsyncpa %s1104, 1

// kernel: stnkd_forward.10
$region0: #{stnkd_forward.10}
  #allocation0 [shape = 'u32[]', space=smem, size = 0x4, offset = 0x4, fixed_abs, tag = 'smem constant byte address 0x4 - core index']
  #allocation1 [shape = 'u32[72,128]{1,0:T(1,128)}', space=vmem, size = 0x9000, scoped, tag = 'internal scratch']
  %s0 = inlined_call_operand.vmem [shape: bf16[8,512], index: 0, kind: input, shape index: {}]
  %s1 = inlined_call_operand.vmem [shape: bf16[512,256], index: 1, kind: input, shape index: {}]
  %s2 = inlined_call_operand.vmem [shape: f32[1,256], index: 2, kind: input, shape index: {}]
  %s3 = inlined_call_operand.vmem [shape: f32[8,256], index: 3, kind: output, shape index: {}]
  %s4 = sld [smem:[#allocation0]]
  $region22: #{stnkd_forward.10} parent=0
    _
  %s6 = ssub.s32 1, %s4
  %s7 = scalar_select 0, %s6, %s4
  // Predicated region
  $region2: #{stnkd_forward.10} parent=0 // pred_check
    _
  $region3: #{stnkd_forward.10} parent=0 // pred_check_branch
    %9 = sbr.rel (0) target = $region5
  $region4: #{stnkd_forward.10} parent=0 // pred_region
    _
  $region5: #{stnkd_forward.10} parent=0 // pred_fallthru
    _
  // Predicated region
  $region6: #{stnkd_forward.10} parent=0 // pred_check
    _
  $region7: #{stnkd_forward.10} parent=0 // pred_check_branch
    %11 = sbr.rel (0) target = $region9
  $region8: #{stnkd_forward.10} parent=0 // pred_region
    _
  $region9: #{stnkd_forward.10} parent=0 // pred_fallthru
    _
  // Predicated region
  $region10: #{stnkd_forward.10} parent=0 // pred_check
    _
  $region11: #{stnkd_forward.10} parent=0 // pred_check_branch
    %13 = sbr.rel (0) target = $region13
  $region12: #{stnkd_forward.10} parent=0 // pred_region
    _
  $region13: #{stnkd_forward.10} parent=0 // pred_fallthru
    _
  %v14 = vld [vmem:[%s0] sm:$0xff]
  %v15 = vld [vmem:[%s0 + $0x8] sm:$0xff]
  %v16 = vld [vmem:[%s1] sm:$0xff]
  %v17 = vld [vmem:[%s1 + $0x8] sm:$0xff]
  %v18 = vld [vmem:[%s1 + $0x10] sm:$0xff]
  %v19 = vld [vmem:[%s1 + $0x18] sm:$0xff]
  %v20 = vld [vmem:[%s1 + $0x20] sm:$0xff]
  %v21 = vld [vmem:[%s1 + $0x28] sm:$0xff]
  %v22 = vld [vmem:[%s1 + $0x30] sm:$0xff]
  %v23 = vld [vmem:[%s1 + $0x38] sm:$0xff]
  %v24 = vld [vmem:[%s1 + $0x40] sm:$0xff]
  %v25 = vld [vmem:[%s1 + $0x48] sm:$0xff]
  %v26 = vld [vmem:[%s1 + $0x50] sm:$0xff]
  %v27 = vld [vmem:[%s1 + $0x58] sm:$0xff]
  %v28 = vld [vmem:[%s1 + $0x60] sm:$0xff]
  %v29 = vld [vmem:[%s1 + $0x68] sm:$0xff]
  %v30 = vld [vmem:[%s1 + $0x70] sm:$0xff]
  %v31 = vld [vmem:[%s1 + $0x78] sm:$0xff]
  %v32 = vld [vmem:[%s1 + $0x80] sm:$0xff]
  %v33 = vld [vmem:[%s1 + $0x88] sm:$0xff]
  %v34 = vld [vmem:[%s1 + $0x90] sm:$0xff]
  %v35 = vld [vmem:[%s1 + $0x98] sm:$0xff]
  %v36 = vld [vmem:[%s1 + $0xa0] sm:$0xff]
  %v37 = vld [vmem:[%s1 + $0xa8] sm:$0xff]
  %v38 = vld [vmem:[%s1 + $0xb0] sm:$0xff]
  %v39 = vld [vmem:[%s1 + $0xb8] sm:$0xff]
  %v40 = vld [vmem:[%s1 + $0xc0] sm:$0xff]
  %v41 = vld [vmem:[%s1 + $0xc8] sm:$0xff]
  %v42 = vld [vmem:[%s1 + $0xd0] sm:$0xff]
  %v43 = vld [vmem:[%s1 + $0xd8] sm:$0xff]
  %v44 = vld [vmem:[%s1 + $0xe0] sm:$0xff]
  %v45 = vld [vmem:[%s1 + $0xe8] sm:$0xff]
  %v46 = vld [vmem:[%s1 + $0xf0] sm:$0xff]
  %v47 = vld [vmem:[%s1 + $0xf8] sm:$0xff]
  %v48 = vld [vmem:[%s1 + $0x100] sm:$0xff]
  %v49 = vld [vmem:[%s1 + $0x108] sm:$0xff]
  %v50 = vld [vmem:[%s1 + $0x110] sm:$0xff]
  %v51 = vld [vmem:[%s1 + $0x118] sm:$0xff]
  %v52 = vld [vmem:[%s1 + $0x120] sm:$0xff]
  %v53 = vld [vmem:[%s1 + $0x128] sm:$0xff]
  %v54 = vld [vmem:[%s1 + $0x130] sm:$0xff]
  %v55 = vld [vmem:[%s1 + $0x138] sm:$0xff]
  %v56 = vld [vmem:[%s1 + $0x140] sm:$0xff]
  %v57 = vld [vmem:[%s1 + $0x148] sm:$0xff]
  %v58 = vld [vmem:[%s1 + $0x150] sm:$0xff]
  %v59 = vld [vmem:[%s1 + $0x158] sm:$0xff]
  %v60 = vld [vmem:[%s1 + $0x160] sm:$0xff]
  %v61 = vld [vmem:[%s1 + $0x168] sm:$0xff]
  %v62 = vld [vmem:[%s1 + $0x170] sm:$0xff]
  %v63 = vld [vmem:[%s1 + $0x178] sm:$0xff]
  %v64 = vld [vmem:[%s1 + $0x180] sm:$0xff]
  %v65 = vld [vmem:[%s1 + $0x188] sm:$0xff]
  %v66 = vld [vmem:[%s1 + $0x190] sm:$0xff]
  %v67 = vld [vmem:[%s1 + $0x198] sm:$0xff]
  %v68 = vld [vmem:[%s1 + $0x1a0] sm:$0xff]
  %v69 = vld [vmem:[%s1 + $0x1a8] sm:$0xff]
  %v70 = vld [vmem:[%s1 + $0x1b0] sm:$0xff]
  %v71 = vld [vmem:[%s1 + $0x1b8] sm:$0xff]
  %v72 = vld [vmem:[%s1 + $0x1c0] sm:$0xff]
  %v73 = vld [vmem:[%s1 + $0x1c8] sm:$0xff]
  %v74 = vld [vmem:[%s1 + $0x1d0] sm:$0xff]
  %v75 = vld [vmem:[%s1 + $0x1d8] sm:$0xff]
  %v76 = vld [vmem:[%s1 + $0x1e0] sm:$0xff]
  %v77 = vld [vmem:[%s1 + $0x1e8] sm:$0xff]
  %v78 = vld [vmem:[%s1 + $0x1f0] sm:$0xff]
  %v79 = vld [vmem:[%s1 + $0x1f8] sm:$0xff]
  %v80 = vld [vmem:[%s2] sm:$0x3]
  %v82 = vperm.slane %v80, 0
  %v83 = vperm.slane %v80, 1
  %v88 = vunpack.c.l.b16 %v14
  %v89 = vunpack.c.h.b16 %v14
  %v90 = vunpack.c.l.b16 %v15
  %v91 = vunpack.c.h.b16 %v15
  %v92 = vpack.c.b16 %v88, %v88
  %v93 = vpack.c.b16 %v89, %v89
  %v94 = vpack.c.b16 %v90, %v90
  %v95 = vpack.c.b16 %v91, %v91
  %v164 = vunpack.c.l.b16 %v16
  %v165 = vunpack.c.h.b16 %v16
  %v166 = vunpack.c.l.b16 %v17
  %v167 = vunpack.c.h.b16 %v17
  %v168 = vunpack.c.l.b16 %v18
  %v169 = vunpack.c.h.b16 %v18
  %v170 = vunpack.c.l.b16 %v19
  %v171 = vunpack.c.h.b16 %v19
  %v172 = vunpack.c.l.b16 %v20
  %v173 = vunpack.c.h.b16 %v20
  %v174 = vunpack.c.l.b16 %v21
  %v175 = vunpack.c.h.b16 %v21
  %v176 = vunpack.c.l.b16 %v22
  %v177 = vunpack.c.h.b16 %v22
  %v178 = vunpack.c.l.b16 %v23
  %v179 = vunpack.c.h.b16 %v23
  %v180 = vunpack.c.l.b16 %v24
  %v181 = vunpack.c.h.b16 %v24
  %v182 = vunpack.c.l.b16 %v25
  %v183 = vunpack.c.h.b16 %v25
  %v184 = vunpack.c.l.b16 %v26
  %v185 = vunpack.c.h.b16 %v26
  %v186 = vunpack.c.l.b16 %v27
  %v187 = vunpack.c.h.b16 %v27
  %v188 = vunpack.c.l.b16 %v28
  %v189 = vunpack.c.h.b16 %v28
  %v190 = vunpack.c.l.b16 %v29
  %v191 = vunpack.c.h.b16 %v29
  %v192 = vunpack.c.l.b16 %v30
  %v193 = vunpack.c.h.b16 %v30
  %v194 = vunpack.c.l.b16 %v31
  %v195 = vunpack.c.h.b16 %v31
  %v196 = vunpack.c.l.b16 %v32
  %v197 = vunpack.c.h.b16 %v32
  %v198 = vunpack.c.l.b16 %v33
  %v199 = vunpack.c.h.b16 %v33
  %v200 = vunpack.c.l.b16 %v34
  %v201 = vunpack.c.h.b16 %v34
  %v202 = vunpack.c.l.b16 %v35
  %v203 = vunpack.c.h.b16 %v35
  %v204 = vunpack.c.l.b16 %v36
  %v205 = vunpack.c.h.b16 %v36
  %v206 = vunpack.c.l.b16 %v37
  %v207 = vunpack.c.h.b16 %v37
  %v208 = vunpack.c.l.b16 %v38
  %v209 = vunpack.c.h.b16 %v38
  %v210 = vunpack.c.l.b16 %v39
  %v211 = vunpack.c.h.b16 %v39
  %v212 = vunpack.c.l.b16 %v40
  %v213 = vunpack.c.h.b16 %v40
  %v214 = vunpack.c.l.b16 %v41
  %v215 = vunpack.c.h.b16 %v41
  %v216 = vunpack.c.l.b16 %v42
  %v217 = vunpack.c.h.b16 %v42
  %v218 = vunpack.c.l.b16 %v43
  %v219 = vunpack.c.h.b16 %v43
  %v220 = vunpack.c.l.b16 %v44
  %v221 = vunpack.c.h.b16 %v44
  %v222 = vunpack.c.l.b16 %v45
  %v223 = vunpack.c.h.b16 %v45
  %v224 = vunpack.c.l.b16 %v46
  %v225 = vunpack.c.h.b16 %v46
  %v226 = vunpack.c.l.b16 %v47
  %v227 = vunpack.c.h.b16 %v47
  %v228 = vunpack.c.l.b16 %v48
  %v229 = vunpack.c.h.b16 %v48
  %v230 = vunpack.c.l.b16 %v49
  %v231 = vunpack.c.h.b16 %v49
  %v232 = vunpack.c.l.b16 %v50
  %v233 = vunpack.c.h.b16 %v50
  %v234 = vunpack.c.l.b16 %v51
  %v235 = vunpack.c.h.b16 %v51
  %v236 = vunpack.c.l.b16 %v52
  %v237 = vunpack.c.h.b16 %v52
  %v238 = vunpack.c.l.b16 %v53
  %v239 = vunpack.c.h.b16 %v53
  %v240 = vunpack.c.l.b16 %v54
  %v241 = vunpack.c.h.b16 %v54
  %v242 = vunpack.c.l.b16 %v55
  %v243 = vunpack.c.h.b16 %v55
  %v244 = vunpack.c.l.b16 %v56
  %v245 = vunpack.c.h.b16 %v56
  %v246 = vunpack.c.l.b16 %v57
  %v247 = vunpack.c.h.b16 %v57
  %v248 = vunpack.c.l.b16 %v58
  %v249 = vunpack.c.h.b16 %v58
  %v250 = vunpack.c.l.b16 %v59
  %v251 = vunpack.c.h.b16 %v59
  %v252 = vunpack.c.l.b16 %v60
  %v253 = vunpack.c.h.b16 %v60
  %v254 = vunpack.c.l.b16 %v61
  %v255 = vunpack.c.h.b16 %v61
  %v256 = vunpack.c.l.b16 %v62
  %v257 = vunpack.c.h.b16 %v62
  %v258 = vunpack.c.l.b16 %v63
  %v259 = vunpack.c.h.b16 %v63
  %v260 = vunpack.c.l.b16 %v64
  %v261 = vunpack.c.h.b16 %v64
  %v262 = vunpack.c.l.b16 %v65
  %v263 = vunpack.c.h.b16 %v65
  %v264 = vunpack.c.l.b16 %v66
  %v265 = vunpack.c.h.b16 %v66
  %v266 = vunpack.c.l.b16 %v67
  %v267 = vunpack.c.h.b16 %v67
  %v268 = vunpack.c.l.b16 %v68
  %v269 = vunpack.c.h.b16 %v68
  %v270 = vunpack.c.l.b16 %v69
  %v271 = vunpack.c.h.b16 %v69
  %v272 = vunpack.c.l.b16 %v70
  %v273 = vunpack.c.h.b16 %v70
  %v274 = vunpack.c.l.b16 %v71
  %v275 = vunpack.c.h.b16 %v71
  %v276 = vunpack.c.l.b16 %v72
  %v277 = vunpack.c.h.b16 %v72
  %v278 = vunpack.c.l.b16 %v73
  %v279 = vunpack.c.h.b16 %v73
  %v280 = vunpack.c.l.b16 %v74
  %v281 = vunpack.c.h.b16 %v74
  %v282 = vunpack.c.l.b16 %v75
  %v283 = vunpack.c.h.b16 %v75
  %v284 = vunpack.c.l.b16 %v76
  %v285 = vunpack.c.h.b16 %v76
  %v286 = vunpack.c.l.b16 %v77
  %v287 = vunpack.c.h.b16 %v77
  %v288 = vunpack.c.l.b16 %v78
  %v289 = vunpack.c.h.b16 %v78
  %v290 = vunpack.c.l.b16 %v79
  %v291 = vunpack.c.h.b16 %v79
  %v292 = vpack.c.b16 %v166, %v164
  %v293 = vpack.c.b16 %v167, %v165
  %v294 = vpack.c.b16 %v170, %v168
  %v295 = vpack.c.b16 %v171, %v169
  %v296 = vpack.c.b16 %v174, %v172
  %v297 = vpack.c.b16 %v175, %v173
  %v298 = vpack.c.b16 %v178, %v176
  %v299 = vpack.c.b16 %v179, %v177
  %v300 = vpack.c.b16 %v182, %v180
  %v301 = vpack.c.b16 %v183, %v181
  %v302 = vpack.c.b16 %v186, %v184
  %v303 = vpack.c.b16 %v187, %v185
  %v304 = vpack.c.b16 %v190, %v188
  %v305 = vpack.c.b16 %v191, %v189
  %v306 = vpack.c.b16 %v194, %v192
  %v307 = vpack.c.b16 %v195, %v193
  %v308 = vpack.c.b16 %v198, %v196
  %v309 = vpack.c.b16 %v199, %v197
  %v310 = vpack.c.b16 %v202, %v200
  %v311 = vpack.c.b16 %v203, %v201
  %v312 = vpack.c.b16 %v206, %v204
  %v313 = vpack.c.b16 %v207, %v205
  %v314 = vpack.c.b16 %v210, %v208
  %v315 = vpack.c.b16 %v211, %v209
  %v316 = vpack.c.b16 %v214, %v212
  %v317 = vpack.c.b16 %v215, %v213
  %v318 = vpack.c.b16 %v218, %v216
  %v319 = vpack.c.b16 %v219, %v217
  %v320 = vpack.c.b16 %v222, %v220
  %v321 = vpack.c.b16 %v223, %v221
  %v322 = vpack.c.b16 %v226, %v224
  %v323 = vpack.c.b16 %v227, %v225
  %v324 = vpack.c.b16 %v230, %v228
  %v325 = vpack.c.b16 %v231, %v229
  %v326 = vpack.c.b16 %v234, %v232
  %v327 = vpack.c.b16 %v235, %v233
  %v328 = vpack.c.b16 %v238, %v236
  %v329 = vpack.c.b16 %v239, %v237
  %v330 = vpack.c.b16 %v242, %v240
  %v331 = vpack.c.b16 %v243, %v241
  %v332 = vpack.c.b16 %v246, %v244
  %v333 = vpack.c.b16 %v247, %v245
  %v334 = vpack.c.b16 %v250, %v248
  %v335 = vpack.c.b16 %v251, %v249
  %v336 = vpack.c.b16 %v254, %v252
  %v337 = vpack.c.b16 %v255, %v253
  %v338 = vpack.c.b16 %v258, %v256
  %v339 = vpack.c.b16 %v259, %v257
  %v340 = vpack.c.b16 %v262, %v260
  %v341 = vpack.c.b16 %v263, %v261
  %v342 = vpack.c.b16 %v266, %v264
  %v343 = vpack.c.b16 %v267, %v265
  %v344 = vpack.c.b16 %v270, %v268
  %v345 = vpack.c.b16 %v271, %v269
  %v346 = vpack.c.b16 %v274, %v272
  %v347 = vpack.c.b16 %v275, %v273
  %v348 = vpack.c.b16 %v278, %v276
  %v349 = vpack.c.b16 %v279, %v277
  %v350 = vpack.c.b16 %v282, %v280
  %v351 = vpack.c.b16 %v283, %v281
  %v352 = vpack.c.b16 %v286, %v284
  %v353 = vpack.c.b16 %v287, %v285
  %v354 = vpack.c.b16 %v290, %v288
  %v355 = vpack.c.b16 %v291, %v289
  %420 = vmatpush.bf16.msra.mxu0 %v306
  %421 = vmatpush.bf16.msra.mxu0 %v304
  %422 = vmatpush.bf16.msra.mxu0 %v302
  %423 = vmatpush.bf16.msra.mxu0 %v300
  %424 = vmatpush.bf16.msra.mxu0 %v298
  %425 = vmatpush.bf16.msra.mxu0 %v296
  %426 = vmatpush.bf16.msra.mxu0 %v294
  %427 = vmatpush.bf16.msra.mxu0 %v292
  %428 = vmatmul.bf16.gmra.mxu0 %v92
  %v429 = vpop.f32.mrf.mxu0
  %v430 = vadd.f32 %v82, %v429
  %v431 = vpop.f32.mrf.mxu0
  %432 = vdwg.mxu0
  %433 = vmatpush.bf16.msra.mxu0 %v322
  %434 = vmatpush.bf16.msra.mxu0 %v320
  %435 = vmatpush.bf16.msra.mxu0 %v318
  %436 = vmatpush.bf16.msra.mxu0 %v316
  %437 = vmatpush.bf16.msra.mxu0 %v314
  %438 = vmatpush.bf16.msra.mxu0 %v312
  %439 = vmatpush.bf16.msra.mxu0 %v310
  %440 = vmatpush.bf16.msra.mxu0 %v308
  %441 = vmatmul.bf16.gmra.mxu0 %v93
  %v442 = vpop.f32.mrf.mxu0
  %v443 = vadd.f32 %v430, %v442
  %v444 = vpop.f32.mrf.mxu0
  %445 = vdwg.mxu0
  %446 = vmatpush.bf16.msra.mxu0 %v338
  %447 = vmatpush.bf16.msra.mxu0 %v336
  %448 = vmatpush.bf16.msra.mxu0 %v334
  %449 = vmatpush.bf16.msra.mxu0 %v332
  %450 = vmatpush.bf16.msra.mxu0 %v330
  %451 = vmatpush.bf16.msra.mxu0 %v328
  %452 = vmatpush.bf16.msra.mxu0 %v326
  %453 = vmatpush.bf16.msra.mxu0 %v324
  %454 = vmatmul.bf16.gmra.mxu0 %v94
  %v455 = vpop.f32.mrf.mxu0
  %v456 = vadd.f32 %v443, %v455
  %v457 = vpop.f32.mrf.mxu0
  %458 = vdwg.mxu0
  %459 = vmatpush.bf16.msra.mxu0 %v354
  %460 = vmatpush.bf16.msra.mxu0 %v352
  %461 = vmatpush.bf16.msra.mxu0 %v350
  %462 = vmatpush.bf16.msra.mxu0 %v348
  %463 = vmatpush.bf16.msra.mxu0 %v346
  %464 = vmatpush.bf16.msra.mxu0 %v344
  %465 = vmatpush.bf16.msra.mxu0 %v342
  %466 = vmatpush.bf16.msra.mxu0 %v340
  %467 = vmatmul.bf16.gmra.mxu0 %v95
  %v468 = vpop.f32.mrf.mxu0
  %v469 = vadd.f32 %v456, %v468
  %v470 = vpop.f32.mrf.mxu0
  %471 = vdwg.mxu0
  %472 = vmatpush.bf16.msra.mxu0 %v307
  %473 = vmatpush.bf16.msra.mxu0 %v305
  %474 = vmatpush.bf16.msra.mxu0 %v303
  %475 = vmatpush.bf16.msra.mxu0 %v301
  %476 = vmatpush.bf16.msra.mxu0 %v299
  %477 = vmatpush.bf16.msra.mxu0 %v297
  %478 = vmatpush.bf16.msra.mxu0 %v295
  %479 = vmatpush.bf16.msra.mxu0 %v293
  %480 = vmatmul.bf16.gmra.mxu0 %v92
  %v481 = vpop.f32.mrf.mxu0
  %v482 = vadd.f32 %v83, %v481
  %v483 = vpop.f32.mrf.mxu0
  %484 = vdwg.mxu0
  %485 = vmatpush.bf16.msra.mxu0 %v323
  %486 = vmatpush.bf16.msra.mxu0 %v321
  %487 = vmatpush.bf16.msra.mxu0 %v319
  %488 = vmatpush.bf16.msra.mxu0 %v317
  %489 = vmatpush.bf16.msra.mxu0 %v315
  %490 = vmatpush.bf16.msra.mxu0 %v313
  %491 = vmatpush.bf16.msra.mxu0 %v311
  %492 = vmatpush.bf16.msra.mxu0 %v309
  %493 = vmatmul.bf16.gmra.mxu0 %v93
  %v494 = vpop.f32.mrf.mxu0
  %v495 = vadd.f32 %v482, %v494
  %v496 = vpop.f32.mrf.mxu0
  %497 = vdwg.mxu0
  %498 = vmatpush.bf16.msra.mxu0 %v339
  %499 = vmatpush.bf16.msra.mxu0 %v337
  %500 = vmatpush.bf16.msra.mxu0 %v335
  %501 = vmatpush.bf16.msra.mxu0 %v333
  %502 = vmatpush.bf16.msra.mxu0 %v331
  %503 = vmatpush.bf16.msra.mxu0 %v329
  %504 = vmatpush.bf16.msra.mxu0 %v327
  %505 = vmatpush.bf16.msra.mxu0 %v325
  %506 = vmatmul.bf16.gmra.mxu0 %v94
  %v507 = vpop.f32.mrf.mxu0
  %v508 = vadd.f32 %v495, %v507
  %v509 = vpop.f32.mrf.mxu0
  %510 = vdwg.mxu0
  %511 = vmatpush.bf16.msra.mxu0 %v355
  %512 = vmatpush.bf16.msra.mxu0 %v353
  %513 = vmatpush.bf16.msra.mxu0 %v351
  %514 = vmatpush.bf16.msra.mxu0 %v349
  %515 = vmatpush.bf16.msra.mxu0 %v347
  %516 = vmatpush.bf16.msra.mxu0 %v345
  %517 = vmatpush.bf16.msra.mxu0 %v343
  %518 = vmatpush.bf16.msra.mxu0 %v341
  %519 = vmatmul.bf16.gmra.mxu0 %v95
  %v520 = vpop.f32.mrf.mxu0
  %v521 = vadd.f32 %v508, %v520
  %v522 = vpop.f32.mrf.mxu0
  %523 = vdwg.mxu0
  %v524 = vmax.f32 %v469, 0.0
  %v525 = vmax.f32 %v521, 0.0
  %526 = vst [vmem:[%s3] sm:$0xff] %v524
  %527 = vst [vmem:[%s3 + $0x8] sm:$0xff] %v525
  // Predicated region
  $region14: #{stnkd_forward.10} parent=0 // pred_check
    _
  $region15: #{stnkd_forward.10} parent=0 // pred_check_branch
    %529 = sbr.rel (0) target = $region17
  $region16: #{stnkd_forward.10} parent=0 // pred_region
    _
  $region17: #{stnkd_forward.10} parent=0 // pred_fallthru
    _
  // Predicated region
  $region18: #{stnkd_forward.10} parent=0 // pred_check
    _
  $region19: #{stnkd_forward.10} parent=0 // pred_check_branch
    %531 = sbr.rel (0) target = $region21
  $region20: #{stnkd_forward.10} parent=0 // pred_region
    _
  $region21: #{stnkd_forward.10} parent=0 // pred_fallthru
    _

// kernel: stnkd_forward.11
$region0: #{stnkd_forward.11}
  #allocation0 [shape = 'u32[]', space=smem, size = 0x4, offset = 0x4, fixed_abs, tag = 'smem constant byte address 0x4 - core index']
  #allocation1 [shape = 'u32[72,128]{1,0:T(1,128)}', space=vmem, size = 0x9000, scoped, tag = 'internal scratch']
  %s0 = inlined_call_operand.vmem [shape: bf16[8,256], index: 0, kind: input, shape index: {}]
  %s1 = inlined_call_operand.vmem [shape: bf16[256,256], index: 1, kind: input, shape index: {}]
  %s2 = inlined_call_operand.vmem [shape: f32[1,256], index: 2, kind: input, shape index: {}]
  %s3 = inlined_call_operand.vmem [shape: f32[8,256], index: 3, kind: output, shape index: {}]
  %s4 = sld [smem:[#allocation0]]
  $region22: #{stnkd_forward.11} parent=0
    _
  %s6 = ssub.s32 1, %s4
  %s7 = scalar_select 0, %s6, %s4
  // Predicated region
  $region2: #{stnkd_forward.11} parent=0 // pred_check
    _
  $region3: #{stnkd_forward.11} parent=0 // pred_check_branch
    %9 = sbr.rel (0) target = $region5
  $region4: #{stnkd_forward.11} parent=0 // pred_region
    _
  $region5: #{stnkd_forward.11} parent=0 // pred_fallthru
    _
  // Predicated region
  $region6: #{stnkd_forward.11} parent=0 // pred_check
    _
  $region7: #{stnkd_forward.11} parent=0 // pred_check_branch
    %11 = sbr.rel (0) target = $region9
  $region8: #{stnkd_forward.11} parent=0 // pred_region
    _
  $region9: #{stnkd_forward.11} parent=0 // pred_fallthru
    _
  // Predicated region
  $region10: #{stnkd_forward.11} parent=0 // pred_check
    _
  $region11: #{stnkd_forward.11} parent=0 // pred_check_branch
    %13 = sbr.rel (0) target = $region13
  $region12: #{stnkd_forward.11} parent=0 // pred_region
    _
  $region13: #{stnkd_forward.11} parent=0 // pred_fallthru
    _
  %v14 = vld [vmem:[%s0] sm:$0xff]
  %v15 = vld [vmem:[%s1] sm:$0xff]
  %v16 = vld [vmem:[%s1 + $0x8] sm:$0xff]
  %v17 = vld [vmem:[%s1 + $0x10] sm:$0xff]
  %v18 = vld [vmem:[%s1 + $0x18] sm:$0xff]
  %v19 = vld [vmem:[%s1 + $0x20] sm:$0xff]
  %v20 = vld [vmem:[%s1 + $0x28] sm:$0xff]
  %v21 = vld [vmem:[%s1 + $0x30] sm:$0xff]
  %v22 = vld [vmem:[%s1 + $0x38] sm:$0xff]
  %v23 = vld [vmem:[%s1 + $0x40] sm:$0xff]
  %v24 = vld [vmem:[%s1 + $0x48] sm:$0xff]
  %v25 = vld [vmem:[%s1 + $0x50] sm:$0xff]
  %v26 = vld [vmem:[%s1 + $0x58] sm:$0xff]
  %v27 = vld [vmem:[%s1 + $0x60] sm:$0xff]
  %v28 = vld [vmem:[%s1 + $0x68] sm:$0xff]
  %v29 = vld [vmem:[%s1 + $0x70] sm:$0xff]
  %v30 = vld [vmem:[%s1 + $0x78] sm:$0xff]
  %v31 = vld [vmem:[%s1 + $0x80] sm:$0xff]
  %v32 = vld [vmem:[%s1 + $0x88] sm:$0xff]
  %v33 = vld [vmem:[%s1 + $0x90] sm:$0xff]
  %v34 = vld [vmem:[%s1 + $0x98] sm:$0xff]
  %v35 = vld [vmem:[%s1 + $0xa0] sm:$0xff]
  %v36 = vld [vmem:[%s1 + $0xa8] sm:$0xff]
  %v37 = vld [vmem:[%s1 + $0xb0] sm:$0xff]
  %v38 = vld [vmem:[%s1 + $0xb8] sm:$0xff]
  %v39 = vld [vmem:[%s1 + $0xc0] sm:$0xff]
  %v40 = vld [vmem:[%s1 + $0xc8] sm:$0xff]
  %v41 = vld [vmem:[%s1 + $0xd0] sm:$0xff]
  %v42 = vld [vmem:[%s1 + $0xd8] sm:$0xff]
  %v43 = vld [vmem:[%s1 + $0xe0] sm:$0xff]
  %v44 = vld [vmem:[%s1 + $0xe8] sm:$0xff]
  %v45 = vld [vmem:[%s1 + $0xf0] sm:$0xff]
  %v46 = vld [vmem:[%s1 + $0xf8] sm:$0xff]
  %v47 = vld [vmem:[%s2] sm:$0x3]
  %v49 = vperm.slane %v47, 0
  %v50 = vperm.slane %v47, 1
  %v54 = vunpack.c.l.b16 %v14
  %v55 = vunpack.c.h.b16 %v14
  %v56 = vpack.c.b16 %v54, %v54
  %v57 = vpack.c.b16 %v55, %v55
  %v92 = vunpack.c.l.b16 %v15
  %v93 = vunpack.c.h.b16 %v15
  %v94 = vunpack.c.l.b16 %v16
  %v95 = vunpack.c.h.b16 %v16
  %v96 = vunpack.c.l.b16 %v17
  %v97 = vunpack.c.h.b16 %v17
  %v98 = vunpack.c.l.b16 %v18
  %v99 = vunpack.c.h.b16 %v18
  %v100 = vunpack.c.l.b16 %v19
  %v101 = vunpack.c.h.b16 %v19
  %v102 = vunpack.c.l.b16 %v20
  %v103 = vunpack.c.h.b16 %v20
  %v104 = vunpack.c.l.b16 %v21
  %v105 = vunpack.c.h.b16 %v21
  %v106 = vunpack.c.l.b16 %v22
  %v107 = vunpack.c.h.b16 %v22
  %v108 = vunpack.c.l.b16 %v23
  %v109 = vunpack.c.h.b16 %v23
  %v110 = vunpack.c.l.b16 %v24
  %v111 = vunpack.c.h.b16 %v24
  %v112 = vunpack.c.l.b16 %v25
  %v113 = vunpack.c.h.b16 %v25
  %v114 = vunpack.c.l.b16 %v26
  %v115 = vunpack.c.h.b16 %v26
  %v116 = vunpack.c.l.b16 %v27
  %v117 = vunpack.c.h.b16 %v27
  %v118 = vunpack.c.l.b16 %v28
  %v119 = vunpack.c.h.b16 %v28
  %v120 = vunpack.c.l.b16 %v29
  %v121 = vunpack.c.h.b16 %v29
  %v122 = vunpack.c.l.b16 %v30
  %v123 = vunpack.c.h.b16 %v30
  %v124 = vunpack.c.l.b16 %v31
  %v125 = vunpack.c.h.b16 %v31
  %v126 = vunpack.c.l.b16 %v32
  %v127 = vunpack.c.h.b16 %v32
  %v128 = vunpack.c.l.b16 %v33
  %v129 = vunpack.c.h.b16 %v33
  %v130 = vunpack.c.l.b16 %v34
  %v131 = vunpack.c.h.b16 %v34
  %v132 = vunpack.c.l.b16 %v35
  %v133 = vunpack.c.h.b16 %v35
  %v134 = vunpack.c.l.b16 %v36
  %v135 = vunpack.c.h.b16 %v36
  %v136 = vunpack.c.l.b16 %v37
  %v137 = vunpack.c.h.b16 %v37
  %v138 = vunpack.c.l.b16 %v38
  %v139 = vunpack.c.h.b16 %v38
  %v140 = vunpack.c.l.b16 %v39
  %v141 = vunpack.c.h.b16 %v39
  %v142 = vunpack.c.l.b16 %v40
  %v143 = vunpack.c.h.b16 %v40
  %v144 = vunpack.c.l.b16 %v41
  %v145 = vunpack.c.h.b16 %v41
  %v146 = vunpack.c.l.b16 %v42
  %v147 = vunpack.c.h.b16 %v42
  %v148 = vunpack.c.l.b16 %v43
  %v149 = vunpack.c.h.b16 %v43
  %v150 = vunpack.c.l.b16 %v44
  %v151 = vunpack.c.h.b16 %v44
  %v152 = vunpack.c.l.b16 %v45
  %v153 = vunpack.c.h.b16 %v45
  %v154 = vunpack.c.l.b16 %v46
  %v155 = vunpack.c.h.b16 %v46
  %v156 = vpack.c.b16 %v94, %v92
  %v157 = vpack.c.b16 %v95, %v93
  %v158 = vpack.c.b16 %v98, %v96
  %v159 = vpack.c.b16 %v99, %v97
  %v160 = vpack.c.b16 %v102, %v100
  %v161 = vpack.c.b16 %v103, %v101
  %v162 = vpack.c.b16 %v106, %v104
  %v163 = vpack.c.b16 %v107, %v105
  %v164 = vpack.c.b16 %v110, %v108
  %v165 = vpack.c.b16 %v111, %v109
  %v166 = vpack.c.b16 %v114, %v112
  %v167 = vpack.c.b16 %v115, %v113
  %v168 = vpack.c.b16 %v118, %v116
  %v169 = vpack.c.b16 %v119, %v117
  %v170 = vpack.c.b16 %v122, %v120
  %v171 = vpack.c.b16 %v123, %v121
  %v172 = vpack.c.b16 %v126, %v124
  %v173 = vpack.c.b16 %v127, %v125
  %v174 = vpack.c.b16 %v130, %v128
  %v175 = vpack.c.b16 %v131, %v129
  %v176 = vpack.c.b16 %v134, %v132
  %v177 = vpack.c.b16 %v135, %v133
  %v178 = vpack.c.b16 %v138, %v136
  %v179 = vpack.c.b16 %v139, %v137
  %v180 = vpack.c.b16 %v142, %v140
  %v181 = vpack.c.b16 %v143, %v141
  %v182 = vpack.c.b16 %v146, %v144
  %v183 = vpack.c.b16 %v147, %v145
  %v184 = vpack.c.b16 %v150, %v148
  %v185 = vpack.c.b16 %v151, %v149
  %v186 = vpack.c.b16 %v154, %v152
  %v187 = vpack.c.b16 %v155, %v153
  %220 = vmatpush.bf16.msra.mxu0 %v170
  %221 = vmatpush.bf16.msra.mxu0 %v168
  %222 = vmatpush.bf16.msra.mxu0 %v166
  %223 = vmatpush.bf16.msra.mxu0 %v164
  %224 = vmatpush.bf16.msra.mxu0 %v162
  %225 = vmatpush.bf16.msra.mxu0 %v160
  %226 = vmatpush.bf16.msra.mxu0 %v158
  %227 = vmatpush.bf16.msra.mxu0 %v156
  %228 = vmatmul.bf16.gmra.mxu0 %v56
  %v229 = vpop.f32.mrf.mxu0
  %v230 = vadd.f32 %v49, %v229
  %v231 = vpop.f32.mrf.mxu0
  %232 = vdwg.mxu0
  %233 = vmatpush.bf16.msra.mxu0 %v186
  %234 = vmatpush.bf16.msra.mxu0 %v184
  %235 = vmatpush.bf16.msra.mxu0 %v182
  %236 = vmatpush.bf16.msra.mxu0 %v180
  %237 = vmatpush.bf16.msra.mxu0 %v178
  %238 = vmatpush.bf16.msra.mxu0 %v176
  %239 = vmatpush.bf16.msra.mxu0 %v174
  %240 = vmatpush.bf16.msra.mxu0 %v172
  %241 = vmatmul.bf16.gmra.mxu0 %v57
  %v242 = vpop.f32.mrf.mxu0
  %v243 = vadd.f32 %v230, %v242
  %v244 = vpop.f32.mrf.mxu0
  %245 = vdwg.mxu0
  %246 = vmatpush.bf16.msra.mxu0 %v171
  %247 = vmatpush.bf16.msra.mxu0 %v169
  %248 = vmatpush.bf16.msra.mxu0 %v167
  %249 = vmatpush.bf16.msra.mxu0 %v165
  %250 = vmatpush.bf16.msra.mxu0 %v163
  %251 = vmatpush.bf16.msra.mxu0 %v161
  %252 = vmatpush.bf16.msra.mxu0 %v159
  %253 = vmatpush.bf16.msra.mxu0 %v157
  %254 = vmatmul.bf16.gmra.mxu0 %v56
  %v255 = vpop.f32.mrf.mxu0
  %v256 = vadd.f32 %v50, %v255
  %v257 = vpop.f32.mrf.mxu0
  %258 = vdwg.mxu0
  %259 = vmatpush.bf16.msra.mxu0 %v187
  %260 = vmatpush.bf16.msra.mxu0 %v185
  %261 = vmatpush.bf16.msra.mxu0 %v183
  %262 = vmatpush.bf16.msra.mxu0 %v181
  %263 = vmatpush.bf16.msra.mxu0 %v179
  %264 = vmatpush.bf16.msra.mxu0 %v177
  %265 = vmatpush.bf16.msra.mxu0 %v175
  %266 = vmatpush.bf16.msra.mxu0 %v173
  %267 = vmatmul.bf16.gmra.mxu0 %v57
  %v268 = vpop.f32.mrf.mxu0
  %v269 = vadd.f32 %v256, %v268
  %v270 = vpop.f32.mrf.mxu0
  %271 = vdwg.mxu0
  %272 = vst [vmem:[%s3] sm:$0xff] %v243
  %273 = vst [vmem:[%s3 + $0x8] sm:$0xff] %v269
  // Predicated region
  $region14: #{stnkd_forward.11} parent=0 // pred_check
    _
  $region15: #{stnkd_forward.11} parent=0 // pred_check_branch
    %275 = sbr.rel (0) target = $region17
  $region16: #{stnkd_forward.11} parent=0 // pred_region
    _
  $region17: #{stnkd_forward.11} parent=0 // pred_fallthru
    _
  // Predicated region
  $region18: #{stnkd_forward.11} parent=0 // pred_check
    _
  $region19: #{stnkd_forward.11} parent=0 // pred_check_branch
    %277 = sbr.rel (0) target = $region21
  $region20: #{stnkd_forward.11} parent=0 // pred_region
    _
  $region21: #{stnkd_forward.11} parent=0 // pred_fallthru
    _

// kernel: stnkd_forward.9
$region0: #{stnkd_forward.9}
  #allocation0 [shape = 'u32[]', space=smem, size = 0x4, offset = 0x4, fixed_abs, tag = 'smem constant byte address 0x4 - core index']
  #allocation1 [shape = 'u32[72,128]{1,0:T(1,128)}', space=vmem, size = 0x9000, scoped, tag = 'internal scratch']
  %s0 = inlined_call_operand.vmem [shape: bf16[8,1024], index: 0, kind: input, shape index: {}]
  %s1 = inlined_call_operand.vmem [shape: bf16[1024,512], index: 1, kind: input, shape index: {}]
  %s2 = inlined_call_operand.vmem [shape: f32[1,512], index: 2, kind: input, shape index: {}]
  %s3 = inlined_call_operand.vmem [shape: f32[8,512], index: 3, kind: output, shape index: {}]
  %s4 = sld [smem:[#allocation0]]
  $region22: #{stnkd_forward.9} parent=0
    _
  %s6 = ssub.s32 1, %s4
  %s7 = scalar_select 0, %s6, %s4
  // Predicated region
  $region2: #{stnkd_forward.9} parent=0 // pred_check
    _
  $region3: #{stnkd_forward.9} parent=0 // pred_check_branch
    %9 = sbr.rel (0) target = $region5
  $region4: #{stnkd_forward.9} parent=0 // pred_region
    _
  $region5: #{stnkd_forward.9} parent=0 // pred_fallthru
    _
  // Predicated region
  $region6: #{stnkd_forward.9} parent=0 // pred_check
    _
  $region7: #{stnkd_forward.9} parent=0 // pred_check_branch
    %11 = sbr.rel (0) target = $region9
  $region8: #{stnkd_forward.9} parent=0 // pred_region
    _
  $region9: #{stnkd_forward.9} parent=0 // pred_fallthru
    _
  // Predicated region
  $region10: #{stnkd_forward.9} parent=0 // pred_check
    _
  $region11: #{stnkd_forward.9} parent=0 // pred_check_branch
    %13 = sbr.rel (0) target = $region13
  $region12: #{stnkd_forward.9} parent=0 // pred_region
    _
  $region13: #{stnkd_forward.9} parent=0 // pred_fallthru
    _
  %v14 = vld [vmem:[%s0] sm:$0xff]
  %v15 = vld [vmem:[%s0 + $0x8] sm:$0xff]
  %v16 = vld [vmem:[%s0 + $0x10] sm:$0xff]
  %v17 = vld [vmem:[%s0 + $0x18] sm:$0xff]
  %v18 = vld [vmem:[%s1] sm:$0xff]
  %v19 = vld [vmem:[%s1 + $0x8] sm:$0xff]
  %v20 = vld [vmem:[%s1 + $0x10] sm:$0xff]
  %v21 = vld [vmem:[%s1 + $0x18] sm:$0xff]
  %v22 = vld [vmem:[%s1 + $0x20] sm:$0xff]
  %v23 = vld [vmem:[%s1 + $0x28] sm:$0xff]
  %v24 = vld [vmem:[%s1 + $0x30] sm:$0xff]
  %v25 = vld [vmem:[%s1 + $0x38] sm:$0xff]
  %v26 = vld [vmem:[%s1 + $0x40] sm:$0xff]
  %v27 = vld [vmem:[%s1 + $0x48] sm:$0xff]
  %v28 = vld [vmem:[%s1 + $0x50] sm:$0xff]
  %v29 = vld [vmem:[%s1 + $0x58] sm:$0xff]
  %v30 = vld [vmem:[%s1 + $0x60] sm:$0xff]
  %v31 = vld [vmem:[%s1 + $0x68] sm:$0xff]
  %v32 = vld [vmem:[%s1 + $0x70] sm:$0xff]
  %v33 = vld [vmem:[%s1 + $0x78] sm:$0xff]
  %v34 = vld [vmem:[%s1 + $0x80] sm:$0xff]
  %v35 = vld [vmem:[%s1 + $0x88] sm:$0xff]
  %v36 = vld [vmem:[%s1 + $0x90] sm:$0xff]
  %v37 = vld [vmem:[%s1 + $0x98] sm:$0xff]
  %v38 = vld [vmem:[%s1 + $0xa0] sm:$0xff]
  %v39 = vld [vmem:[%s1 + $0xa8] sm:$0xff]
  %v40 = vld [vmem:[%s1 + $0xb0] sm:$0xff]
  %v41 = vld [vmem:[%s1 + $0xb8] sm:$0xff]
  %v42 = vld [vmem:[%s1 + $0xc0] sm:$0xff]
  %v43 = vld [vmem:[%s1 + $0xc8] sm:$0xff]
  %v44 = vld [vmem:[%s1 + $0xd0] sm:$0xff]
  %v45 = vld [vmem:[%s1 + $0xd8] sm:$0xff]
  %v46 = vld [vmem:[%s1 + $0xe0] sm:$0xff]
  %v47 = vld [vmem:[%s1 + $0xe8] sm:$0xff]
  %v48 = vld [vmem:[%s1 + $0xf0] sm:$0xff]
  %v49 = vld [vmem:[%s1 + $0xf8] sm:$0xff]
  %v50 = vld [vmem:[%s1 + $0x100] sm:$0xff]
  %v51 = vld [vmem:[%s1 + $0x108] sm:$0xff]
  %v52 = vld [vmem:[%s1 + $0x110] sm:$0xff]
  %v53 = vld [vmem:[%s1 + $0x118] sm:$0xff]
  %v54 = vld [vmem:[%s1 + $0x120] sm:$0xff]
  %v55 = vld [vmem:[%s1 + $0x128] sm:$0xff]
  %v56 = vld [vmem:[%s1 + $0x130] sm:$0xff]
  %v57 = vld [vmem:[%s1 + $0x138] sm:$0xff]
  %v58 = vld [vmem:[%s1 + $0x140] sm:$0xff]
  %v59 = vld [vmem:[%s1 + $0x148] sm:$0xff]
  %v60 = vld [vmem:[%s1 + $0x150] sm:$0xff]
  %v61 = vld [vmem:[%s1 + $0x158] sm:$0xff]
  %v62 = vld [vmem:[%s1 + $0x160] sm:$0xff]
  %v63 = vld [vmem:[%s1 + $0x168] sm:$0xff]
  %v64 = vld [vmem:[%s1 + $0x170] sm:$0xff]
  %v65 = vld [vmem:[%s1 + $0x178] sm:$0xff]
  %v66 = vld [vmem:[%s1 + $0x180] sm:$0xff]
  %v67 = vld [vmem:[%s1 + $0x188] sm:$0xff]
  %v68 = vld [vmem:[%s1 + $0x190] sm:$0xff]
  %v69 = vld [vmem:[%s1 + $0x198] sm:$0xff]
  %v70 = vld [vmem:[%s1 + $0x1a0] sm:$0xff]
  %v71 = vld [vmem:[%s1 + $0x1a8] sm:$0xff]
  %v72 = vld [vmem:[%s1 + $0x1b0] sm:$0xff]
  %v73 = vld [vmem:[%s1 + $0x1b8] sm:$0xff]
  %v74 = vld [vmem:[%s1 + $0x1c0] sm:$0xff]
  %v75 = vld [vmem:[%s1 + $0x1c8] sm:$0xff]
  %v76 = vld [vmem:[%s1 + $0x1d0] sm:$0xff]
  %v77 = vld [vmem:[%s1 + $0x1d8] sm:$0xff]
  %v78 = vld [vmem:[%s1 + $0x1e0] sm:$0xff]
  %v79 = vld [vmem:[%s1 + $0x1e8] sm:$0xff]
  %v80 = vld [vmem:[%s1 + $0x1f0] sm:$0xff]
  %v81 = vld [vmem:[%s1 + $0x1f8] sm:$0xff]
  %v82 = vld [vmem:[%s1 + $0x200] sm:$0xff]
  %v83 = vld [vmem:[%s1 + $0x208] sm:$0xff]
  %v84 = vld [vmem:[%s1 + $0x210] sm:$0xff]
  %v85 = vld [vmem:[%s1 + $0x218] sm:$0xff]
  %v86 = vld [vmem:[%s1 + $0x220] sm:$0xff]
  %v87 = vld [vmem:[%s1 + $0x228] sm:$0xff]
  %v88 = vld [vmem:[%s1 + $0x230] sm:$0xff]
  %v89 = vld [vmem:[%s1 + $0x238] sm:$0xff]
  %v90 = vld [vmem:[%s1 + $0x240] sm:$0xff]
  %v91 = vld [vmem:[%s1 + $0x248] sm:$0xff]
  %v92 = vld [vmem:[%s1 + $0x250] sm:$0xff]
  %v93 = vld [vmem:[%s1 + $0x258] sm:$0xff]
  %v94 = vld [vmem:[%s1 + $0x260] sm:$0xff]
  %v95 = vld [vmem:[%s1 + $0x268] sm:$0xff]
  %v96 = vld [vmem:[%s1 + $0x270] sm:$0xff]
  %v97 = vld [vmem:[%s1 + $0x278] sm:$0xff]
  %v98 = vld [vmem:[%s1 + $0x280] sm:$0xff]
  %v99 = vld [vmem:[%s1 + $0x288] sm:$0xff]
  %v100 = vld [vmem:[%s1 + $0x290] sm:$0xff]
  %v101 = vld [vmem:[%s1 + $0x298] sm:$0xff]
  %v102 = vld [vmem:[%s1 + $0x2a0] sm:$0xff]
  %v103 = vld [vmem:[%s1 + $0x2a8] sm:$0xff]
  %v104 = vld [vmem:[%s1 + $0x2b0] sm:$0xff]
  %v105 = vld [vmem:[%s1 + $0x2b8] sm:$0xff]
  %v106 = vld [vmem:[%s1 + $0x2c0] sm:$0xff]
  %v107 = vld [vmem:[%s1 + $0x2c8] sm:$0xff]
  %v108 = vld [vmem:[%s1 + $0x2d0] sm:$0xff]
  %v109 = vld [vmem:[%s1 + $0x2d8] sm:$0xff]
  %v110 = vld [vmem:[%s1 + $0x2e0] sm:$0xff]
  %v111 = vld [vmem:[%s1 + $0x2e8] sm:$0xff]
  %v112 = vld [vmem:[%s1 + $0x2f0] sm:$0xff]
  %v113 = vld [vmem:[%s1 + $0x2f8] sm:$0xff]
  %v114 = vld [vmem:[%s1 + $0x300] sm:$0xff]
  %v115 = vld [vmem:[%s1 + $0x308] sm:$0xff]
  %v116 = vld [vmem:[%s1 + $0x310] sm:$0xff]
  %v117 = vld [vmem:[%s1 + $0x318] sm:$0xff]
  %v118 = vld [vmem:[%s1 + $0x320] sm:$0xff]
  %v119 = vld [vmem:[%s1 + $0x328] sm:$0xff]
  %v120 = vld [vmem:[%s1 + $0x330] sm:$0xff]
  %v121 = vld [vmem:[%s1 + $0x338] sm:$0xff]
  %v122 = vld [vmem:[%s1 + $0x340] sm:$0xff]
  %v123 = vld [vmem:[%s1 + $0x348] sm:$0xff]
  %v124 = vld [vmem:[%s1 + $0x350] sm:$0xff]
  %v125 = vld [vmem:[%s1 + $0x358] sm:$0xff]
  %v126 = vld [vmem:[%s1 + $0x360] sm:$0xff]
  %v127 = vld [vmem:[%s1 + $0x368] sm:$0xff]
  %v128 = vld [vmem:[%s1 + $0x370] sm:$0xff]
  %v129 = vld [vmem:[%s1 + $0x378] sm:$0xff]
  %v130 = vld [vmem:[%s1 + $0x380] sm:$0xff]
  %v131 = vld [vmem:[%s1 + $0x388] sm:$0xff]
  %v132 = vld [vmem:[%s1 + $0x390] sm:$0xff]
  %v133 = vld [vmem:[%s1 + $0x398] sm:$0xff]
  %v134 = vld [vmem:[%s1 + $0x3a0] sm:$0xff]
  %v135 = vld [vmem:[%s1 + $0x3a8] sm:$0xff]
  %v136 = vld [vmem:[%s1 + $0x3b0] sm:$0xff]
  %v137 = vld [vmem:[%s1 + $0x3b8] sm:$0xff]
  %v138 = vld [vmem:[%s1 + $0x3c0] sm:$0xff]
  %v139 = vld [vmem:[%s1 + $0x3c8] sm:$0xff]
  %v140 = vld [vmem:[%s1 + $0x3d0] sm:$0xff]
  %v141 = vld [vmem:[%s1 + $0x3d8] sm:$0xff]
  %v142 = vld [vmem:[%s1 + $0x3e0] sm:$0xff]
  %v143 = vld [vmem:[%s1 + $0x3e8] sm:$0xff]
  %v144 = vld [vmem:[%s1 + $0x3f0] sm:$0xff]
  %v145 = vld [vmem:[%s1 + $0x3f8] sm:$0xff]
  %v146 = vld [vmem:[%s1 + $0x400] sm:$0xff]
  %v147 = vld [vmem:[%s1 + $0x408] sm:$0xff]
  %v148 = vld [vmem:[%s1 + $0x410] sm:$0xff]
  %v149 = vld [vmem:[%s1 + $0x418] sm:$0xff]
  %v150 = vld [vmem:[%s1 + $0x420] sm:$0xff]
  %v151 = vld [vmem:[%s1 + $0x428] sm:$0xff]
  %v152 = vld [vmem:[%s1 + $0x430] sm:$0xff]
  %v153 = vld [vmem:[%s1 + $0x438] sm:$0xff]
  %v154 = vld [vmem:[%s1 + $0x440] sm:$0xff]
  %v155 = vld [vmem:[%s1 + $0x448] sm:$0xff]
  %v156 = vld [vmem:[%s1 + $0x450] sm:$0xff]
  %v157 = vld [vmem:[%s1 + $0x458] sm:$0xff]
  %v158 = vld [vmem:[%s1 + $0x460] sm:$0xff]
  %v159 = vld [vmem:[%s1 + $0x468] sm:$0xff]
  %v160 = vld [vmem:[%s1 + $0x470] sm:$0xff]
  %v161 = vld [vmem:[%s1 + $0x478] sm:$0xff]
  %v162 = vld [vmem:[%s1 + $0x480] sm:$0xff]
  %v163 = vld [vmem:[%s1 + $0x488] sm:$0xff]
  %v164 = vld [vmem:[%s1 + $0x490] sm:$0xff]
  %v165 = vld [vmem:[%s1 + $0x498] sm:$0xff]
  %v166 = vld [vmem:[%s1 + $0x4a0] sm:$0xff]
  %v167 = vld [vmem:[%s1 + $0x4a8] sm:$0xff]
  %v168 = vld [vmem:[%s1 + $0x4b0] sm:$0xff]
  %v169 = vld [vmem:[%s1 + $0x4b8] sm:$0xff]
  %v170 = vld [vmem:[%s1 + $0x4c0] sm:$0xff]
  %v171 = vld [vmem:[%s1 + $0x4c8] sm:$0xff]
  %v172 = vld [vmem:[%s1 + $0x4d0] sm:$0xff]
  %v173 = vld [vmem:[%s1 + $0x4d8] sm:$0xff]
  %v174 = vld [vmem:[%s1 + $0x4e0] sm:$0xff]
  %v175 = vld [vmem:[%s1 + $0x4e8] sm:$0xff]
  %v176 = vld [vmem:[%s1 + $0x4f0] sm:$0xff]
  %v177 = vld [vmem:[%s1 + $0x4f8] sm:$0xff]
  %v178 = vld [vmem:[%s1 + $0x500] sm:$0xff]
  %v179 = vld [vmem:[%s1 + $0x508] sm:$0xff]
  %v180 = vld [vmem:[%s1 + $0x510] sm:$0xff]
  %v181 = vld [vmem:[%s1 + $0x518] sm:$0xff]
  %v182 = vld [vmem:[%s1 + $0x520] sm:$0xff]
  %v183 = vld [vmem:[%s1 + $0x528] sm:$0xff]
  %v184 = vld [vmem:[%s1 + $0x530] sm:$0xff]
  %v185 = vld [vmem:[%s1 + $0x538] sm:$0xff]
  %v186 = vld [vmem:[%s1 + $0x540] sm:$0xff]
  %v187 = vld [vmem:[%s1 + $0x548] sm:$0xff]
  %v188 = vld [vmem:[%s1 + $0x550] sm:$0xff]
  %v189 = vld [vmem:[%s1 + $0x558] sm:$0xff]
  %v190 = vld [vmem:[%s1 + $0x560] sm:$0xff]
  %v191 = vld [vmem:[%s1 + $0x568] sm:$0xff]
  %v192 = vld [vmem:[%s1 + $0x570] sm:$0xff]
  %v193 = vld [vmem:[%s1 + $0x578] sm:$0xff]
  %v194 = vld [vmem:[%s1 + $0x580] sm:$0xff]
  %v195 = vld [vmem:[%s1 + $0x588] sm:$0xff]
  %v196 = vld [vmem:[%s1 + $0x590] sm:$0xff]
  %v197 = vld [vmem:[%s1 + $0x598] sm:$0xff]
  %v198 = vld [vmem:[%s1 + $0x5a0] sm:$0xff]
  %v199 = vld [vmem:[%s1 + $0x5a8] sm:$0xff]
  %v200 = vld [vmem:[%s1 + $0x5b0] sm:$0xff]
  %v201 = vld [vmem:[%s1 + $0x5b8] sm:$0xff]
  %v202 = vld [vmem:[%s1 + $0x5c0] sm:$0xff]
  %v203 = vld [vmem:[%s1 + $0x5c8] sm:$0xff]
  %v204 = vld [vmem:[%s1 + $0x5d0] sm:$0xff]
  %v205 = vld [vmem:[%s1 + $0x5d8] sm:$0xff]
  %v206 = vld [vmem:[%s1 + $0x5e0] sm:$0xff]
  %v207 = vld [vmem:[%s1 + $0x5e8] sm:$0xff]
  %v208 = vld [vmem:[%s1 + $0x5f0] sm:$0xff]
  %v209 = vld [vmem:[%s1 + $0x5f8] sm:$0xff]
  %v210 = vld [vmem:[%s1 + $0x600] sm:$0xff]
  %v211 = vld [vmem:[%s1 + $0x608] sm:$0xff]
  %v212 = vld [vmem:[%s1 + $0x610] sm:$0xff]
  %v213 = vld [vmem:[%s1 + $0x618] sm:$0xff]
  %v214 = vld [vmem:[%s1 + $0x620] sm:$0xff]
  %v215 = vld [vmem:[%s1 + $0x628] sm:$0xff]
  %v216 = vld [vmem:[%s1 + $0x630] sm:$0xff]
  %v217 = vld [vmem:[%s1 + $0x638] sm:$0xff]
  %v218 = vld [vmem:[%s1 + $0x640] sm:$0xff]
  %v219 = vld [vmem:[%s1 + $0x648] sm:$0xff]
  %v220 = vld [vmem:[%s1 + $0x650] sm:$0xff]
  %v221 = vld [vmem:[%s1 + $0x658] sm:$0xff]
  %v222 = vld [vmem:[%s1 + $0x660] sm:$0xff]
  %v223 = vld [vmem:[%s1 + $0x668] sm:$0xff]
  %v224 = vld [vmem:[%s1 + $0x670] sm:$0xff]
  %v225 = vld [vmem:[%s1 + $0x678] sm:$0xff]
  %v226 = vld [vmem:[%s1 + $0x680] sm:$0xff]
  %v227 = vld [vmem:[%s1 + $0x688] sm:$0xff]
  %v228 = vld [vmem:[%s1 + $0x690] sm:$0xff]
  %v229 = vld [vmem:[%s1 + $0x698] sm:$0xff]
  %v230 = vld [vmem:[%s1 + $0x6a0] sm:$0xff]
  %v231 = vld [vmem:[%s1 + $0x6a8] sm:$0xff]
  %v232 = vld [vmem:[%s1 + $0x6b0] sm:$0xff]
  %v233 = vld [vmem:[%s1 + $0x6b8] sm:$0xff]
  %v234 = vld [vmem:[%s1 + $0x6c0] sm:$0xff]
  %v235 = vld [vmem:[%s1 + $0x6c8] sm:$0xff]
  %v236 = vld [vmem:[%s1 + $0x6d0] sm:$0xff]
  %v237 = vld [vmem:[%s1 + $0x6d8] sm:$0xff]
  %v238 = vld [vmem:[%s1 + $0x6e0] sm:$0xff]
  %v239 = vld [vmem:[%s1 + $0x6e8] sm:$0xff]
  %v240 = vld [vmem:[%s1 + $0x6f0] sm:$0xff]
  %v241 = vld [vmem:[%s1 + $0x6f8] sm:$0xff]
  %v242 = vld [vmem:[%s1 + $0x700] sm:$0xff]
  %v243 = vld [vmem:[%s1 + $0x708] sm:$0xff]
  %v244 = vld [vmem:[%s1 + $0x710] sm:$0xff]
  %v245 = vld [vmem:[%s1 + $0x718] sm:$0xff]
  %v246 = vld [vmem:[%s1 + $0x720] sm:$0xff]
  %v247 = vld [vmem:[%s1 + $0x728] sm:$0xff]
  %v248 = vld [vmem:[%s1 + $0x730] sm:$0xff]
  %v249 = vld [vmem:[%s1 + $0x738] sm:$0xff]
  %v250 = vld [vmem:[%s1 + $0x740] sm:$0xff]
  %v251 = vld [vmem:[%s1 + $0x748] sm:$0xff]
  %v252 = vld [vmem:[%s1 + $0x750] sm:$0xff]
  %v253 = vld [vmem:[%s1 + $0x758] sm:$0xff]
  %v254 = vld [vmem:[%s1 + $0x760] sm:$0xff]
  %v255 = vld [vmem:[%s1 + $0x768] sm:$0xff]
  %v256 = vld [vmem:[%s1 + $0x770] sm:$0xff]
  %v257 = vld [vmem:[%s1 + $0x778] sm:$0xff]
  %v258 = vld [vmem:[%s1 + $0x780] sm:$0xff]
  %v259 = vld [vmem:[%s1 + $0x788] sm:$0xff]
  %v260 = vld [vmem:[%s1 + $0x790] sm:$0xff]
  %v261 = vld [vmem:[%s1 + $0x798] sm:$0xff]
  %v262 = vld [vmem:[%s1 + $0x7a0] sm:$0xff]
  %v263 = vld [vmem:[%s1 + $0x7a8] sm:$0xff]
  %v264 = vld [vmem:[%s1 + $0x7b0] sm:$0xff]
  %v265 = vld [vmem:[%s1 + $0x7b8] sm:$0xff]
  %v266 = vld [vmem:[%s1 + $0x7c0] sm:$0xff]
  %v267 = vld [vmem:[%s1 + $0x7c8] sm:$0xff]
  %v268 = vld [vmem:[%s1 + $0x7d0] sm:$0xff]
  %v269 = vld [vmem:[%s1 + $0x7d8] sm:$0xff]
  %v270 = vld [vmem:[%s1 + $0x7e0] sm:$0xff]
  %v271 = vld [vmem:[%s1 + $0x7e8] sm:$0xff]
  %v272 = vld [vmem:[%s1 + $0x7f0] sm:$0xff]
  %v273 = vld [vmem:[%s1 + $0x7f8] sm:$0xff]
  %v274 = vld [vmem:[%s2] sm:$0xf]
  %v276 = vperm.slane %v274, 0
  %v277 = vperm.slane %v274, 1
  %v278 = vperm.slane %v274, 2
  %v279 = vperm.slane %v274, 3
  %v288 = vunpack.c.l.b16 %v14
  %v289 = vunpack.c.h.b16 %v14
  %v290 = vunpack.c.l.b16 %v15
  %v291 = vunpack.c.h.b16 %v15
  %v292 = vunpack.c.l.b16 %v16
  %v293 = vunpack.c.h.b16 %v16
  %v294 = vunpack.c.l.b16 %v17
  %v295 = vunpack.c.h.b16 %v17
  %v296 = vpack.c.b16 %v288, %v288
  %v297 = vpack.c.b16 %v289, %v289
  %v298 = vpack.c.b16 %v290, %v290
  %v299 = vpack.c.b16 %v291, %v291
  %v300 = vpack.c.b16 %v292, %v292
  %v301 = vpack.c.b16 %v293, %v293
  %v302 = vpack.c.b16 %v294, %v294
  %v303 = vpack.c.b16 %v295, %v295
  %v568 = vunpack.c.l.b16 %v18
  %v569 = vunpack.c.h.b16 %v18
  %v570 = vunpack.c.l.b16 %v19
  %v571 = vunpack.c.h.b16 %v19
  %v572 = vunpack.c.l.b16 %v20
  %v573 = vunpack.c.h.b16 %v20
  %v574 = vunpack.c.l.b16 %v21
  %v575 = vunpack.c.h.b16 %v21
  %v576 = vunpack.c.l.b16 %v22
  %v577 = vunpack.c.h.b16 %v22
  %v578 = vunpack.c.l.b16 %v23
  %v579 = vunpack.c.h.b16 %v23
  %v580 = vunpack.c.l.b16 %v24
  %v581 = vunpack.c.h.b16 %v24
  %v582 = vunpack.c.l.b16 %v25
  %v583 = vunpack.c.h.b16 %v25
  %v584 = vunpack.c.l.b16 %v26
  %v585 = vunpack.c.h.b16 %v26
  %v586 = vunpack.c.l.b16 %v27
  %v587 = vunpack.c.h.b16 %v27
  %v588 = vunpack.c.l.b16 %v28
  %v589 = vunpack.c.h.b16 %v28
  %v590 = vunpack.c.l.b16 %v29
  %v591 = vunpack.c.h.b16 %v29
  %v592 = vunpack.c.l.b16 %v30
  %v593 = vunpack.c.h.b16 %v30
  %v594 = vunpack.c.l.b16 %v31
  %v595 = vunpack.c.h.b16 %v31
  %v596 = vunpack.c.l.b16 %v32
  %v597 = vunpack.c.h.b16 %v32
  %v598 = vunpack.c.l.b16 %v33
  %v599 = vunpack.c.h.b16 %v33
  %v600 = vunpack.c.l.b16 %v34
  %v601 = vunpack.c.h.b16 %v34
  %v602 = vunpack.c.l.b16 %v35
  %v603 = vunpack.c.h.b16 %v35
  %v604 = vunpack.c.l.b16 %v36
  %v605 = vunpack.c.h.b16 %v36
  %v606 = vunpack.c.l.b16 %v37
  %v607 = vunpack.c.h.b16 %v37
  %v608 = vunpack.c.l.b16 %v38
  %v609 = vunpack.c.h.b16 %v38
  %v610 = vunpack.c.l.b16 %v39
  %v611 = vunpack.c.h.b16 %v39
  %v612 = vunpack.c.l.b16 %v40
  %v613 = vunpack.c.h.b16 %v40
  %v614 = vunpack.c.l.b16 %v41
  %v615 = vunpack.c.h.b16 %v41
  %v616 = vunpack.c.l.b16 %v42
  %v617 = vunpack.c.h.b16 %v42
  %v618 = vunpack.c.l.b16 %v43
  %v619 = vunpack.c.h.b16 %v43
  %v620 = vunpack.c.l.b16 %v44
  %v621 = vunpack.c.h.b16 %v44
  %v622 = vunpack.c.l.b16 %v45
  %v623 = vunpack.c.h.b16 %v45
  %v624 = vunpack.c.l.b16 %v46
  %v625 = vunpack.c.h.b16 %v46
  %v626 = vunpack.c.l.b16 %v47
  %v627 = vunpack.c.h.b16 %v47
  %v628 = vunpack.c.l.b16 %v48
  %v629 = vunpack.c.h.b16 %v48
  %v630 = vunpack.c.l.b16 %v49
  %v631 = vunpack.c.h.b16 %v49
  %v632 = vunpack.c.l.b16 %v50
  %v633 = vunpack.c.h.b16 %v50
  %v634 = vunpack.c.l.b16 %v51
  %v635 = vunpack.c.h.b16 %v51
  %v636 = vunpack.c.l.b16 %v52
  %v637 = vunpack.c.h.b16 %v52
  %v638 = vunpack.c.l.b16 %v53
  %v639 = vunpack.c.h.b16 %v53
  %v640 = vunpack.c.l.b16 %v54
  %v641 = vunpack.c.h.b16 %v54
  %v642 = vunpack.c.l.b16 %v55
  %v643 = vunpack.c.h.b16 %v55
  %v644 = vunpack.c.l.b16 %v56
  %v645 = vunpack.c.h.b16 %v56
  %v646 = vunpack.c.l.b16 %v57
  %v647 = vunpack.c.h.b16 %v57
  %v648 = vunpack.c.l.b16 %v58
  %v649 = vunpack.c.h.b16 %v58
  %v650 = vunpack.c.l.b16 %v59
  %v651 = vunpack.c.h.b16 %v59
  %v652 = vunpack.c.l.b16 %v60
  %v653 = vunpack.c.h.b16 %v60
  %v654 = vunpack.c.l.b16 %v61
  %v655 = vunpack.c.h.b16 %v61
  %v656 = vunpack.c.l.b16 %v62
  %v657 = vunpack.c.h.b16 %v62
  %v658 = vunpack.c.l.b16 %v63
  %v659 = vunpack.c.h.b16 %v63
  %v660 = vunpack.c.l.b16 %v64
  %v661 = vunpack.c.h.b16 %v64
  %v662 = vunpack.c.l.b16 %v65
  %v663 = vunpack.c.h.b16 %v65
  %v664 = vunpack.c.l.b16 %v66
  %v665 = vunpack.c.h.b16 %v66
  %v666 = vunpack.c.l.b16 %v67
  %v667 = vunpack.c.h.b16 %v67
  %v668 = vunpack.c.l.b16 %v68
  %v669 = vunpack.c.h.b16 %v68
  %v670 = vunpack.c.l.b16 %v69
  %v671 = vunpack.c.h.b16 %v69
  %v672 = vunpack.c.l.b16 %v70
  %v673 = vunpack.c.h.b16 %v70
  %v674 = vunpack.c.l.b16 %v71
  %v675 = vunpack.c.h.b16 %v71
  %v676 = vunpack.c.l.b16 %v72
  %v677 = vunpack.c.h.b16 %v72
  %v678 = vunpack.c.l.b16 %v73
  %v679 = vunpack.c.h.b16 %v73
  %v680 = vunpack.c.l.b16 %v74
  %v681 = vunpack.c.h.b16 %v74
  %v682 = vunpack.c.l.b16 %v75
  %v683 = vunpack.c.h.b16 %v75
  %v684 = vunpack.c.l.b16 %v76
  %v685 = vunpack.c.h.b16 %v76
  %v686 = vunpack.c.l.b16 %v77
  %v687 = vunpack.c.h.b16 %v77
  %v688 = vunpack.c.l.b16 %v78
  %v689 = vunpack.c.h.b16 %v78
  %v690 = vunpack.c.l.b16 %v79
  %v691 = vunpack.c.h.b16 %v79
  %v692 = vunpack.c.l.b16 %v80
  %v693 = vunpack.c.h.b16 %v80
  %v694 = vunpack.c.l.b16 %v81
  %v695 = vunpack.c.h.b16 %v81
  %v696 = vunpack.c.l.b16 %v82
  %v697 = vunpack.c.h.b16 %v82
  %v698 = vunpack.c.l.b16 %v83
  %v699 = vunpack.c.h.b16 %v83
  %v700 = vunpack.c.l.b16 %v84
  %v701 = vunpack.c.h.b16 %v84
  %v702 = vunpack.c.l.b16 %v85
  %v703 = vunpack.c.h.b16 %v85
  %v704 = vunpack.c.l.b16 %v86
  %v705 = vunpack.c.h.b16 %v86
  %v706 = vunpack.c.l.b16 %v87
  %v707 = vunpack.c.h.b16 %v87
  %v708 = vunpack.c.l.b16 %v88
  %v709 = vunpack.c.h.b16 %v88
  %v710 = vunpack.c.l.b16 %v89
  %v711 = vunpack.c.h.b16 %v89
  %v712 = vunpack.c.l.b16 %v90
  %v713 = vunpack.c.h.b16 %v90
  %v714 = vunpack.c.l.b16 %v91
  %v715 = vunpack.c.h.b16 %v91
  %v716 = vunpack.c.l.b16 %v92
  %v717 = vunpack.c.h.b16 %v92
  %v718 = vunpack.c.l.b16 %v93
  %v719 = vunpack.c.h.b16 %v93
  %v720 = vunpack.c.l.b16 %v94
  %v721 = vunpack.c.h.b16 %v94
  %v722 = vunpack.c.l.b16 %v95
  %v723 = vunpack.c.h.b16 %v95
  %v724 = vunpack.c.l.b16 %v96
  %v725 = vunpack.c.h.b16 %v96
  %v726 = vunpack.c.l.b16 %v97
  %v727 = vunpack.c.h.b16 %v97
  %v728 = vunpack.c.l.b16 %v98
  %v729 = vunpack.c.h.b16 %v98
  %v730 = vunpack.c.l.b16 %v99
  %v731 = vunpack.c.h.b16 %v99
  %v732 = vunpack.c.l.b16 %v100
  %v733 = vunpack.c.h.b16 %v100
  %v734 = vunpack.c.l.b16 %v101
  %v735 = vunpack.c.h.b16 %v101
  %v736 = vunpack.c.l.b16 %v102
  %v737 = vunpack.c.h.b16 %v102
  %v738 = vunpack.c.l.b16 %v103
  %v739 = vunpack.c.h.b16 %v103
  %v740 = vunpack.c.l.b16 %v104
  %v741 = vunpack.c.h.b16 %v104
  %v742 = vunpack.c.l.b16 %v105
  %v743 = vunpack.c.h.b16 %v105
  %v744 = vunpack.c.l.b16 %v106
  %v745 = vunpack.c.h.b16 %v106
  %v746 = vunpack.c.l.b16 %v107
  %v747 = vunpack.c.h.b16 %v107
  %v748 = vunpack.c.l.b16 %v108
  %v749 = vunpack.c.h.b16 %v108
  %v750 = vunpack.c.l.b16 %v109
  %v751 = vunpack.c.h.b16 %v109
  %v752 = vunpack.c.l.b16 %v110
  %v753 = vunpack.c.h.b16 %v110
  %v754 = vunpack.c.l.b16 %v111
  %v755 = vunpack.c.h.b16 %v111
  %v756 = vunpack.c.l.b16 %v112
  %v757 = vunpack.c.h.b16 %v112
  %v758 = vunpack.c.l.b16 %v113
  %v759 = vunpack.c.h.b16 %v113
  %v760 = vunpack.c.l.b16 %v114
  %v761 = vunpack.c.h.b16 %v114
  %v762 = vunpack.c.l.b16 %v115
  %v763 = vunpack.c.h.b16 %v115
  %v764 = vunpack.c.l.b16 %v116
  %v765 = vunpack.c.h.b16 %v116
  %v766 = vunpack.c.l.b16 %v117
  %v767 = vunpack.c.h.b16 %v117
  %v768 = vunpack.c.l.b16 %v118
  %v769 = vunpack.c.h.b16 %v118
  %v770 = vunpack.c.l.b16 %v119
  %v771 = vunpack.c.h.b16 %v119
  %v772 = vunpack.c.l.b16 %v120
  %v773 = vunpack.c.h.b16 %v120
  %v774 = vunpack.c.l.b16 %v121
  %v775 = vunpack.c.h.b16 %v121
  %v776 = vunpack.c.l.b16 %v122
  %v777 = vunpack.c.h.b16 %v122
  %v778 = vunpack.c.l.b16 %v123
  %v779 = vunpack.c.h.b16 %v123
  %v780 = vunpack.c.l.b16 %v124
  %v781 = vunpack.c.h.b16 %v124
  %v782 = vunpack.c.l.b16 %v125
  %v783 = vunpack.c.h.b16 %v125
  %v784 = vunpack.c.l.b16 %v126
  %v785 = vunpack.c.h.b16 %v126
  %v786 = vunpack.c.l.b16 %v127
  %v787 = vunpack.c.h.b16 %v127
  %v788 = vunpack.c.l.b16 %v128
  %v789 = vunpack.c.h.b16 %v128
  %v790 = vunpack.c.l.b16 %v129
  %v791 = vunpack.c.h.b16 %v129
  %v792 = vunpack.c.l.b16 %v130
  %v793 = vunpack.c.h.b16 %v130
  %v794 = vunpack.c.l.b16 %v131
  %v795 = vunpack.c.h.b16 %v131
  %v796 = vunpack.c.l.b16 %v132
  %v797 = vunpack.c.h.b16 %v132
  %v798 = vunpack.c.l.b16 %v133
  %v799 = vunpack.c.h.b16 %v133
  %v800 = vunpack.c.l.b16 %v134
  %v801 = vunpack.c.h.b16 %v134
  %v802 = vunpack.c.l.b16 %v135
  %v803 = vunpack.c.h.b16 %v135
  %v804 = vunpack.c.l.b16 %v136
  %v805 = vunpack.c.h.b16 %v136
  %v806 = vunpack.c.l.b16 %v137
  %v807 = vunpack.c.h.b16 %v137
  %v808 = vunpack.c.l.b16 %v138
  %v809 = vunpack.c.h.b16 %v138
  %v810 = vunpack.c.l.b16 %v139
  %v811 = vunpack.c.h.b16 %v139
  %v812 = vunpack.c.l.b16 %v140
  %v813 = vunpack.c.h.b16 %v140
  %v814 = vunpack.c.l.b16 %v141
  %v815 = vunpack.c.h.b16 %v141
  %v816 = vunpack.c.l.b16 %v142
  %v817 = vunpack.c.h.b16 %v142
  %v818 = vunpack.c.l.b16 %v143
  %v819 = vunpack.c.h.b16 %v143
  %v820 = vunpack.c.l.b16 %v144
  %v821 = vunpack.c.h.b16 %v144
  %v822 = vunpack.c.l.b16 %v145
  %v823 = vunpack.c.h.b16 %v145
  %v824 = vunpack.c.l.b16 %v146
  %v825 = vunpack.c.h.b16 %v146
  %v826 = vunpack.c.l.b16 %v147
  %v827 = vunpack.c.h.b16 %v147
  %v828 = vunpack.c.l.b16 %v148
  %v829 = vunpack.c.h.b16 %v148
  %v830 = vunpack.c.l.b16 %v149
  %v831 = vunpack.c.h.b16 %v149
  %v832 = vunpack.c.l.b16 %v150
  %v833 = vunpack.c.h.b16 %v150
  %v834 = vunpack.c.l.b16 %v151
  %v835 = vunpack.c.h.b16 %v151
  %v836 = vunpack.c.l.b16 %v152
  %v837 = vunpack.c.h.b16 %v152
  %v838 = vunpack.c.l.b16 %v153
  %v839 = vunpack.c.h.b16 %v153
  %v840 = vunpack.c.l.b16 %v154
  %v841 = vunpack.c.h.b16 %v154
  %v842 = vunpack.c.l.b16 %v155
  %v843 = vunpack.c.h.b16 %v155
  %v844 = vunpack.c.l.b16 %v156
  %v845 = vunpack.c.h.b16 %v156
  %v846 = vunpack.c.l.b16 %v157
  %v847 = vunpack.c.h.b16 %v157
  %v848 = vunpack.c.l.b16 %v158
  %v849 = vunpack.c.h.b16 %v158
  %v850 = vunpack.c.l.b16 %v159
  %v851 = vunpack.c.h.b16 %v159
  %v852 = vunpack.c.l.b16 %v160
  %v853 = vunpack.c.h.b16 %v160
  %v854 = vunpack.c.l.b16 %v161
  %v855 = vunpack.c.h.b16 %v161
  %v856 = vunpack.c.l.b16 %v162
  %v857 = vunpack.c.h.b16 %v162
  %v858 = vunpack.c.l.b16 %v163
  %v859 = vunpack.c.h.b16 %v163
  %v860 = vunpack.c.l.b16 %v164
  %v861 = vunpack.c.h.b16 %v164
  %v862 = vunpack.c.l.b16 %v165
  %v863 = vunpack.c.h.b16 %v165
  %v864 = vunpack.c.l.b16 %v166
  %v865 = vunpack.c.h.b16 %v166
  %v866 = vunpack.c.l.b16 %v167
  %v867 = vunpack.c.h.b16 %v167
  %v868 = vunpack.c.l.b16 %v168
  %v869 = vunpack.c.h.b16 %v168
  %v870 = vunpack.c.l.b16 %v169
  %v871 = vunpack.c.h.b16 %v169
  %v872 = vunpack.c.l.b16 %v170
  %v873 = vunpack.c.h.b16 %v170
  %v874 = vunpack.c.l.b16 %v171
  %v875 = vunpack.c.h.b16 %v171
  %v876 = vunpack.c.l.b16 %v172
  %v877 = vunpack.c.h.b16 %v172
  %v878 = vunpack.c.l.b16 %v173
  %v879 = vunpack.c.h.b16 %v173
  %v880 = vunpack.c.l.b16 %v174
  %v881 = vunpack.c.h.b16 %v174
  %v882 = vunpack.c.l.b16 %v175
  %v883 = vunpack.c.h.b16 %v175
  %v884 = vunpack.c.l.b16 %v176
  %v885 = vunpack.c.h.b16 %v176
  %v886 = vunpack.c.l.b16 %v177
  %v887 = vunpack.c.h.b16 %v177
  %v888 = vunpack.c.l.b16 %v178
  %v889 = vunpack.c.h.b16 %v178
  %v890 = vunpack.c.l.b16 %v179
  %v891 = vunpack.c.h.b16 %v179
  %v892 = vunpack.c.l.b16 %v180
  %v893 = vunpack.c.h.b16 %v180
  %v894 = vunpack.c.l.b16 %v181
  %v895 = vunpack.c.h.b16 %v181
  %v896 = vunpack.c.l.b16 %v182
  %v897 = vunpack.c.h.b16 %v182
  %v898 = vunpack.c.l.b16 %v183
  %v899 = vunpack.c.h.b16 %v183
  %v900 = vunpack.c.l.b16 %v184
  %v901 = vunpack.c.h.b16 %v184
  %v902 = vunpack.c.l.b16 %v185
  %v903 = vunpack.c.h.b16 %v185
  %v904 = vunpack.c.l.b16 %v186
  %v905 = vunpack.c.h.b16 %v186
  %v906 = vunpack.c.l.b16 %v187
  %v907 = vunpack.c.h.b16 %v187
  %v908 = vunpack.c.l.b16 %v188
  %v909 = vunpack.c.h.b16 %v188
  %v910 = vunpack.c.l.b16 %v189
  %v911 = vunpack.c.h.b16 %v189
  %v912 = vunpack.c.l.b16 %v190
  %v913 = vunpack.c.h.b16 %v190
  %v914 = vunpack.c.l.b16 %v191
  %v915 = vunpack.c.h.b16 %v191
  %v916 = vunpack.c.l.b16 %v192
  %v917 = vunpack.c.h.b16 %v192
  %v918 = vunpack.c.l.b16 %v193
  %v919 = vunpack.c.h.b16 %v193
  %v920 = vunpack.c.l.b16 %v194
  %v921 = vunpack.c.h.b16 %v194
  %v922 = vunpack.c.l.b16 %v195
  %v923 = vunpack.c.h.b16 %v195
  %v924 = vunpack.c.l.b16 %v196
  %v925 = vunpack.c.h.b16 %v196
  %v926 = vunpack.c.l.b16 %v197
  %v927 = vunpack.c.h.b16 %v197
  %v928 = vunpack.c.l.b16 %v198
  %v929 = vunpack.c.h.b16 %v198
  %v930 = vunpack.c.l.b16 %v199
  %v931 = vunpack.c.h.b16 %v199
  %v932 = vunpack.c.l.b16 %v200
  %v933 = vunpack.c.h.b16 %v200
  %v934 = vunpack.c.l.b16 %v201
  %v935 = vunpack.c.h.b16 %v201
  %v936 = vunpack.c.l.b16 %v202
  %v937 = vunpack.c.h.b16 %v202
  %v938 = vunpack.c.l.b16 %v203
  %v939 = vunpack.c.h.b16 %v203
  %v940 = vunpack.c.l.b16 %v204
  %v941 = vunpack.c.h.b16 %v204
  %v942 = vunpack.c.l.b16 %v205
  %v943 = vunpack.c.h.b16 %v205
  %v944 = vunpack.c.l.b16 %v206
  %v945 = vunpack.c.h.b16 %v206
  %v946 = vunpack.c.l.b16 %v207
  %v947 = vunpack.c.h.b16 %v207
  %v948 = vunpack.c.l.b16 %v208
  %v949 = vunpack.c.h.b16 %v208
  %v950 = vunpack.c.l.b16 %v209
  %v951 = vunpack.c.h.b16 %v209
  %v952 = vunpack.c.l.b16 %v210
  %v953 = vunpack.c.h.b16 %v210
  %v954 = vunpack.c.l.b16 %v211
  %v955 = vunpack.c.h.b16 %v211
  %v956 = vunpack.c.l.b16 %v212
  %v957 = vunpack.c.h.b16 %v212
  %v958 = vunpack.c.l.b16 %v213
  %v959 = vunpack.c.h.b16 %v213
  %v960 = vunpack.c.l.b16 %v214
  %v961 = vunpack.c.h.b16 %v214
  %v962 = vunpack.c.l.b16 %v215
  %v963 = vunpack.c.h.b16 %v215
  %v964 = vunpack.c.l.b16 %v216
  %v965 = vunpack.c.h.b16 %v216
  %v966 = vunpack.c.l.b16 %v217
  %v967 = vunpack.c.h.b16 %v217
  %v968 = vunpack.c.l.b16 %v218
  %v969 = vunpack.c.h.b16 %v218
  %v970 = vunpack.c.l.b16 %v219
  %v971 = vunpack.c.h.b16 %v219
  %v972 = vunpack.c.l.b16 %v220
  %v973 = vunpack.c.h.b16 %v220
  %v974 = vunpack.c.l.b16 %v221
  %v975 = vunpack.c.h.b16 %v221
  %v976 = vunpack.c.l.b16 %v222
  %v977 = vunpack.c.h.b16 %v222
  %v978 = vunpack.c.l.b16 %v223
  %v979 = vunpack.c.h.b16 %v223
  %v980 = vunpack.c.l.b16 %v224
  %v981 = vunpack.c.h.b16 %v224
  %v982 = vunpack.c.l.b16 %v225
  %v983 = vunpack.c.h.b16 %v225
  %v984 = vunpack.c.l.b16 %v226
  %v985 = vunpack.c.h.b16 %v226
  %v986 = vunpack.c.l.b16 %v227
  %v987 = vunpack.c.h.b16 %v227
  %v988 = vunpack.c.l.b16 %v228
  %v989 = vunpack.c.h.b16 %v228
  %v990 = vunpack.c.l.b16 %v229
  %v991 = vunpack.c.h.b16 %v229
  %v992 = vunpack.c.l.b16 %v230
  %v993 = vunpack.c.h.b16 %v230
  %v994 = vunpack.c.l.b16 %v231
  %v995 = vunpack.c.h.b16 %v231
  %v996 = vunpack.c.l.b16 %v232
  %v997 = vunpack.c.h.b16 %v232
  %v998 = vunpack.c.l.b16 %v233
  %v999 = vunpack.c.h.b16 %v233
  %v1000 = vunpack.c.l.b16 %v234
  %v1001 = vunpack.c.h.b16 %v234
  %v1002 = vunpack.c.l.b16 %v235
  %v1003 = vunpack.c.h.b16 %v235
  %v1004 = vunpack.c.l.b16 %v236
  %v1005 = vunpack.c.h.b16 %v236
  %v1006 = vunpack.c.l.b16 %v237
  %v1007 = vunpack.c.h.b16 %v237
  %v1008 = vunpack.c.l.b16 %v238
  %v1009 = vunpack.c.h.b16 %v238
  %v1010 = vunpack.c.l.b16 %v239
  %v1011 = vunpack.c.h.b16 %v239
  %v1012 = vunpack.c.l.b16 %v240
  %v1013 = vunpack.c.h.b16 %v240
  %v1014 = vunpack.c.l.b16 %v241
  %v1015 = vunpack.c.h.b16 %v241
  %v1016 = vunpack.c.l.b16 %v242
  %v1017 = vunpack.c.h.b16 %v242
  %v1018 = vunpack.c.l.b16 %v243
  %v1019 = vunpack.c.h.b16 %v243
  %v1020 = vunpack.c.l.b16 %v244
  %v1021 = vunpack.c.h.b16 %v244
  %v1022 = vunpack.c.l.b16 %v245
  %v1023 = vunpack.c.h.b16 %v245
  %v1024 = vunpack.c.l.b16 %v246
  %v1025 = vunpack.c.h.b16 %v246
  %v1026 = vunpack.c.l.b16 %v247
  %v1027 = vunpack.c.h.b16 %v247
  %v1028 = vunpack.c.l.b16 %v248
  %v1029 = vunpack.c.h.b16 %v248
  %v1030 = vunpack.c.l.b16 %v249
  %v1031 = vunpack.c.h.b16 %v249
  %v1032 = vunpack.c.l.b16 %v250
  %v1033 = vunpack.c.h.b16 %v250
  %v1034 = vunpack.c.l.b16 %v251
  %v1035 = vunpack.c.h.b16 %v251
  %v1036 = vunpack.c.l.b16 %v252
  %v1037 = vunpack.c.h.b16 %v252
  %v1038 = vunpack.c.l.b16 %v253
  %v1039 = vunpack.c.h.b16 %v253
  %v1040 = vunpack.c.l.b16 %v254
  %v1041 = vunpack.c.h.b16 %v254
  %v1042 = vunpack.c.l.b16 %v255
  %v1043 = vunpack.c.h.b16 %v255
  %v1044 = vunpack.c.l.b16 %v256
  %v1045 = vunpack.c.h.b16 %v256
  %v1046 = vunpack.c.l.b16 %v257
  %v1047 = vunpack.c.h.b16 %v257
  %v1048 = vunpack.c.l.b16 %v258
  %v1049 = vunpack.c.h.b16 %v258
  %v1050 = vunpack.c.l.b16 %v259
  %v1051 = vunpack.c.h.b16 %v259
  %v1052 = vunpack.c.l.b16 %v260
  %v1053 = vunpack.c.h.b16 %v260
  %v1054 = vunpack.c.l.b16 %v261
  %v1055 = vunpack.c.h.b16 %v261
  %v1056 = vunpack.c.l.b16 %v262
  %v1057 = vunpack.c.h.b16 %v262
  %v1058 = vunpack.c.l.b16 %v263
  %v1059 = vunpack.c.h.b16 %v263
  %v1060 = vunpack.c.l.b16 %v264
  %v1061 = vunpack.c.h.b16 %v264
  %v1062 = vunpack.c.l.b16 %v265
  %v1063 = vunpack.c.h.b16 %v265
  %v1064 = vunpack.c.l.b16 %v266
  %v1065 = vunpack.c.h.b16 %v266
  %v1066 = vunpack.c.l.b16 %v267
  %v1067 = vunpack.c.h.b16 %v267
  %v1068 = vunpack.c.l.b16 %v268
  %v1069 = vunpack.c.h.b16 %v268
  %v1070 = vunpack.c.l.b16 %v269
  %v1071 = vunpack.c.h.b16 %v269
  %v1072 = vunpack.c.l.b16 %v270
  %v1073 = vunpack.c.h.b16 %v270
  %v1074 = vunpack.c.l.b16 %v271
  %v1075 = vunpack.c.h.b16 %v271
  %v1076 = vunpack.c.l.b16 %v272
  %v1077 = vunpack.c.h.b16 %v272
  %v1078 = vunpack.c.l.b16 %v273
  %v1079 = vunpack.c.h.b16 %v273
  %v1080 = vpack.c.b16 %v572, %v568
  %v1081 = vpack.c.b16 %v573, %v569
  %v1082 = vpack.c.b16 %v574, %v570
  %v1083 = vpack.c.b16 %v575, %v571
  %v1084 = vpack.c.b16 %v580, %v576
  %v1085 = vpack.c.b16 %v581, %v577
  %v1086 = vpack.c.b16 %v582, %v578
  %v1087 = vpack.c.b16 %v583, %v579
  %v1088 = vpack.c.b16 %v588, %v584
  %v1089 = vpack.c.b16 %v589, %v585
  %v1090 = vpack.c.b16 %v590, %v586
  %v1091 = vpack.c.b16 %v591, %v587
  %v1092 = vpack.c.b16 %v596, %v592
  %v1093 = vpack.c.b16 %v597, %v593
  %v1094 = vpack.c.b16 %v598, %v594
  %v1095 = vpack.c.b16 %v599, %v595
  %v1096 = vpack.c.b16 %v604, %v600
  %v1097 = vpack.c.b16 %v605, %v601
  %v1098 = vpack.c.b16 %v606, %v602
  %v1099 = vpack.c.b16 %v607, %v603
  %v1100 = vpack.c.b16 %v612, %v608
  %v1101 = vpack.c.b16 %v613, %v609
  %v1102 = vpack.c.b16 %v614, %v610
  %v1103 = vpack.c.b16 %v615, %v611
  %v1104 = vpack.c.b16 %v620, %v616
  %v1105 = vpack.c.b16 %v621, %v617
  %v1106 = vpack.c.b16 %v622, %v618
  %v1107 = vpack.c.b16 %v623, %v619
  %v1108 = vpack.c.b16 %v628, %v624
  %v1109 = vpack.c.b16 %v629, %v625
  %v1110 = vpack.c.b16 %v630, %v626
  %v1111 = vpack.c.b16 %v631, %v627
  %v1112 = vpack.c.b16 %v636, %v632
  %v1113 = vpack.c.b16 %v637, %v633
  %v1114 = vpack.c.b16 %v638, %v634
  %v1115 = vpack.c.b16 %v639, %v635
  %v1116 = vpack.c.b16 %v644, %v640
  %v1117 = vpack.c.b16 %v645, %v641
  %v1118 = vpack.c.b16 %v646, %v642
  %v1119 = vpack.c.b16 %v647, %v643
  %v1120 = vpack.c.b16 %v652, %v648
  %v1121 = vpack.c.b16 %v653, %v649
  %v1122 = vpack.c.b16 %v654, %v650
  %v1123 = vpack.c.b16 %v655, %v651
  %v1124 = vpack.c.b16 %v660, %v656
  %v1125 = vpack.c.b16 %v661, %v657
  %v1126 = vpack.c.b16 %v662, %v658
  %v1127 = vpack.c.b16 %v663, %v659
  %v1128 = vpack.c.b16 %v668, %v664
  %v1129 = vpack.c.b16 %v669, %v665
  %v1130 = vpack.c.b16 %v670, %v666
  %v1131 = vpack.c.b16 %v671, %v667
  %v1132 = vpack.c.b16 %v676, %v672
  %v1133 = vpack.c.b16 %v677, %v673
  %v1134 = vpack.c.b16 %v678, %v674
  %v1135 = vpack.c.b16 %v679, %v675
  %v1136 = vpack.c.b16 %v684, %v680
  %v1137 = vpack.c.b16 %v685, %v681
  %v1138 = vpack.c.b16 %v686, %v682
  %v1139 = vpack.c.b16 %v687, %v683
  %v1140 = vpack.c.b16 %v692, %v688
  %v1141 = vpack.c.b16 %v693, %v689
  %v1142 = vpack.c.b16 %v694, %v690
  %v1143 = vpack.c.b16 %v695, %v691
  %v1144 = vpack.c.b16 %v700, %v696
  %v1145 = vpack.c.b16 %v701, %v697
  %v1146 = vpack.c.b16 %v702, %v698
  %v1147 = vpack.c.b16 %v703, %v699
  %v1148 = vpack.c.b16 %v708, %v704
  %v1149 = vpack.c.b16 %v709, %v705
  %v1150 = vpack.c.b16 %v710, %v706
  %v1151 = vpack.c.b16 %v711, %v707
  %v1152 = vpack.c.b16 %v716, %v712
  %v1153 = vpack.c.b16 %v717, %v713
  %v1154 = vpack.c.b16 %v718, %v714
  %v1155 = vpack.c.b16 %v719, %v715
  %v1156 = vpack.c.b16 %v724, %v720
  %v1157 = vpack.c.b16 %v725, %v721
  %v1158 = vpack.c.b16 %v726, %v722
  %v1159 = vpack.c.b16 %v727, %v723
  %v1160 = vpack.c.b16 %v732, %v728
  %v1161 = vpack.c.b16 %v733, %v729
  %v1162 = vpack.c.b16 %v734, %v730
  %v1163 = vpack.c.b16 %v735, %v731
  %v1164 = vpack.c.b16 %v740, %v736
  %v1165 = vpack.c.b16 %v741, %v737
  %v1166 = vpack.c.b16 %v742, %v738
  %v1167 = vpack.c.b16 %v743, %v739
  %v1168 = vpack.c.b16 %v748, %v744
  %v1169 = vpack.c.b16 %v749, %v745
  %v1170 = vpack.c.b16 %v750, %v746
  %v1171 = vpack.c.b16 %v751, %v747
  %v1172 = vpack.c.b16 %v756, %v752
  %v1173 = vpack.c.b16 %v757, %v753
  %v1174 = vpack.c.b16 %v758, %v754
  %v1175 = vpack.c.b16 %v759, %v755
  %v1176 = vpack.c.b16 %v764, %v760
  %v1177 = vpack.c.b16 %v765, %v761
  %v1178 = vpack.c.b16 %v766, %v762
  %v1179 = vpack.c.b16 %v767, %v763
  %v1180 = vpack.c.b16 %v772, %v768
  %v1181 = vpack.c.b16 %v773, %v769
  %v1182 = vpack.c.b16 %v774, %v770
  %v1183 = vpack.c.b16 %v775, %v771
  %v1184 = vpack.c.b16 %v780, %v776
  %v1185 = vpack.c.b16 %v781, %v777
  %v1186 = vpack.c.b16 %v782, %v778
  %v1187 = vpack.c.b16 %v783, %v779
  %v1188 = vpack.c.b16 %v788, %v784
  %v1189 = vpack.c.b16 %v789, %v785
  %v1190 = vpack.c.b16 %v790, %v786
  %v1191 = vpack.c.b16 %v791, %v787
  %v1192 = vpack.c.b16 %v796, %v792
  %v1193 = vpack.c.b16 %v797, %v793
  %v1194 = vpack.c.b16 %v798, %v794
  %v1195 = vpack.c.b16 %v799, %v795
  %v1196 = vpack.c.b16 %v804, %v800
  %v1197 = vpack.c.b16 %v805, %v801
  %v1198 = vpack.c.b16 %v806, %v802
  %v1199 = vpack.c.b16 %v807, %v803
  %v1200 = vpack.c.b16 %v812, %v808
  %v1201 = vpack.c.b16 %v813, %v809
  %v1202 = vpack.c.b16 %v814, %v810
  %v1203 = vpack.c.b16 %v815, %v811
  %v1204 = vpack.c.b16 %v820, %v816
  %v1205 = vpack.c.b16 %v821, %v817
  %v1206 = vpack.c.b16 %v822, %v818
  %v1207 = vpack.c.b16 %v823, %v819
  %v1208 = vpack.c.b16 %v828, %v824
  %v1209 = vpack.c.b16 %v829, %v825
  %v1210 = vpack.c.b16 %v830, %v826
  %v1211 = vpack.c.b16 %v831, %v827
  %v1212 = vpack.c.b16 %v836, %v832
  %v1213 = vpack.c.b16 %v837, %v833
  %v1214 = vpack.c.b16 %v838, %v834
  %v1215 = vpack.c.b16 %v839, %v835
  %v1216 = vpack.c.b16 %v844, %v840
  %v1217 = vpack.c.b16 %v845, %v841
  %v1218 = vpack.c.b16 %v846, %v842
  %v1219 = vpack.c.b16 %v847, %v843
  %v1220 = vpack.c.b16 %v852, %v848
  %v1221 = vpack.c.b16 %v853, %v849
  %v1222 = vpack.c.b16 %v854, %v850
  %v1223 = vpack.c.b16 %v855, %v851
  %v1224 = vpack.c.b16 %v860, %v856
  %v1225 = vpack.c.b16 %v861, %v857
  %v1226 = vpack.c.b16 %v862, %v858
  %v1227 = vpack.c.b16 %v863, %v859
  %v1228 = vpack.c.b16 %v868, %v864
  %v1229 = vpack.c.b16 %v869, %v865
  %v1230 = vpack.c.b16 %v870, %v866
  %v1231 = vpack.c.b16 %v871, %v867
  %v1232 = vpack.c.b16 %v876, %v872
  %v1233 = vpack.c.b16 %v877, %v873
  %v1234 = vpack.c.b16 %v878, %v874
  %v1235 = vpack.c.b16 %v879, %v875
  %v1236 = vpack.c.b16 %v884, %v880
  %v1237 = vpack.c.b16 %v885, %v881
  %v1238 = vpack.c.b16 %v886, %v882
  %v1239 = vpack.c.b16 %v887, %v883
  %v1240 = vpack.c.b16 %v892, %v888
  %v1241 = vpack.c.b16 %v893, %v889
  %v1242 = vpack.c.b16 %v894, %v890
  %v1243 = vpack.c.b16 %v895, %v891
  %v1244 = vpack.c.b16 %v900, %v896
  %v1245 = vpack.c.b16 %v901, %v897
  %v1246 = vpack.c.b16 %v902, %v898
  %v1247 = vpack.c.b16 %v903, %v899
  %v1248 = vpack.c.b16 %v908, %v904
  %v1249 = vpack.c.b16 %v909, %v905
  %v1250 = vpack.c.b16 %v910, %v906
  %v1251 = vpack.c.b16 %v911, %v907
  %v1252 = vpack.c.b16 %v916, %v912
  %v1253 = vpack.c.b16 %v917, %v913
  %v1254 = vpack.c.b16 %v918, %v914
  %v1255 = vpack.c.b16 %v919, %v915
  %v1256 = vpack.c.b16 %v924, %v920
  %v1257 = vpack.c.b16 %v925, %v921
  %v1258 = vpack.c.b16 %v926, %v922
  %v1259 = vpack.c.b16 %v927, %v923
  %v1260 = vpack.c.b16 %v932, %v928
  %v1261 = vpack.c.b16 %v933, %v929
  %v1262 = vpack.c.b16 %v934, %v930
  %v1263 = vpack.c.b16 %v935, %v931
  %v1264 = vpack.c.b16 %v940, %v936
  %v1265 = vpack.c.b16 %v941, %v937
  %v1266 = vpack.c.b16 %v942, %v938
  %v1267 = vpack.c.b16 %v943, %v939
  %v1268 = vpack.c.b16 %v948, %v944
  %v1269 = vpack.c.b16 %v949, %v945
  %v1270 = vpack.c.b16 %v950, %v946
  %v1271 = vpack.c.b16 %v951, %v947
  %v1272 = vpack.c.b16 %v956, %v952
  %v1273 = vpack.c.b16 %v957, %v953
  %v1274 = vpack.c.b16 %v958, %v954
  %v1275 = vpack.c.b16 %v959, %v955
  %v1276 = vpack.c.b16 %v964, %v960
  %v1277 = vpack.c.b16 %v965, %v961
  %v1278 = vpack.c.b16 %v966, %v962
  %v1279 = vpack.c.b16 %v967, %v963
  %v1280 = vpack.c.b16 %v972, %v968
  %v1281 = vpack.c.b16 %v973, %v969
  %v1282 = vpack.c.b16 %v974, %v970
  %v1283 = vpack.c.b16 %v975, %v971
  %v1284 = vpack.c.b16 %v980, %v976
  %v1285 = vpack.c.b16 %v981, %v977
  %v1286 = vpack.c.b16 %v982, %v978
  %v1287 = vpack.c.b16 %v983, %v979
  %v1288 = vpack.c.b16 %v988, %v984
  %v1289 = vpack.c.b16 %v989, %v985
  %v1290 = vpack.c.b16 %v990, %v986
  %v1291 = vpack.c.b16 %v991, %v987
  %v1292 = vpack.c.b16 %v996, %v992
  %v1293 = vpack.c.b16 %v997, %v993
  %v1294 = vpack.c.b16 %v998, %v994
  %v1295 = vpack.c.b16 %v999, %v995
  %v1296 = vpack.c.b16 %v1004, %v1000
  %v1297 = vpack.c.b16 %v1005, %v1001
  %v1298 = vpack.c.b16 %v1006, %v1002
  %v1299 = vpack.c.b16 %v1007, %v1003
  %v1300 = vpack.c.b16 %v1012, %v1008
  %v1301 = vpack.c.b16 %v1013, %v1009
  %v1302 = vpack.c.b16 %v1014, %v1010
  %v1303 = vpack.c.b16 %v1015, %v1011
  %v1304 = vpack.c.b16 %v1020, %v1016
  %v1305 = vpack.c.b16 %v1021, %v1017
  %v1306 = vpack.c.b16 %v1022, %v1018
  %v1307 = vpack.c.b16 %v1023, %v1019
  %v1308 = vpack.c.b16 %v1028, %v1024
  %v1309 = vpack.c.b16 %v1029, %v1025
  %v1310 = vpack.c.b16 %v1030, %v1026
  %v1311 = vpack.c.b16 %v1031, %v1027
  %v1312 = vpack.c.b16 %v1036, %v1032
  %v1313 = vpack.c.b16 %v1037, %v1033
  %v1314 = vpack.c.b16 %v1038, %v1034
  %v1315 = vpack.c.b16 %v1039, %v1035
  %v1316 = vpack.c.b16 %v1044, %v1040
  %v1317 = vpack.c.b16 %v1045, %v1041
  %v1318 = vpack.c.b16 %v1046, %v1042
  %v1319 = vpack.c.b16 %v1047, %v1043
  %v1320 = vpack.c.b16 %v1052, %v1048
  %v1321 = vpack.c.b16 %v1053, %v1049
  %v1322 = vpack.c.b16 %v1054, %v1050
  %v1323 = vpack.c.b16 %v1055, %v1051
  %v1324 = vpack.c.b16 %v1060, %v1056
  %v1325 = vpack.c.b16 %v1061, %v1057
  %v1326 = vpack.c.b16 %v1062, %v1058
  %v1327 = vpack.c.b16 %v1063, %v1059
  %v1328 = vpack.c.b16 %v1068, %v1064
  %v1329 = vpack.c.b16 %v1069, %v1065
  %v1330 = vpack.c.b16 %v1070, %v1066
  %v1331 = vpack.c.b16 %v1071, %v1067
  %v1332 = vpack.c.b16 %v1076, %v1072
  %v1333 = vpack.c.b16 %v1077, %v1073
  %v1334 = vpack.c.b16 %v1078, %v1074
  %v1335 = vpack.c.b16 %v1079, %v1075
  %1592 = vmatpush.bf16.msra.mxu0 %v1108
  %1593 = vmatpush.bf16.msra.mxu0 %v1104
  %1594 = vmatpush.bf16.msra.mxu0 %v1100
  %1595 = vmatpush.bf16.msra.mxu0 %v1096
  %1596 = vmatpush.bf16.msra.mxu0 %v1092
  %1597 = vmatpush.bf16.msra.mxu0 %v1088
  %1598 = vmatpush.bf16.msra.mxu0 %v1084
  %1599 = vmatpush.bf16.msra.mxu0 %v1080
  %1600 = vmatmul.bf16.gmra.mxu0 %v296
  %v1601 = vpop.f32.mrf.mxu0
  %v1602 = vadd.f32 %v276, %v1601
  %v1603 = vpop.f32.mrf.mxu0
  %1604 = vdwg.mxu0
  %1605 = vmatpush.bf16.msra.mxu0 %v1140
  %1606 = vmatpush.bf16.msra.mxu0 %v1136
  %1607 = vmatpush.bf16.msra.mxu0 %v1132
  %1608 = vmatpush.bf16.msra.mxu0 %v1128
  %1609 = vmatpush.bf16.msra.mxu0 %v1124
  %1610 = vmatpush.bf16.msra.mxu0 %v1120
  %1611 = vmatpush.bf16.msra.mxu0 %v1116
  %1612 = vmatpush.bf16.msra.mxu0 %v1112
  %1613 = vmatmul.bf16.gmra.mxu0 %v297
  %v1614 = vpop.f32.mrf.mxu0
  %v1615 = vadd.f32 %v1602, %v1614
  %v1616 = vpop.f32.mrf.mxu0
  %1617 = vdwg.mxu0
  %1618 = vmatpush.bf16.msra.mxu0 %v1172
  %1619 = vmatpush.bf16.msra.mxu0 %v1168
  %1620 = vmatpush.bf16.msra.mxu0 %v1164
  %1621 = vmatpush.bf16.msra.mxu0 %v1160
  %1622 = vmatpush.bf16.msra.mxu0 %v1156
  %1623 = vmatpush.bf16.msra.mxu0 %v1152
  %1624 = vmatpush.bf16.msra.mxu0 %v1148
  %1625 = vmatpush.bf16.msra.mxu0 %v1144
  %1626 = vmatmul.bf16.gmra.mxu0 %v298
  %v1627 = vpop.f32.mrf.mxu0
  %v1628 = vadd.f32 %v1615, %v1627
  %v1629 = vpop.f32.mrf.mxu0
  %1630 = vdwg.mxu0
  %1631 = vmatpush.bf16.msra.mxu0 %v1204
  %1632 = vmatpush.bf16.msra.mxu0 %v1200
  %1633 = vmatpush.bf16.msra.mxu0 %v1196
  %1634 = vmatpush.bf16.msra.mxu0 %v1192
  %1635 = vmatpush.bf16.msra.mxu0 %v1188
  %1636 = vmatpush.bf16.msra.mxu0 %v1184
  %1637 = vmatpush.bf16.msra.mxu0 %v1180
  %1638 = vmatpush.bf16.msra.mxu0 %v1176
  %1639 = vmatmul.bf16.gmra.mxu0 %v299
  %v1640 = vpop.f32.mrf.mxu0
  %v1641 = vadd.f32 %v1628, %v1640
  %v1642 = vpop.f32.mrf.mxu0
  %1643 = vdwg.mxu0
  %1644 = vmatpush.bf16.msra.mxu0 %v1236
  %1645 = vmatpush.bf16.msra.mxu0 %v1232
  %1646 = vmatpush.bf16.msra.mxu0 %v1228
  %1647 = vmatpush.bf16.msra.mxu0 %v1224
  %1648 = vmatpush.bf16.msra.mxu0 %v1220
  %1649 = vmatpush.bf16.msra.mxu0 %v1216
  %1650 = vmatpush.bf16.msra.mxu0 %v1212
  %1651 = vmatpush.bf16.msra.mxu0 %v1208
  %1652 = vmatmul.bf16.gmra.mxu0 %v300
  %v1653 = vpop.f32.mrf.mxu0
  %v1654 = vadd.f32 %v1641, %v1653
  %v1655 = vpop.f32.mrf.mxu0
  %1656 = vdwg.mxu0
  %1657 = vmatpush.bf16.msra.mxu0 %v1268
  %1658 = vmatpush.bf16.msra.mxu0 %v1264
  %1659 = vmatpush.bf16.msra.mxu0 %v1260
  %1660 = vmatpush.bf16.msra.mxu0 %v1256
  %1661 = vmatpush.bf16.msra.mxu0 %v1252
  %1662 = vmatpush.bf16.msra.mxu0 %v1248
  %1663 = vmatpush.bf16.msra.mxu0 %v1244
  %1664 = vmatpush.bf16.msra.mxu0 %v1240
  %1665 = vmatmul.bf16.gmra.mxu0 %v301
  %v1666 = vpop.f32.mrf.mxu0
  %v1667 = vadd.f32 %v1654, %v1666
  %v1668 = vpop.f32.mrf.mxu0
  %1669 = vdwg.mxu0
  %1670 = vmatpush.bf16.msra.mxu0 %v1300
  %1671 = vmatpush.bf16.msra.mxu0 %v1296
  %1672 = vmatpush.bf16.msra.mxu0 %v1292
  %1673 = vmatpush.bf16.msra.mxu0 %v1288
  %1674 = vmatpush.bf16.msra.mxu0 %v1284
  %1675 = vmatpush.bf16.msra.mxu0 %v1280
  %1676 = vmatpush.bf16.msra.mxu0 %v1276
  %1677 = vmatpush.bf16.msra.mxu0 %v1272
  %1678 = vmatmul.bf16.gmra.mxu0 %v302
  %v1679 = vpop.f32.mrf.mxu0
  %v1680 = vadd.f32 %v1667, %v1679
  %v1681 = vpop.f32.mrf.mxu0
  %1682 = vdwg.mxu0
  %1683 = vmatpush.bf16.msra.mxu0 %v1332
  %1684 = vmatpush.bf16.msra.mxu0 %v1328
  %1685 = vmatpush.bf16.msra.mxu0 %v1324
  %1686 = vmatpush.bf16.msra.mxu0 %v1320
  %1687 = vmatpush.bf16.msra.mxu0 %v1316
  %1688 = vmatpush.bf16.msra.mxu0 %v1312
  %1689 = vmatpush.bf16.msra.mxu0 %v1308
  %1690 = vmatpush.bf16.msra.mxu0 %v1304
  %1691 = vmatmul.bf16.gmra.mxu0 %v303
  %v1692 = vpop.f32.mrf.mxu0
  %v1693 = vadd.f32 %v1680, %v1692
  %v1694 = vpop.f32.mrf.mxu0
  %1695 = vdwg.mxu0
  %1696 = vmatpush.bf16.msra.mxu0 %v1109
  %1697 = vmatpush.bf16.msra.mxu0 %v1105
  %1698 = vmatpush.bf16.msra.mxu0 %v1101
  %1699 = vmatpush.bf16.msra.mxu0 %v1097
  %1700 = vmatpush.bf16.msra.mxu0 %v1093
  %1701 = vmatpush.bf16.msra.mxu0 %v1089
  %1702 = vmatpush.bf16.msra.mxu0 %v1085
  %1703 = vmatpush.bf16.msra.mxu0 %v1081
  %1704 = vmatmul.bf16.gmra.mxu0 %v296
  %v1705 = vpop.f32.mrf.mxu0
  %v1706 = vadd.f32 %v277, %v1705
  %v1707 = vpop.f32.mrf.mxu0
  %1708 = vdwg.mxu0
  %1709 = vmatpush.bf16.msra.mxu0 %v1141
  %1710 = vmatpush.bf16.msra.mxu0 %v1137
  %1711 = vmatpush.bf16.msra.mxu0 %v1133
  %1712 = vmatpush.bf16.msra.mxu0 %v1129
  %1713 = vmatpush.bf16.msra.mxu0 %v1125
  %1714 = vmatpush.bf16.msra.mxu0 %v1121
  %1715 = vmatpush.bf16.msra.mxu0 %v1117
  %1716 = vmatpush.bf16.msra.mxu0 %v1113
  %1717 = vmatmul.bf16.gmra.mxu0 %v297
  %v1718 = vpop.f32.mrf.mxu0
  %v1719 = vadd.f32 %v1706, %v1718
  %v1720 = vpop.f32.mrf.mxu0
  %1721 = vdwg.mxu0
  %1722 = vmatpush.bf16.msra.mxu0 %v1173
  %1723 = vmatpush.bf16.msra.mxu0 %v1169
  %1724 = vmatpush.bf16.msra.mxu0 %v1165
  %1725 = vmatpush.bf16.msra.mxu0 %v1161
  %1726 = vmatpush.bf16.msra.mxu0 %v1157
  %1727 = vmatpush.bf16.msra.mxu0 %v1153
  %1728 = vmatpush.bf16.msra.mxu0 %v1149
  %1729 = vmatpush.bf16.msra.mxu0 %v1145
  %1730 = vmatmul.bf16.gmra.mxu0 %v298
  %v1731 = vpop.f32.mrf.mxu0
  %v1732 = vadd.f32 %v1719, %v1731
  %v1733 = vpop.f32.mrf.mxu0
  %1734 = vdwg.mxu0
  %1735 = vmatpush.bf16.msra.mxu0 %v1205
  %1736 = vmatpush.bf16.msra.mxu0 %v1201
  %1737 = vmatpush.bf16.msra.mxu0 %v1197
  %1738 = vmatpush.bf16.msra.mxu0 %v1193
  %1739 = vmatpush.bf16.msra.mxu0 %v1189
  %1740 = vmatpush.bf16.msra.mxu0 %v1185
  %1741 = vmatpush.bf16.msra.mxu0 %v1181
  %1742 = vmatpush.bf16.msra.mxu0 %v1177
  %1743 = vmatmul.bf16.gmra.mxu0 %v299
  %v1744 = vpop.f32.mrf.mxu0
  %v1745 = vadd.f32 %v1732, %v1744
  %v1746 = vpop.f32.mrf.mxu0
  %1747 = vdwg.mxu0
  %1748 = vmatpush.bf16.msra.mxu0 %v1237
  %1749 = vmatpush.bf16.msra.mxu0 %v1233
  %1750 = vmatpush.bf16.msra.mxu0 %v1229
  %1751 = vmatpush.bf16.msra.mxu0 %v1225
  %1752 = vmatpush.bf16.msra.mxu0 %v1221
  %1753 = vmatpush.bf16.msra.mxu0 %v1217
  %1754 = vmatpush.bf16.msra.mxu0 %v1213
  %1755 = vmatpush.bf16.msra.mxu0 %v1209
  %1756 = vmatmul.bf16.gmra.mxu0 %v300
  %v1757 = vpop.f32.mrf.mxu0
  %v1758 = vadd.f32 %v1745, %v1757
  %v1759 = vpop.f32.mrf.mxu0
  %1760 = vdwg.mxu0
  %1761 = vmatpush.bf16.msra.mxu0 %v1269
  %1762 = vmatpush.bf16.msra.mxu0 %v1265
  %1763 = vmatpush.bf16.msra.mxu0 %v1261
  %1764 = vmatpush.bf16.msra.mxu0 %v1257
  %1765 = vmatpush.bf16.msra.mxu0 %v1253
  %1766 = vmatpush.bf16.msra.mxu0 %v1249
  %1767 = vmatpush.bf16.msra.mxu0 %v1245
  %1768 = vmatpush.bf16.msra.mxu0 %v1241
  %1769 = vmatmul.bf16.gmra.mxu0 %v301
  %v1770 = vpop.f32.mrf.mxu0
  %v1771 = vadd.f32 %v1758, %v1770
  %v1772 = vpop.f32.mrf.mxu0
  %1773 = vdwg.mxu0
  %1774 = vmatpush.bf16.msra.mxu0 %v1301
  %1775 = vmatpush.bf16.msra.mxu0 %v1297
  %1776 = vmatpush.bf16.msra.mxu0 %v1293
  %1777 = vmatpush.bf16.msra.mxu0 %v1289
  %1778 = vmatpush.bf16.msra.mxu0 %v1285
  %1779 = vmatpush.bf16.msra.mxu0 %v1281
  %1780 = vmatpush.bf16.msra.mxu0 %v1277
  %1781 = vmatpush.bf16.msra.mxu0 %v1273
  %1782 = vmatmul.bf16.gmra.mxu0 %v302
  %v1783 = vpop.f32.mrf.mxu0
  %v1784 = vadd.f32 %v1771, %v1783
  %v1785 = vpop.f32.mrf.mxu0
  %1786 = vdwg.mxu0
  %1787 = vmatpush.bf16.msra.mxu0 %v1333
  %1788 = vmatpush.bf16.msra.mxu0 %v1329
  %1789 = vmatpush.bf16.msra.mxu0 %v1325
  %1790 = vmatpush.bf16.msra.mxu0 %v1321
  %1791 = vmatpush.bf16.msra.mxu0 %v1317
  %1792 = vmatpush.bf16.msra.mxu0 %v1313
  %1793 = vmatpush.bf16.msra.mxu0 %v1309
  %1794 = vmatpush.bf16.msra.mxu0 %v1305
  %1795 = vmatmul.bf16.gmra.mxu0 %v303
  %v1796 = vpop.f32.mrf.mxu0
  %v1797 = vadd.f32 %v1784, %v1796
  %v1798 = vpop.f32.mrf.mxu0
  %1799 = vdwg.mxu0
  %1800 = vmatpush.bf16.msra.mxu0 %v1110
  %1801 = vmatpush.bf16.msra.mxu0 %v1106
  %1802 = vmatpush.bf16.msra.mxu0 %v1102
  %1803 = vmatpush.bf16.msra.mxu0 %v1098
  %1804 = vmatpush.bf16.msra.mxu0 %v1094
  %1805 = vmatpush.bf16.msra.mxu0 %v1090
  %1806 = vmatpush.bf16.msra.mxu0 %v1086
  %1807 = vmatpush.bf16.msra.mxu0 %v1082
  %1808 = vmatmul.bf16.gmra.mxu0 %v296
  %v1809 = vpop.f32.mrf.mxu0
  %v1810 = vadd.f32 %v278, %v1809
  %v1811 = vpop.f32.mrf.mxu0
  %1812 = vdwg.mxu0
  %1813 = vmatpush.bf16.msra.mxu0 %v1142
  %1814 = vmatpush.bf16.msra.mxu0 %v1138
  %1815 = vmatpush.bf16.msra.mxu0 %v1134
  %1816 = vmatpush.bf16.msra.mxu0 %v1130
  %1817 = vmatpush.bf16.msra.mxu0 %v1126
  %1818 = vmatpush.bf16.msra.mxu0 %v1122
  %1819 = vmatpush.bf16.msra.mxu0 %v1118
  %1820 = vmatpush.bf16.msra.mxu0 %v1114
  %1821 = vmatmul.bf16.gmra.mxu0 %v297
  %v1822 = vpop.f32.mrf.mxu0
  %v1823 = vadd.f32 %v1810, %v1822
  %v1824 = vpop.f32.mrf.mxu0
  %1825 = vdwg.mxu0
  %1826 = vmatpush.bf16.msra.mxu0 %v1174
  %1827 = vmatpush.bf16.msra.mxu0 %v1170
  %1828 = vmatpush.bf16.msra.mxu0 %v1166
  %1829 = vmatpush.bf16.msra.mxu0 %v1162
  %1830 = vmatpush.bf16.msra.mxu0 %v1158
  %1831 = vmatpush.bf16.msra.mxu0 %v1154
  %1832 = vmatpush.bf16.msra.mxu0 %v1150
  %1833 = vmatpush.bf16.msra.mxu0 %v1146
  %1834 = vmatmul.bf16.gmra.mxu0 %v298
  %v1835 = vpop.f32.mrf.mxu0
  %v1836 = vadd.f32 %v1823, %v1835
  %v1837 = vpop.f32.mrf.mxu0
  %1838 = vdwg.mxu0
  %1839 = vmatpush.bf16.msra.mxu0 %v1206
  %1840 = vmatpush.bf16.msra.mxu0 %v1202
  %1841 = vmatpush.bf16.msra.mxu0 %v1198
  %1842 = vmatpush.bf16.msra.mxu0 %v1194
  %1843 = vmatpush.bf16.msra.mxu0 %v1190
  %1844 = vmatpush.bf16.msra.mxu0 %v1186
  %1845 = vmatpush.bf16.msra.mxu0 %v1182
  %1846 = vmatpush.bf16.msra.mxu0 %v1178
  %1847 = vmatmul.bf16.gmra.mxu0 %v299
  %v1848 = vpop.f32.mrf.mxu0
  %v1849 = vadd.f32 %v1836, %v1848
  %v1850 = vpop.f32.mrf.mxu0
  %1851 = vdwg.mxu0
  %1852 = vmatpush.bf16.msra.mxu0 %v1238
  %1853 = vmatpush.bf16.msra.mxu0 %v1234
  %1854 = vmatpush.bf16.msra.mxu0 %v1230
  %1855 = vmatpush.bf16.msra.mxu0 %v1226
  %1856 = vmatpush.bf16.msra.mxu0 %v1222
  %1857 = vmatpush.bf16.msra.mxu0 %v1218
  %1858 = vmatpush.bf16.msra.mxu0 %v1214
  %1859 = vmatpush.bf16.msra.mxu0 %v1210
  %1860 = vmatmul.bf16.gmra.mxu0 %v300
  %v1861 = vpop.f32.mrf.mxu0
  %v1862 = vadd.f32 %v1849, %v1861
  %v1863 = vpop.f32.mrf.mxu0
  %1864 = vdwg.mxu0
  %1865 = vmatpush.bf16.msra.mxu0 %v1270
  %1866 = vmatpush.bf16.msra.mxu0 %v1266
  %1867 = vmatpush.bf16.msra.mxu0 %v1262
  %1868 = vmatpush.bf16.msra.mxu0 %v1258
  %1869 = vmatpush.bf16.msra.mxu0 %v1254
  %1870 = vmatpush.bf16.msra.mxu0 %v1250
  %1871 = vmatpush.bf16.msra.mxu0 %v1246
  %1872 = vmatpush.bf16.msra.mxu0 %v1242
  %1873 = vmatmul.bf16.gmra.mxu0 %v301
  %v1874 = vpop.f32.mrf.mxu0
  %v1875 = vadd.f32 %v1862, %v1874
  %v1876 = vpop.f32.mrf.mxu0
  %1877 = vdwg.mxu0
  %1878 = vmatpush.bf16.msra.mxu0 %v1302
  %1879 = vmatpush.bf16.msra.mxu0 %v1298
  %1880 = vmatpush.bf16.msra.mxu0 %v1294
  %1881 = vmatpush.bf16.msra.mxu0 %v1290
  %1882 = vmatpush.bf16.msra.mxu0 %v1286
  %1883 = vmatpush.bf16.msra.mxu0 %v1282
  %1884 = vmatpush.bf16.msra.mxu0 %v1278
  %1885 = vmatpush.bf16.msra.mxu0 %v1274
  %1886 = vmatmul.bf16.gmra.mxu0 %v302
  %v1887 = vpop.f32.mrf.mxu0
  %v1888 = vadd.f32 %v1875, %v1887
  %v1889 = vpop.f32.mrf.mxu0
  %1890 = vdwg.mxu0
  %1891 = vmatpush.bf16.msra.mxu0 %v1334
  %1892 = vmatpush.bf16.msra.mxu0 %v1330
  %1893 = vmatpush.bf16.msra.mxu0 %v1326
  %1894 = vmatpush.bf16.msra.mxu0 %v1322
  %1895 = vmatpush.bf16.msra.mxu0 %v1318
  %1896 = vmatpush.bf16.msra.mxu0 %v1314
  %1897 = vmatpush.bf16.msra.mxu0 %v1310
  %1898 = vmatpush.bf16.msra.mxu0 %v1306
  %1899 = vmatmul.bf16.gmra.mxu0 %v303
  %v1900 = vpop.f32.mrf.mxu0
  %v1901 = vadd.f32 %v1888, %v1900
  %v1902 = vpop.f32.mrf.mxu0
  %1903 = vdwg.mxu0
  %1904 = vmatpush.bf16.msra.mxu0 %v1111
  %1905 = vmatpush.bf16.msra.mxu0 %v1107
  %1906 = vmatpush.bf16.msra.mxu0 %v1103
  %1907 = vmatpush.bf16.msra.mxu0 %v1099
  %1908 = vmatpush.bf16.msra.mxu0 %v1095
  %1909 = vmatpush.bf16.msra.mxu0 %v1091
  %1910 = vmatpush.bf16.msra.mxu0 %v1087
  %1911 = vmatpush.bf16.msra.mxu0 %v1083
  %1912 = vmatmul.bf16.gmra.mxu0 %v296
  %v1913 = vpop.f32.mrf.mxu0
  %v1914 = vadd.f32 %v279, %v1913
  %v1915 = vpop.f32.mrf.mxu0
  %1916 = vdwg.mxu0
  %1917 = vmatpush.bf16.msra.mxu0 %v1143
  %1918 = vmatpush.bf16.msra.mxu0 %v1139
  %1919 = vmatpush.bf16.msra.mxu0 %v1135
  %1920 = vmatpush.bf16.msra.mxu0 %v1131
  %1921 = vmatpush.bf16.msra.mxu0 %v1127
  %1922 = vmatpush.bf16.msra.mxu0 %v1123
  %1923 = vmatpush.bf16.msra.mxu0 %v1119
  %1924 = vmatpush.bf16.msra.mxu0 %v1115
  %1925 = vmatmul.bf16.gmra.mxu0 %v297
  %v1926 = vpop.f32.mrf.mxu0
  %v1927 = vadd.f32 %v1914, %v1926
  %v1928 = vpop.f32.mrf.mxu0
  %1929 = vdwg.mxu0
  %1930 = vmatpush.bf16.msra.mxu0 %v1175
  %1931 = vmatpush.bf16.msra.mxu0 %v1171
  %1932 = vmatpush.bf16.msra.mxu0 %v1167
  %1933 = vmatpush.bf16.msra.mxu0 %v1163
  %1934 = vmatpush.bf16.msra.mxu0 %v1159
  %1935 = vmatpush.bf16.msra.mxu0 %v1155
  %1936 = vmatpush.bf16.msra.mxu0 %v1151
  %1937 = vmatpush.bf16.msra.mxu0 %v1147
  %1938 = vmatmul.bf16.gmra.mxu0 %v298
  %v1939 = vpop.f32.mrf.mxu0
  %v1940 = vadd.f32 %v1927, %v1939
  %v1941 = vpop.f32.mrf.mxu0
  %1942 = vdwg.mxu0
  %1943 = vmatpush.bf16.msra.mxu0 %v1207
  %1944 = vmatpush.bf16.msra.mxu0 %v1203
  %1945 = vmatpush.bf16.msra.mxu0 %v1199
  %1946 = vmatpush.bf16.msra.mxu0 %v1195
  %1947 = vmatpush.bf16.msra.mxu0 %v1191
  %1948 = vmatpush.bf16.msra.mxu0 %v1187
  %1949 = vmatpush.bf16.msra.mxu0 %v1183
  %1950 = vmatpush.bf16.msra.mxu0 %v1179
  %1951 = vmatmul.bf16.gmra.mxu0 %v299
  %v1952 = vpop.f32.mrf.mxu0
  %v1953 = vadd.f32 %v1940, %v1952
  %v1954 = vpop.f32.mrf.mxu0
  %1955 = vdwg.mxu0
  %1956 = vmatpush.bf16.msra.mxu0 %v1239
  %1957 = vmatpush.bf16.msra.mxu0 %v1235
  %1958 = vmatpush.bf16.msra.mxu0 %v1231
  %1959 = vmatpush.bf16.msra.mxu0 %v1227
  %1960 = vmatpush.bf16.msra.mxu0 %v1223
  %1961 = vmatpush.bf16.msra.mxu0 %v1219
  %1962 = vmatpush.bf16.msra.mxu0 %v1215
  %1963 = vmatpush.bf16.msra.mxu0 %v1211
  %1964 = vmatmul.bf16.gmra.mxu0 %v300
  %v1965 = vpop.f32.mrf.mxu0
  %v1966 = vadd.f32 %v1953, %v1965
  %v1967 = vpop.f32.mrf.mxu0
  %1968 = vdwg.mxu0
  %1969 = vmatpush.bf16.msra.mxu0 %v1271
  %1970 = vmatpush.bf16.msra.mxu0 %v1267
  %1971 = vmatpush.bf16.msra.mxu0 %v1263
  %1972 = vmatpush.bf16.msra.mxu0 %v1259
  %1973 = vmatpush.bf16.msra.mxu0 %v1255
  %1974 = vmatpush.bf16.msra.mxu0 %v1251
  %1975 = vmatpush.bf16.msra.mxu0 %v1247
  %1976 = vmatpush.bf16.msra.mxu0 %v1243
  %1977 = vmatmul.bf16.gmra.mxu0 %v301
  %v1978 = vpop.f32.mrf.mxu0
  %v1979 = vadd.f32 %v1966, %v1978
  %v1980 = vpop.f32.mrf.mxu0
  %1981 = vdwg.mxu0
  %1982 = vmatpush.bf16.msra.mxu0 %v1303
  %1983 = vmatpush.bf16.msra.mxu0 %v1299
  %1984 = vmatpush.bf16.msra.mxu0 %v1295
  %1985 = vmatpush.bf16.msra.mxu0 %v1291
  %1986 = vmatpush.bf16.msra.mxu0 %v1287
  %1987 = vmatpush.bf16.msra.mxu0 %v1283
  %1988 = vmatpush.bf16.msra.mxu0 %v1279
  %1989 = vmatpush.bf16.msra.mxu0 %v1275
  %1990 = vmatmul.bf16.gmra.mxu0 %v302
  %v1991 = vpop.f32.mrf.mxu0
  %v1992 = vadd.f32 %v1979, %v1991
  %v1993 = vpop.f32.mrf.mxu0
  %1994 = vdwg.mxu0
  %1995 = vmatpush.bf16.msra.mxu0 %v1335
  %1996 = vmatpush.bf16.msra.mxu0 %v1331
  %1997 = vmatpush.bf16.msra.mxu0 %v1327
  %1998 = vmatpush.bf16.msra.mxu0 %v1323
  %1999 = vmatpush.bf16.msra.mxu0 %v1319
  %2000 = vmatpush.bf16.msra.mxu0 %v1315
  %2001 = vmatpush.bf16.msra.mxu0 %v1311
  %2002 = vmatpush.bf16.msra.mxu0 %v1307
  %2003 = vmatmul.bf16.gmra.mxu0 %v303
  %v2004 = vpop.f32.mrf.mxu0
  %v2005 = vadd.f32 %v1992, %v2004
  %v2006 = vpop.f32.mrf.mxu0
  %2007 = vdwg.mxu0
  %v2008 = vmax.f32 %v1693, 0.0
  %v2009 = vmax.f32 %v1797, 0.0
  %v2010 = vmax.f32 %v1901, 0.0
  %v2011 = vmax.f32 %v2005, 0.0
  %2012 = vst [vmem:[%s3] sm:$0xff] %v2008
  %2013 = vst [vmem:[%s3 + $0x8] sm:$0xff] %v2009
  %2014 = vst [vmem:[%s3 + $0x10] sm:$0xff] %v2010
  %2015 = vst [vmem:[%s3 + $0x18] sm:$0xff] %v2011
  // Predicated region
  $region14: #{stnkd_forward.9} parent=0 // pred_check
    _
  $region15: #{stnkd_forward.9} parent=0 // pred_check_branch
    %2017 = sbr.rel (0) target = $region17
  $region16: #{stnkd_forward.9} parent=0 // pred_region
    _
  $region17: #{stnkd_forward.9} parent=0 // pred_fallthru
    _
  // Predicated region
  $region18: #{stnkd_forward.9} parent=0 // pred_check
    _
  $region19: #{stnkd_forward.9} parent=0 // pred_check_branch
    %2019 = sbr.rel (0) target = $region21
  $region20: #{stnkd_forward.9} parent=0 // pred_region
    _
  $region21: #{stnkd_forward.9} parent=0 // pred_fallthru
    _

</llo_original>
